<compile_context>
chip_gen: v7x
topology: tpu7x:2x2x1
jax: 0.10.0
libtpu: 0.0.40
codegen_flags: <defaults>
</compile_context>

<pallas_src>
import jax
import jax.numpy as jnp
from jax.experimental import pallas as pl
from jax.experimental.pallas import tpu as pltpu


def _round_up(x, m):
    return ((x + m - 1) // m) * m


# ----------------------------- hardware queries (best effort) -----------------------------

def _vmem_budget_bytes():
    """~3/4 of physical VMEM per TensorCore; conservative fallback if query fails."""
    try:
        cap = getattr(pltpu.get_tpu_info(), "vmem_capacity_bytes", None)
        if cap:
            return max(32 << 20, (int(cap) * 3) // 4)   # ~48 MiB on v7x, ~96 MiB on v5e/v6e
    except Exception:
        pass
    return 40 << 20   # safe on every generation


def _num_tensorcores():
    """TensorCores per chip; fall back to 1 (v5e/v6e) -> no forced batch split."""
    try:
        info = pltpu.get_tpu_info()
        for name in ("num_cores", "num_tensorcores", "tensorcore_count",
                     "cores_per_chip", "num_cores_per_chip"):
            v = getattr(info, name, None)
            if isinstance(v, int) and v > 0:
                return v
    except Exception:
        pass
    return 1


def _default_compute_dtype():
    """bf16 MXU operands on v6e/v7x (native fast path); f32 on v5e and older/unknown."""
    try:
        kind = jax.devices()[0].device_kind.lower()
    except Exception:
        return jnp.float32
    if "v6" in kind or "v7" in kind:
        return jnp.bfloat16
    return jnp.float32


# ----------------------------------- kernel -----------------------------------

def _make_mlp_kernel(n_layers, out_dims, compute_dtype):
    """Applies n_layers Linear layers back-to-back on one batch tile."""

    def kernel(x_ref, *rest):
        # rest = (w0, ..., w_{L-1}, b_pack, out_ref)
        out_ref = rest[-1]
        b_ref = rest[-2]            # (n_layers, max_out), f32
        w_refs = rest[:n_layers]    # each (in_i, out_i), compute_dtype

        h = x_ref[...]              # (tile_b, dim), x.dtype (un-padded lanes)
        for i in range(n_layers):
            acc = jnp.dot(h.astype(compute_dtype), w_refs[i][...],
                          preferred_element_type=jnp.float32)
            h = acc + b_ref[i:i + 1, :out_dims[i]]     # bias add in f32
        out_ref[...] = h.astype(out_ref.dtype)

    return kernel


# ----------------------------- one-time parameter prep -----------------------------

def prepare_rnet_params(weights, biases, compute_dtype=None):
    """Hoisted out of the forward: cast weights to the MXU operand dtype and pack all
    biases into a single (n_layers, max_out) f32 block (done once, not per call)."""
    if compute_dtype is None:
        compute_dtype = _default_compute_dtype()
    compute_dtype = jnp.dtype(compute_dtype)

    n_layers = len(weights)
    in_dims = tuple(int(w.shape[0]) for w in weights)
    out_dims = tuple(int(w.shape[1]) for w in weights)
    max_out = max(out_dims)

    w_list = tuple(jnp.asarray(w, compute_dtype) for w in weights)
    b_pack = jnp.zeros((n_layers, max_out), jnp.float32)
    for i, b in enumerate(biases):
        b_pack = b_pack.at[i, :out_dims[i]].set(jnp.asarray(b, jnp.float32).reshape(-1))

    return dict(weights=w_list, b_pack=b_pack, in_dims=in_dims, out_dims=out_dims,
                compute_dtype=compute_dtype)


# ----------------------------------- forward -----------------------------------

def rnet_forward(x, params, *, tile_b=None):
    """Pallas forward pass of RNet.

    x:      (B, dim)
    params: output of prepare_rnet_params
    Returns (B, out_dim) in x.dtype (out_dim == dim for RNet).
    """
    weights = params["weights"]
    b_pack = params["b_pack"]
    in_dims = params["in_dims"]
    out_dims = params["out_dims"]
    compute_dtype = params["compute_dtype"]

    B, dim = x.shape
    n_layers = len(weights)
    assert in_dims[0] == dim
    out_dim = out_dims[-1]
    max_out = max(out_dims)

    x_itemsize = jnp.dtype(x.dtype).itemsize
    cd_itemsize = jnp.dtype(compute_dtype).itemsize

    # 8 rows per sublane tile for 32-bit, 16 for 16-bit packed dtypes.
    row_align = 8 if min(x_itemsize, cd_itemsize) >= 4 else 16

    # Params are double-buffered by the default pipeline (constant index map -> one fetch).
    param_bytes = 2 * sum(w.size for w in weights) * cd_itemsize + 2 * b_pack.size * 4

    def vmem_est(tb):
        return (2 * tb * dim * x_itemsize            # x tile (double buffered)
                + 2 * tb * out_dim * x_itemsize      # out tile (double buffered)
                + 4 * tb * max_out * 4               # in-kernel f32 h/acc + cast copies
                + param_bytes
                + (2 << 20))                         # Mosaic internal scratch margin

    budget = _vmem_budget_bytes()

    # ---- batch tile selection ----
    B_r = _round_up(B, row_align)
    if tile_b is None:
        tile_b = B_r                                  # whole batch in one grid step
        n_tc = _num_tensorcores()
        if n_tc > 1 and B_r >= n_tc * row_align:      # split only for multi-TC parts (v7x)
            tile_b = _round_up(pl.cdiv(B_r, n_tc), row_align)
    else:
        tile_b = max(row_align, (int(tile_b) // row_align) * row_align)
        tile_b = min(tile_b, B_r)
    while tile_b > row_align and vmem_est(tile_b) > budget:
        tile_b = max(row_align, _round_up(tile_b // 2, row_align))

    B_p = _round_up(B, tile_b)
    grid = (B_p // tile_b,)

    # ---- batch padding only when needed (no lane padding anywhere) ----
    if B_p != B:
        x_p = jnp.zeros((B_p, dim), x.dtype).at[:B].set(x)
    else:
        x_p = x

    # ---- specs: activations keep their true lane width; weights / packed bias are
    #      full-array blocks with constant index maps (fetched once, VMEM-resident) ----
    in_specs = [pl.BlockSpec((tile_b, dim), lambda i: (i, 0))]
    for w in weights:
        in_specs.append(pl.BlockSpec(w.shape, lambda i: (0, 0)))
    in_specs.append(pl.BlockSpec(b_pack.shape, lambda i: (0, 0)))
    out_specs = pl.BlockSpec((tile_b, out_dim), lambda i: (i, 0))

    # Cost estimate from the true (unpadded) dims.
    flops = 2 * B * sum(i * o for i, o in zip(in_dims, out_dims))
    bytes_accessed = (B * dim * x_itemsize
                      + sum(w.size for w in weights) * cd_itemsize
                      + b_pack.size * 4
                      + B * out_dim * x_itemsize)
    cost = pl.CostEstimate(flops=flops, transcendentals=0, bytes_accessed=bytes_accessed)

    vmem_limit = int(min(budget, max(32 << 20, vmem_est(tile_b) + (8 << 20))))

    out = pl.pallas_call(
        _make_mlp_kernel(n_layers, out_dims, compute_dtype),
        out_shape=jax.ShapeDtypeStruct((B_p, out_dim), x.dtype),
        grid=grid,
        in_specs=in_specs,
        out_specs=out_specs,
        compiler_params=pltpu.CompilerParams(
            dimension_semantics=("parallel",),
            vmem_limit_bytes=vmem_limit),
        cost_estimate=cost,
    )(x_p, *weights, b_pack)

    return out[:B] if B_p != B else out


# ----------------------------- reference / init helpers -----------------------------

def init_rnet_params(key, dim, out_planes, fill_val=0.0):
    """Deterministic Xavier-uniform weights (as in init_weights) + constant bias."""
    sizes = [dim] + list(out_planes) + [dim]
    weights, biases = [], []
    for i in range(len(sizes) - 1):
        fan_in, fan_out = sizes[i], sizes[i + 1]
        key, sub = jax.random.split(key)
        bound = (6.0 / (fan_in + fan_out)) ** 0.5
        w = jax.random.uniform(sub, (fan_in, fan_out), jnp.float32,
                               minval=-bound, maxval=bound)
        b = jnp.full((1, fan_out), fill_val, jnp.float32)
        weights.append(w)
        biases.append(b)
    return weights, biases


def rnet_reference(x, weights, biases):
    h = x
    for w, b in zip(weights, biases):
        h = h @ w + b
    return h


if __name__ == "__main__":
    key = jax.random.PRNGKey(0)

    # RNet: dim=32 features, two hidden layers [64, 48].
    B, dim = 1024, 32
    out_planes = [64, 48]

    kx, kp = jax.random.split(key)
    x = jax.random.normal(kx, (B, dim), jnp.float32)
    weights, biases = init_rnet_params(kp, dim, out_planes)
    ref = rnet_reference(x, weights, biases)

    # f32 operand path: matches the PyTorch module closely.
    params_f32 = prepare_rnet_params(weights, biases, compute_dtype=jnp.float32)
    out = jax.block_until_ready(rnet_forward(x, params_f32))
    assert out.shape == (B, dim)
    assert jnp.allclose(out, ref, atol=1e-4, rtol=1e-4), "f32 mismatch vs reference"

    # bf16-operand path (MXU fast path on v6e/v7x), f32 accumulation: looser tolerance.
    params_bf16 = prepare_rnet_params(weights, biases, compute_dtype=jnp.bfloat16)
    out_bf16 = jax.block_until_ready(rnet_forward(x, params_bf16))
    assert out_bf16.shape == (B, dim)
    assert jnp.allclose(out_bf16, ref, atol=0.1, rtol=0.05), "bf16 mismatch vs reference"

    # Generation-aware default operand dtype (bf16 on v6e/v7x, f32 otherwise).
    params_auto = prepare_rnet_params(weights, biases)
    out_auto = jax.block_until_ready(rnet_forward(x, params_auto))
    assert out_auto.shape == (B, dim)
    assert jnp.allclose(out_auto, ref, atol=0.1, rtol=0.05), "auto-dtype mismatch"

    # Ragged batch (not a multiple of the row alignment / tile) handled via batch padding.
    out_rag = jax.block_until_ready(rnet_forward(x[:777], params_f32))
    assert out_rag.shape == (777, dim)
    assert jnp.allclose(out_rag, ref[:777], atol=1e-4, rtol=1e-4), "ragged mismatch"

    # Explicit small tile to exercise the multi-step batch grid path.
    out_tiled = jax.block_until_ready(rnet_forward(x, params_f32, tile_b=256))
    assert jnp.allclose(out_tiled, ref, atol=1e-4, rtol=1e-4), "tiled mismatch"

    print("KERNEL_OK")
</pallas_src>

<mosaic_0001>
module attributes {stable_mosaic.version = 11 : i64} {
  func.func @kernel(%arg0: i32, %arg1: memref<1024x32xf32, #tpu.memory_space<vmem>>, %arg2: memref<32x64xf32, #tpu.memory_space<vmem>>, %arg3: memref<64x48xf32, #tpu.memory_space<vmem>>, %arg4: memref<48x32xf32, #tpu.memory_space<vmem>>, %arg5: memref<3x64xf32, #tpu.memory_space<vmem>>, %arg6: memref<1024x32xf32, #tpu.memory_space<vmem>>) attributes {dimension_semantics = [#tpu.dimension_semantics<parallel>], iteration_bounds = array<i64: 1>, scalar_prefetch = 0 : i64, scratch_operands = 0 : i64, tpu.core_type = #tpu.core_type<tc>, window_params = [{transform_indices = @transform_0, window_bounds = array<i64: 1024, 32>}, {pipeline_mode = #tpu.pipeline_mode<synchronous>, transform_indices = @transform_1, window_bounds = array<i64: 32, 64>}, {pipeline_mode = #tpu.pipeline_mode<synchronous>, transform_indices = @transform_2, window_bounds = array<i64: 64, 48>}, {pipeline_mode = #tpu.pipeline_mode<synchronous>, transform_indices = @transform_3, window_bounds = array<i64: 48, 32>}, {pipeline_mode = #tpu.pipeline_mode<synchronous>, transform_indices = @transform_4, window_bounds = array<i64: 3, 64>}, {transform_indices = @transform_5, window_bounds = array<i64: 1024, 32>}]} {
    %c0 = arith.constant 0 : index
    %c0_0 = arith.constant 0 : index
    %0 = vector.load %arg1[%c0, %c0_0] : memref<1024x32xf32, #tpu.memory_space<vmem>>, vector<1024x32xf32>
    %c0_1 = arith.constant 0 : index
    %c0_2 = arith.constant 0 : index
    %1 = vector.load %arg2[%c0_1, %c0_2] : memref<32x64xf32, #tpu.memory_space<vmem>>, vector<32x64xf32>
    %cst = arith.constant dense<0.000000e+00> : vector<1024x64xf32>
    %2 = tpu.matmul %0, %1, %cst {dimension_numbers = #tpu.dot_dimension_numbers<[1], [0], [0], [1], [0, 0, 1, 1], [], []>} : vector<1024x32xf32>, vector<32x64xf32>, vector<1024x64xf32> -> vector<1024x64xf32>
    %c0_3 = arith.constant 0 : index
    %c0_4 = arith.constant 0 : index
    %3 = vector.load %arg5[%c0_3, %c0_4] : memref<3x64xf32, #tpu.memory_space<vmem>>, vector<1x64xf32>
    %4 = vector.broadcast %3 : vector<1x64xf32> to vector<1024x64xf32>
    %5 = arith.addf %2, %4 : vector<1024x64xf32>
    %c0_5 = arith.constant 0 : index
    %c0_6 = arith.constant 0 : index
    %6 = vector.load %arg3[%c0_5, %c0_6] : memref<64x48xf32, #tpu.memory_space<vmem>>, vector<64x48xf32>
    %cst_7 = arith.constant dense<0.000000e+00> : vector<1024x48xf32>
    %7 = tpu.matmul %5, %6, %cst_7 {dimension_numbers = #tpu.dot_dimension_numbers<[1], [0], [0], [1], [0, 0, 1, 1], [], []>} : vector<1024x64xf32>, vector<64x48xf32>, vector<1024x48xf32> -> vector<1024x48xf32>
    %c1 = arith.constant 1 : index
    %c0_8 = arith.constant 0 : index
    %8 = vector.load %arg5[%c1, %c0_8] : memref<3x64xf32, #tpu.memory_space<vmem>>, vector<1x48xf32>
    %9 = vector.broadcast %8 : vector<1x48xf32> to vector<1024x48xf32>
    %10 = arith.addf %7, %9 : vector<1024x48xf32>
    %c0_9 = arith.constant 0 : index
    %c0_10 = arith.constant 0 : index
    %11 = vector.load %arg4[%c0_9, %c0_10] : memref<48x32xf32, #tpu.memory_space<vmem>>, vector<48x32xf32>
    %cst_11 = arith.constant dense<0.000000e+00> : vector<1024x32xf32>
    %12 = tpu.matmul %10, %11, %cst_11 {dimension_numbers = #tpu.dot_dimension_numbers<[1], [0], [0], [1], [0, 0, 1, 1], [], []>} : vector<1024x48xf32>, vector<48x32xf32>, vector<1024x32xf32> -> vector<1024x32xf32>
    %c2 = arith.constant 2 : index
    %c0_12 = arith.constant 0 : index
    %13 = vector.load %arg5[%c2, %c0_12] : memref<3x64xf32, #tpu.memory_space<vmem>>, vector<1x32xf32>
    %14 = vector.broadcast %13 : vector<1x32xf32> to vector<1024x32xf32>
    %15 = arith.addf %12, %14 : vector<1024x32xf32>
    %c0_13 = arith.constant 0 : index
    %c0_14 = arith.constant 0 : index
    %16 = vector.load %arg6[%c0_13, %c0_14] : memref<1024x32xf32, #tpu.memory_space<vmem>>, vector<1024x32xf32>
    tpu.vector_store %arg6[%c0_13, %c0_14], %15 {strides = array<i32>} : memref<1024x32xf32, #tpu.memory_space<vmem>>, vector<1024x32xf32>,
    return
  }
  func.func @transform_0(%arg0: i32) -> (i32, i32) {
    %c0_i32 = arith.constant 0 : i32
    %c0_i32_0 = arith.constant 0 : i32
    return %arg0, %c0_i32 : i32, i32
  }
  func.func @transform_1(%arg0: i32) -> (i32, i32) {
    %c0_i32 = arith.constant 0 : i32
    %c0_i32_0 = arith.constant 0 : i32
    %c0_i32_1 = arith.constant 0 : i32
    return %c0_i32, %c0_i32_0 : i32, i32
  }
  func.func @transform_2(%arg0: i32) -> (i32, i32) {
    %c0_i32 = arith.constant 0 : i32
    %c0_i32_0 = arith.constant 0 : i32
    %c0_i32_1 = arith.constant 0 : i32
    return %c0_i32, %c0_i32_0 : i32, i32
  }
  func.func @transform_3(%arg0: i32) -> (i32, i32) {
    %c0_i32 = arith.constant 0 : i32
    %c0_i32_0 = arith.constant 0 : i32
    %c0_i32_1 = arith.constant 0 : i32
    return %c0_i32, %c0_i32_0 : i32, i32
  }
  func.func @transform_4(%arg0: i32) -> (i32, i32) {
    %c0_i32 = arith.constant 0 : i32
    %c0_i32_0 = arith.constant 0 : i32
    %c0_i32_1 = arith.constant 0 : i32
    return %c0_i32, %c0_i32_0 : i32, i32
  }
  func.func @transform_5(%arg0: i32) -> (i32, i32) {
    %c0_i32 = arith.constant 0 : i32
    %c0_i32_0 = arith.constant 0 : i32
    return %arg0, %c0_i32 : i32, i32
  }
}

</mosaic_0001>

<llo_original>
// kernel: tpu_custom_call.1
$region0: #{tpu_custom_call.1}
  #allocation0 [shape = 'u32[]', space=smem, size = 0x4, offset = 0x4, fixed_abs, tag = 'smem constant byte address 0x4 - core index']
  #allocation1 [shape = 'u32[144,128]{1,0:T(1,128)}', space=vmem, size = 0x12000, scoped, tag = 'internal scratch']
  %s0 = inlined_call_operand.vmem [shape: f32[1024,32], index: 0, kind: input, shape index: {}]
  %s1 = inlined_call_operand.vmem [shape: f32[32,64], index: 1, kind: input, shape index: {}]
  %s2 = inlined_call_operand.vmem [shape: f32[64,48], index: 2, kind: input, shape index: {}]
  %s3 = inlined_call_operand.vmem [shape: f32[48,32], index: 3, kind: input, shape index: {}]
  %s4 = inlined_call_operand.vmem [shape: f32[3,64], index: 4, kind: input, shape index: {}]
  %s5 = inlined_call_operand.vmem [shape: f32[1024,32], index: 5, kind: output, shape index: {}]
  %s6 = sld [smem:[#allocation0]]
  $region30: #{tpu_custom_call.1} parent=0
    _
  %s8 = ssub.s32 1, %s6
  %s9 = scalar_select 0, %s8, %s6
  // Predicated region
  $region2: #{tpu_custom_call.1} parent=0 // pred_check
    _
  $region3: #{tpu_custom_call.1} parent=0 // pred_check_branch
    %11 = sbr.rel (0) target = $region5
  $region4: #{tpu_custom_call.1} parent=0 // pred_region
    _
  $region5: #{tpu_custom_call.1} parent=0 // pred_fallthru
    _
  // Predicated region
  $region6: #{tpu_custom_call.1} parent=0 // pred_check
    _
  $region7: #{tpu_custom_call.1} parent=0 // pred_check_branch
    %13 = sbr.rel (0) target = $region9
  $region8: #{tpu_custom_call.1} parent=0 // pred_region
    _
  $region9: #{tpu_custom_call.1} parent=0 // pred_fallthru
    _
  // Predicated region
  $region10: #{tpu_custom_call.1} parent=0 // pred_check
    _
  $region11: #{tpu_custom_call.1} parent=0 // pred_check_branch
    %15 = sbr.rel (0) target = $region13
  $region12: #{tpu_custom_call.1} parent=0 // pred_region
    _
  $region13: #{tpu_custom_call.1} parent=0 // pred_fallthru
    _
  // Predicated region
  $region14: #{tpu_custom_call.1} parent=0 // pred_check
    _
  $region15: #{tpu_custom_call.1} parent=0 // pred_check_branch
    %17 = sbr.rel (0) target = $region17
  $region16: #{tpu_custom_call.1} parent=0 // pred_region
    _
  $region17: #{tpu_custom_call.1} parent=0 // pred_fallthru
    _
  // Predicated region
  $region18: #{tpu_custom_call.1} parent=0 // pred_check
    _
  $region19: #{tpu_custom_call.1} parent=0 // pred_check_branch
    %19 = sbr.rel (0) target = $region21
  $region20: #{tpu_custom_call.1} parent=0 // pred_region
    _
  $region21: #{tpu_custom_call.1} parent=0 // pred_fallthru
    _
  %v20 = vld [vmem:[%s0] sm:$0xff]
  %v21 = vld [vmem:[%s0 + $0x8] sm:$0xff]
  %v22 = vld [vmem:[%s0 + $0x10] sm:$0xff]
  %v23 = vld [vmem:[%s0 + $0x18] sm:$0xff]
  %v24 = vld [vmem:[%s0 + $0x20] sm:$0xff]
  %v25 = vld [vmem:[%s0 + $0x28] sm:$0xff]
  %v26 = vld [vmem:[%s0 + $0x30] sm:$0xff]
  %v27 = vld [vmem:[%s0 + $0x38] sm:$0xff]
  %v28 = vld [vmem:[%s0 + $0x40] sm:$0xff]
  %v29 = vld [vmem:[%s0 + $0x48] sm:$0xff]
  %v30 = vld [vmem:[%s0 + $0x50] sm:$0xff]
  %v31 = vld [vmem:[%s0 + $0x58] sm:$0xff]
  %v32 = vld [vmem:[%s0 + $0x60] sm:$0xff]
  %v33 = vld [vmem:[%s0 + $0x68] sm:$0xff]
  %v34 = vld [vmem:[%s0 + $0x70] sm:$0xff]
  %v35 = vld [vmem:[%s0 + $0x78] sm:$0xff]
  %v36 = vld [vmem:[%s0 + $0x80] sm:$0xff]
  %v37 = vld [vmem:[%s0 + $0x88] sm:$0xff]
  %v38 = vld [vmem:[%s0 + $0x90] sm:$0xff]
  %v39 = vld [vmem:[%s0 + $0x98] sm:$0xff]
  %v40 = vld [vmem:[%s0 + $0xa0] sm:$0xff]
  %v41 = vld [vmem:[%s0 + $0xa8] sm:$0xff]
  %v42 = vld [vmem:[%s0 + $0xb0] sm:$0xff]
  %v43 = vld [vmem:[%s0 + $0xb8] sm:$0xff]
  %v44 = vld [vmem:[%s0 + $0xc0] sm:$0xff]
  %v45 = vld [vmem:[%s0 + $0xc8] sm:$0xff]
  %v46 = vld [vmem:[%s0 + $0xd0] sm:$0xff]
  %v47 = vld [vmem:[%s0 + $0xd8] sm:$0xff]
  %v48 = vld [vmem:[%s0 + $0xe0] sm:$0xff]
  %v49 = vld [vmem:[%s0 + $0xe8] sm:$0xff]
  %v50 = vld [vmem:[%s0 + $0xf0] sm:$0xff]
  %v51 = vld [vmem:[%s0 + $0xf8] sm:$0xff]
  %v52 = vld [vmem:[%s0 + $0x100] sm:$0xff]
  %v53 = vld [vmem:[%s0 + $0x108] sm:$0xff]
  %v54 = vld [vmem:[%s0 + $0x110] sm:$0xff]
  %v55 = vld [vmem:[%s0 + $0x118] sm:$0xff]
  %v56 = vld [vmem:[%s0 + $0x120] sm:$0xff]
  %v57 = vld [vmem:[%s0 + $0x128] sm:$0xff]
  %v58 = vld [vmem:[%s0 + $0x130] sm:$0xff]
  %v59 = vld [vmem:[%s0 + $0x138] sm:$0xff]
  %v60 = vld [vmem:[%s0 + $0x140] sm:$0xff]
  %v61 = vld [vmem:[%s0 + $0x148] sm:$0xff]
  %v62 = vld [vmem:[%s0 + $0x150] sm:$0xff]
  %v63 = vld [vmem:[%s0 + $0x158] sm:$0xff]
  %v64 = vld [vmem:[%s0 + $0x160] sm:$0xff]
  %v65 = vld [vmem:[%s0 + $0x168] sm:$0xff]
  %v66 = vld [vmem:[%s0 + $0x170] sm:$0xff]
  %v67 = vld [vmem:[%s0 + $0x178] sm:$0xff]
  %v68 = vld [vmem:[%s0 + $0x180] sm:$0xff]
  %v69 = vld [vmem:[%s0 + $0x188] sm:$0xff]
  %v70 = vld [vmem:[%s0 + $0x190] sm:$0xff]
  %v71 = vld [vmem:[%s0 + $0x198] sm:$0xff]
  %v72 = vld [vmem:[%s0 + $0x1a0] sm:$0xff]
  %v73 = vld [vmem:[%s0 + $0x1a8] sm:$0xff]
  %v74 = vld [vmem:[%s0 + $0x1b0] sm:$0xff]
  %v75 = vld [vmem:[%s0 + $0x1b8] sm:$0xff]
  %v76 = vld [vmem:[%s0 + $0x1c0] sm:$0xff]
  %v77 = vld [vmem:[%s0 + $0x1c8] sm:$0xff]
  %v78 = vld [vmem:[%s0 + $0x1d0] sm:$0xff]
  %v79 = vld [vmem:[%s0 + $0x1d8] sm:$0xff]
  %v80 = vld [vmem:[%s0 + $0x1e0] sm:$0xff]
  %v81 = vld [vmem:[%s0 + $0x1e8] sm:$0xff]
  %v82 = vld [vmem:[%s0 + $0x1f0] sm:$0xff]
  %v83 = vld [vmem:[%s0 + $0x1f8] sm:$0xff]
  %v84 = vld [vmem:[%s0 + $0x200] sm:$0xff]
  %v85 = vld [vmem:[%s0 + $0x208] sm:$0xff]
  %v86 = vld [vmem:[%s0 + $0x210] sm:$0xff]
  %v87 = vld [vmem:[%s0 + $0x218] sm:$0xff]
  %v88 = vld [vmem:[%s0 + $0x220] sm:$0xff]
  %v89 = vld [vmem:[%s0 + $0x228] sm:$0xff]
  %v90 = vld [vmem:[%s0 + $0x230] sm:$0xff]
  %v91 = vld [vmem:[%s0 + $0x238] sm:$0xff]
  %v92 = vld [vmem:[%s0 + $0x240] sm:$0xff]
  %v93 = vld [vmem:[%s0 + $0x248] sm:$0xff]
  %v94 = vld [vmem:[%s0 + $0x250] sm:$0xff]
  %v95 = vld [vmem:[%s0 + $0x258] sm:$0xff]
  %v96 = vld [vmem:[%s0 + $0x260] sm:$0xff]
  %v97 = vld [vmem:[%s0 + $0x268] sm:$0xff]
  %v98 = vld [vmem:[%s0 + $0x270] sm:$0xff]
  %v99 = vld [vmem:[%s0 + $0x278] sm:$0xff]
  %v100 = vld [vmem:[%s0 + $0x280] sm:$0xff]
  %v101 = vld [vmem:[%s0 + $0x288] sm:$0xff]
  %v102 = vld [vmem:[%s0 + $0x290] sm:$0xff]
  %v103 = vld [vmem:[%s0 + $0x298] sm:$0xff]
  %v104 = vld [vmem:[%s0 + $0x2a0] sm:$0xff]
  %v105 = vld [vmem:[%s0 + $0x2a8] sm:$0xff]
  %v106 = vld [vmem:[%s0 + $0x2b0] sm:$0xff]
  %v107 = vld [vmem:[%s0 + $0x2b8] sm:$0xff]
  %v108 = vld [vmem:[%s0 + $0x2c0] sm:$0xff]
  %v109 = vld [vmem:[%s0 + $0x2c8] sm:$0xff]
  %v110 = vld [vmem:[%s0 + $0x2d0] sm:$0xff]
  %v111 = vld [vmem:[%s0 + $0x2d8] sm:$0xff]
  %v112 = vld [vmem:[%s0 + $0x2e0] sm:$0xff]
  %v113 = vld [vmem:[%s0 + $0x2e8] sm:$0xff]
  %v114 = vld [vmem:[%s0 + $0x2f0] sm:$0xff]
  %v115 = vld [vmem:[%s0 + $0x2f8] sm:$0xff]
  %v116 = vld [vmem:[%s0 + $0x300] sm:$0xff]
  %v117 = vld [vmem:[%s0 + $0x308] sm:$0xff]
  %v118 = vld [vmem:[%s0 + $0x310] sm:$0xff]
  %v119 = vld [vmem:[%s0 + $0x318] sm:$0xff]
  %v120 = vld [vmem:[%s0 + $0x320] sm:$0xff]
  %v121 = vld [vmem:[%s0 + $0x328] sm:$0xff]
  %v122 = vld [vmem:[%s0 + $0x330] sm:$0xff]
  %v123 = vld [vmem:[%s0 + $0x338] sm:$0xff]
  %v124 = vld [vmem:[%s0 + $0x340] sm:$0xff]
  %v125 = vld [vmem:[%s0 + $0x348] sm:$0xff]
  %v126 = vld [vmem:[%s0 + $0x350] sm:$0xff]
  %v127 = vld [vmem:[%s0 + $0x358] sm:$0xff]
  %v128 = vld [vmem:[%s0 + $0x360] sm:$0xff]
  %v129 = vld [vmem:[%s0 + $0x368] sm:$0xff]
  %v130 = vld [vmem:[%s0 + $0x370] sm:$0xff]
  %v131 = vld [vmem:[%s0 + $0x378] sm:$0xff]
  %v132 = vld [vmem:[%s0 + $0x380] sm:$0xff]
  %v133 = vld [vmem:[%s0 + $0x388] sm:$0xff]
  %v134 = vld [vmem:[%s0 + $0x390] sm:$0xff]
  %v135 = vld [vmem:[%s0 + $0x398] sm:$0xff]
  %v136 = vld [vmem:[%s0 + $0x3a0] sm:$0xff]
  %v137 = vld [vmem:[%s0 + $0x3a8] sm:$0xff]
  %v138 = vld [vmem:[%s0 + $0x3b0] sm:$0xff]
  %v139 = vld [vmem:[%s0 + $0x3b8] sm:$0xff]
  %v140 = vld [vmem:[%s0 + $0x3c0] sm:$0xff]
  %v141 = vld [vmem:[%s0 + $0x3c8] sm:$0xff]
  %v142 = vld [vmem:[%s0 + $0x3d0] sm:$0xff]
  %v143 = vld [vmem:[%s0 + $0x3d8] sm:$0xff]
  %v144 = vld [vmem:[%s0 + $0x3e0] sm:$0xff]
  %v145 = vld [vmem:[%s0 + $0x3e8] sm:$0xff]
  %v146 = vld [vmem:[%s0 + $0x3f0] sm:$0xff]
  %v147 = vld [vmem:[%s0 + $0x3f8] sm:$0xff]
  %v148 = vld [vmem:[%s1] sm:$0xff]
  %v149 = vld [vmem:[%s1 + $0x8] sm:$0xff]
  %v150 = vld [vmem:[%s1 + $0x10] sm:$0xff]
  %v151 = vld [vmem:[%s1 + $0x18] sm:$0xff]
  %v152 = vld [vmem:[%s4] sm:$0x1]
  %v153 = vlaneseq
  %v154 = vshrl.u32 %v153, 7
  %v155 = vsub.s32 0, %v154
  %v156 = vrot.slane %v152, %v155
  %vm157 = vcmask 261120
  %v159 = vsel %vm157, %v20, 0
  %v162 = vsel %vm157, %v21, 0
  %v165 = vsel %vm157, %v22, 0
  %v168 = vsel %vm157, %v23, 0
  %v171 = vsel %vm157, %v24, 0
  %v174 = vsel %vm157, %v25, 0
  %v177 = vsel %vm157, %v26, 0
  %v180 = vsel %vm157, %v27, 0
  %v183 = vsel %vm157, %v28, 0
  %v186 = vsel %vm157, %v29, 0
  %v189 = vsel %vm157, %v30, 0
  %v192 = vsel %vm157, %v31, 0
  %v195 = vsel %vm157, %v32, 0
  %v198 = vsel %vm157, %v33, 0
  %v201 = vsel %vm157, %v34, 0
  %v204 = vsel %vm157, %v35, 0
  %v207 = vsel %vm157, %v36, 0
  %v210 = vsel %vm157, %v37, 0
  %v213 = vsel %vm157, %v38, 0
  %v216 = vsel %vm157, %v39, 0
  %v219 = vsel %vm157, %v40, 0
  %v222 = vsel %vm157, %v41, 0
  %v225 = vsel %vm157, %v42, 0
  %v228 = vsel %vm157, %v43, 0
  %v231 = vsel %vm157, %v44, 0
  %v234 = vsel %vm157, %v45, 0
  %v237 = vsel %vm157, %v46, 0
  %v240 = vsel %vm157, %v47, 0
  %v243 = vsel %vm157, %v48, 0
  %v246 = vsel %vm157, %v49, 0
  %v249 = vsel %vm157, %v50, 0
  %v252 = vsel %vm157, %v51, 0
  %v255 = vsel %vm157, %v52, 0
  %v258 = vsel %vm157, %v53, 0
  %v261 = vsel %vm157, %v54, 0
  %v264 = vsel %vm157, %v55, 0
  %v267 = vsel %vm157, %v56, 0
  %v270 = vsel %vm157, %v57, 0
  %v273 = vsel %vm157, %v58, 0
  %v276 = vsel %vm157, %v59, 0
  %v279 = vsel %vm157, %v60, 0
  %v282 = vsel %vm157, %v61, 0
  %v285 = vsel %vm157, %v62, 0
  %v288 = vsel %vm157, %v63, 0
  %v291 = vsel %vm157, %v64, 0
  %v294 = vsel %vm157, %v65, 0
  %v297 = vsel %vm157, %v66, 0
  %v300 = vsel %vm157, %v67, 0
  %v303 = vsel %vm157, %v68, 0
  %v306 = vsel %vm157, %v69, 0
  %v309 = vsel %vm157, %v70, 0
  %v312 = vsel %vm157, %v71, 0
  %v315 = vsel %vm157, %v72, 0
  %v318 = vsel %vm157, %v73, 0
  %v321 = vsel %vm157, %v74, 0
  %v324 = vsel %vm157, %v75, 0
  %v327 = vsel %vm157, %v76, 0
  %v330 = vsel %vm157, %v77, 0
  %v333 = vsel %vm157, %v78, 0
  %v336 = vsel %vm157, %v79, 0
  %v339 = vsel %vm157, %v80, 0
  %v342 = vsel %vm157, %v81, 0
  %v345 = vsel %vm157, %v82, 0
  %v348 = vsel %vm157, %v83, 0
  %v351 = vsel %vm157, %v84, 0
  %v354 = vsel %vm157, %v85, 0
  %v357 = vsel %vm157, %v86, 0
  %v360 = vsel %vm157, %v87, 0
  %v363 = vsel %vm157, %v88, 0
  %v366 = vsel %vm157, %v89, 0
  %v369 = vsel %vm157, %v90, 0
  %v372 = vsel %vm157, %v91, 0
  %v375 = vsel %vm157, %v92, 0
  %v378 = vsel %vm157, %v93, 0
  %v381 = vsel %vm157, %v94, 0
  %v384 = vsel %vm157, %v95, 0
  %v387 = vsel %vm157, %v96, 0
  %v390 = vsel %vm157, %v97, 0
  %v393 = vsel %vm157, %v98, 0
  %v396 = vsel %vm157, %v99, 0
  %v399 = vsel %vm157, %v100, 0
  %v402 = vsel %vm157, %v101, 0
  %v405 = vsel %vm157, %v102, 0
  %v408 = vsel %vm157, %v103, 0
  %v411 = vsel %vm157, %v104, 0
  %v414 = vsel %vm157, %v105, 0
  %v417 = vsel %vm157, %v106, 0
  %v420 = vsel %vm157, %v107, 0
  %v423 = vsel %vm157, %v108, 0
  %v426 = vsel %vm157, %v109, 0
  %v429 = vsel %vm157, %v110, 0
  %v432 = vsel %vm157, %v111, 0
  %v435 = vsel %vm157, %v112, 0
  %v438 = vsel %vm157, %v113, 0
  %v441 = vsel %vm157, %v114, 0
  %v444 = vsel %vm157, %v115, 0
  %v447 = vsel %vm157, %v116, 0
  %v450 = vsel %vm157, %v117, 0
  %v453 = vsel %vm157, %v118, 0
  %v456 = vsel %vm157, %v119, 0
  %v459 = vsel %vm157, %v120, 0
  %v462 = vsel %vm157, %v121, 0
  %v465 = vsel %vm157, %v122, 0
  %v468 = vsel %vm157, %v123, 0
  %v471 = vsel %vm157, %v124, 0
  %v474 = vsel %vm157, %v125, 0
  %v477 = vsel %vm157, %v126, 0
  %v480 = vsel %vm157, %v127, 0
  %v483 = vsel %vm157, %v128, 0
  %v486 = vsel %vm157, %v129, 0
  %v489 = vsel %vm157, %v130, 0
  %v492 = vsel %vm157, %v131, 0
  %v495 = vsel %vm157, %v132, 0
  %v498 = vsel %vm157, %v133, 0
  %v501 = vsel %vm157, %v134, 0
  %v504 = vsel %vm157, %v135, 0
  %v507 = vsel %vm157, %v136, 0
  %v510 = vsel %vm157, %v137, 0
  %v513 = vsel %vm157, %v138, 0
  %v516 = vsel %vm157, %v139, 0
  %v519 = vsel %vm157, %v140, 0
  %v522 = vsel %vm157, %v141, 0
  %v525 = vsel %vm157, %v142, 0
  %v528 = vsel %vm157, %v143, 0
  %v531 = vsel %vm157, %v144, 0
  %v534 = vsel %vm157, %v145, 0
  %v537 = vsel %vm157, %v146, 0
  %v540 = vsel %vm157, %v147, 0
  %542 = vmatprep.subr.mxu0 0.0
  %543 = vmatpush1.msra.mxu0 %v148
  %544 = vmatprep.subr.mxu0 0.0
  %545 = vmatpush1.msra.mxu0 %v149
  %546 = vmatprep.subr.mxu0 0.0
  %547 = vmatpush1.msra.mxu0 %v150
  %548 = vmatprep.subr.mxu0 0.0
  %549 = vmatpush1.msra.mxu0 %v151
  %550 = vmatprep.subr.mxu0 0.0
  %551 = vmatpush1.msra.mxu0 0.0
  %552 = vmatprep.subr.mxu0 0.0
  %553 = vmatpush1.msra.mxu0 0.0
  %554 = vmatprep.subr.mxu0 0.0
  %555 = vmatpush1.msra.mxu0 0.0
  %556 = vmatprep.subr.mxu0 0.0
  %557 = vmatpush1.msra.mxu0 0.0
  %558 = vmatprep.subr.mxu0 0.0
  %559 = vmatpush1.msra.mxu0 0.0
  %560 = vmatprep.subr.mxu0 0.0
  %561 = vmatpush1.msra.mxu0 0.0
  %562 = vmatprep.subr.mxu0 0.0
  %563 = vmatpush1.msra.mxu0 0.0
  %564 = vmatprep.subr.mxu0 0.0
  %565 = vmatpush1.msra.mxu0 0.0
  %566 = vmatprep.subr.mxu0 0.0
  %567 = vmatpush1.msra.mxu0 0.0
  %568 = vmatprep.subr.mxu0 0.0
  %569 = vmatpush1.msra.mxu0 0.0
  %570 = vmatprep.subr.mxu0 0.0
  %571 = vmatpush1.msra.mxu0 0.0
  %572 = vmatprep.subr.mxu0 0.0
  %573 = vmatpush1.msra.mxu0 0.0
  %574 = vmatprep.subr.mxu0 0.0
  %575 = vmatpush1.msra.mxu0 0.0
  %576 = vmatprep.subr.mxu0 0.0
  %577 = vmatpush1.msra.mxu0 0.0
  %578 = vmatprep.subr.mxu0 0.0
  %579 = vmatpush1.msra.mxu0 0.0
  %580 = vmatprep.subr.mxu0 0.0
  %581 = vmatpush1.msra.mxu0 0.0
  %582 = vmatprep.subr.mxu0 0.0
  %583 = vmatpush1.msra.mxu0 0.0
  %584 = vmatprep.subr.mxu0 0.0
  %585 = vmatpush1.msra.mxu0 0.0
  %586 = vmatprep.subr.mxu0 0.0
  %587 = vmatpush1.msra.mxu0 0.0
  %588 = vmatprep.subr.mxu0 0.0
  %589 = vmatpush1.msra.mxu0 0.0
  %590 = vmatprep.subr.mxu0 0.0
  %591 = vmatpush1.msra.mxu0 0.0
  %592 = vmatprep.subr.mxu0 0.0
  %593 = vmatpush1.msra.mxu0 0.0
  %594 = vmatprep.subr.mxu0 0.0
  %595 = vmatpush1.msra.mxu0 0.0
  %596 = vmatprep.subr.mxu0 0.0
  %597 = vmatpush1.msra.mxu0 0.0
  %598 = vmatprep.subr.mxu0 0.0
  %599 = vmatpush1.msra.mxu0 0.0
  %600 = vmatprep.subr.mxu0 0.0
  %601 = vmatpush1.msra.mxu0 0.0
  %602 = vmatprep.subr.mxu0 0.0
  %603 = vmatpush1.msra.mxu0 0.0
  %604 = vmatprep.subr.mxu0 0.0
  %605 = vmatpush1.msra.mxu0 0.0
  %606 = vmatprep.mubr.f32.mxu0 0.0
  %607 = vmatmul.mubr.f32.gmra.mrb[0].mxu0 %v159
  %v608 = vpop.f32.mrb[0].mxu0
  %v609 = vadd.f32 %v156, %v608
  %v610 = vpop.f32.mrb[0].mxu0
  %611 = vmatprep.mubr.f32.mxu0 0.0
  %612 = vmatmul.mubr.f32.gmra.mrb[0].mxu0 %v162
  %v613 = vpop.f32.mrb[0].mxu0
  %v614 = vadd.f32 %v156, %v613
  %v615 = vpop.f32.mrb[0].mxu0
  %616 = vmatprep.mubr.f32.mxu0 0.0
  %617 = vmatmul.mubr.f32.gmra.mrb[0].mxu0 %v165
  %v618 = vpop.f32.mrb[0].mxu0
  %v619 = vadd.f32 %v156, %v618
  %v620 = vpop.f32.mrb[0].mxu0
  %621 = vmatprep.mubr.f32.mxu0 0.0
  %622 = vmatmul.mubr.f32.gmra.mrb[0].mxu0 %v168
  %v623 = vpop.f32.mrb[0].mxu0
  %v624 = vadd.f32 %v156, %v623
  %v625 = vpop.f32.mrb[0].mxu0
  %626 = vmatprep.mubr.f32.mxu0 0.0
  %627 = vmatmul.mubr.f32.gmra.mrb[0].mxu0 %v171
  %v628 = vpop.f32.mrb[0].mxu0
  %v629 = vadd.f32 %v156, %v628
  %v630 = vpop.f32.mrb[0].mxu0
  %631 = vmatprep.mubr.f32.mxu0 0.0
  %632 = vmatmul.mubr.f32.gmra.mrb[0].mxu0 %v174
  %v633 = vpop.f32.mrb[0].mxu0
  %v634 = vadd.f32 %v156, %v633
  %v635 = vpop.f32.mrb[0].mxu0
  %636 = vmatprep.mubr.f32.mxu0 0.0
  %637 = vmatmul.mubr.f32.gmra.mrb[0].mxu0 %v177
  %v638 = vpop.f32.mrb[0].mxu0
  %v639 = vadd.f32 %v156, %v638
  %v640 = vpop.f32.mrb[0].mxu0
  %641 = vmatprep.mubr.f32.mxu0 0.0
  %642 = vmatmul.mubr.f32.gmra.mrb[0].mxu0 %v180
  %v643 = vpop.f32.mrb[0].mxu0
  %v644 = vadd.f32 %v156, %v643
  %v645 = vpop.f32.mrb[0].mxu0
  %646 = vmatprep.mubr.f32.mxu0 0.0
  %647 = vmatmul.mubr.f32.gmra.mrb[0].mxu0 %v183
  %v648 = vpop.f32.mrb[0].mxu0
  %v649 = vadd.f32 %v156, %v648
  %v650 = vpop.f32.mrb[0].mxu0
  %651 = vmatprep.mubr.f32.mxu0 0.0
  %652 = vmatmul.mubr.f32.gmra.mrb[0].mxu0 %v186
  %v653 = vpop.f32.mrb[0].mxu0
  %v654 = vadd.f32 %v156, %v653
  %v655 = vpop.f32.mrb[0].mxu0
  %656 = vmatprep.mubr.f32.mxu0 0.0
  %657 = vmatmul.mubr.f32.gmra.mrb[0].mxu0 %v189
  %v658 = vpop.f32.mrb[0].mxu0
  %v659 = vadd.f32 %v156, %v658
  %v660 = vpop.f32.mrb[0].mxu0
  %661 = vmatprep.mubr.f32.mxu0 0.0
  %662 = vmatmul.mubr.f32.gmra.mrb[0].mxu0 %v192
  %v663 = vpop.f32.mrb[0].mxu0
  %v664 = vadd.f32 %v156, %v663
  %v665 = vpop.f32.mrb[0].mxu0
  %666 = vmatprep.mubr.f32.mxu0 0.0
  %667 = vmatmul.mubr.f32.gmra.mrb[0].mxu0 %v195
  %v668 = vpop.f32.mrb[0].mxu0
  %v669 = vadd.f32 %v156, %v668
  %v670 = vpop.f32.mrb[0].mxu0
  %671 = vmatprep.mubr.f32.mxu0 0.0
  %672 = vmatmul.mubr.f32.gmra.mrb[0].mxu0 %v198
  %v673 = vpop.f32.mrb[0].mxu0
  %v674 = vadd.f32 %v156, %v673
  %v675 = vpop.f32.mrb[0].mxu0
  %676 = vmatprep.mubr.f32.mxu0 0.0
  %677 = vmatmul.mubr.f32.gmra.mrb[0].mxu0 %v201
  %v678 = vpop.f32.mrb[0].mxu0
  %v679 = vadd.f32 %v156, %v678
  %v680 = vpop.f32.mrb[0].mxu0
  %681 = vmatprep.mubr.f32.mxu0 0.0
  %682 = vmatmul.mubr.f32.gmra.mrb[0].mxu0 %v204
  %v683 = vpop.f32.mrb[0].mxu0
  %v684 = vadd.f32 %v156, %v683
  %v685 = vpop.f32.mrb[0].mxu0
  %686 = vmatprep.mubr.f32.mxu0 0.0
  %687 = vmatmul.mubr.f32.gmra.mrb[0].mxu0 %v207
  %v688 = vpop.f32.mrb[0].mxu0
  %v689 = vadd.f32 %v156, %v688
  %v690 = vpop.f32.mrb[0].mxu0
  %691 = vmatprep.mubr.f32.mxu0 0.0
  %692 = vmatmul.mubr.f32.gmra.mrb[0].mxu0 %v210
  %v693 = vpop.f32.mrb[0].mxu0
  %v694 = vadd.f32 %v156, %v693
  %v695 = vpop.f32.mrb[0].mxu0
  %696 = vmatprep.mubr.f32.mxu0 0.0
  %697 = vmatmul.mubr.f32.gmra.mrb[0].mxu0 %v213
  %v698 = vpop.f32.mrb[0].mxu0
  %v699 = vadd.f32 %v156, %v698
  %v700 = vpop.f32.mrb[0].mxu0
  %701 = vmatprep.mubr.f32.mxu0 0.0
  %702 = vmatmul.mubr.f32.gmra.mrb[0].mxu0 %v216
  %v703 = vpop.f32.mrb[0].mxu0
  %v704 = vadd.f32 %v156, %v703
  %v705 = vpop.f32.mrb[0].mxu0
  %706 = vmatprep.mubr.f32.mxu0 0.0
  %707 = vmatmul.mubr.f32.gmra.mrb[0].mxu0 %v219
  %v708 = vpop.f32.mrb[0].mxu0
  %v709 = vadd.f32 %v156, %v708
  %v710 = vpop.f32.mrb[0].mxu0
  %711 = vmatprep.mubr.f32.mxu0 0.0
  %712 = vmatmul.mubr.f32.gmra.mrb[0].mxu0 %v222
  %v713 = vpop.f32.mrb[0].mxu0
  %v714 = vadd.f32 %v156, %v713
  %v715 = vpop.f32.mrb[0].mxu0
  %716 = vmatprep.mubr.f32.mxu0 0.0
  %717 = vmatmul.mubr.f32.gmra.mrb[0].mxu0 %v225
  %v718 = vpop.f32.mrb[0].mxu0
  %v719 = vadd.f32 %v156, %v718
  %v720 = vpop.f32.mrb[0].mxu0
  %721 = vmatprep.mubr.f32.mxu0 0.0
  %722 = vmatmul.mubr.f32.gmra.mrb[0].mxu0 %v228
  %v723 = vpop.f32.mrb[0].mxu0
  %v724 = vadd.f32 %v156, %v723
  %v725 = vpop.f32.mrb[0].mxu0
  %726 = vmatprep.mubr.f32.mxu0 0.0
  %727 = vmatmul.mubr.f32.gmra.mrb[0].mxu0 %v231
  %v728 = vpop.f32.mrb[0].mxu0
  %v729 = vadd.f32 %v156, %v728
  %v730 = vpop.f32.mrb[0].mxu0
  %731 = vmatprep.mubr.f32.mxu0 0.0
  %732 = vmatmul.mubr.f32.gmra.mrb[0].mxu0 %v234
  %v733 = vpop.f32.mrb[0].mxu0
  %v734 = vadd.f32 %v156, %v733
  %v735 = vpop.f32.mrb[0].mxu0
  %736 = vmatprep.mubr.f32.mxu0 0.0
  %737 = vmatmul.mubr.f32.gmra.mrb[0].mxu0 %v237
  %v738 = vpop.f32.mrb[0].mxu0
  %v739 = vadd.f32 %v156, %v738
  %v740 = vpop.f32.mrb[0].mxu0
  %741 = vmatprep.mubr.f32.mxu0 0.0
  %742 = vmatmul.mubr.f32.gmra.mrb[0].mxu0 %v240
  %v743 = vpop.f32.mrb[0].mxu0
  %v744 = vadd.f32 %v156, %v743
  %v745 = vpop.f32.mrb[0].mxu0
  %746 = vmatprep.mubr.f32.mxu0 0.0
  %747 = vmatmul.mubr.f32.gmra.mrb[0].mxu0 %v243
  %v748 = vpop.f32.mrb[0].mxu0
  %v749 = vadd.f32 %v156, %v748
  %v750 = vpop.f32.mrb[0].mxu0
  %751 = vmatprep.mubr.f32.mxu0 0.0
  %752 = vmatmul.mubr.f32.gmra.mrb[0].mxu0 %v246
  %v753 = vpop.f32.mrb[0].mxu0
  %v754 = vadd.f32 %v156, %v753
  %v755 = vpop.f32.mrb[0].mxu0
  %756 = vmatprep.mubr.f32.mxu0 0.0
  %757 = vmatmul.mubr.f32.gmra.mrb[0].mxu0 %v249
  %v758 = vpop.f32.mrb[0].mxu0
  %v759 = vadd.f32 %v156, %v758
  %v760 = vpop.f32.mrb[0].mxu0
  %761 = vmatprep.mubr.f32.mxu0 0.0
  %762 = vmatmul.mubr.f32.gmra.mrb[0].mxu0 %v252
  %v763 = vpop.f32.mrb[0].mxu0
  %v764 = vadd.f32 %v156, %v763
  %v765 = vpop.f32.mrb[0].mxu0
  %766 = vmatprep.mubr.f32.mxu0 0.0
  %767 = vmatmul.mubr.f32.gmra.mrb[0].mxu0 %v255
  %v768 = vpop.f32.mrb[0].mxu0
  %v769 = vadd.f32 %v156, %v768
  %v770 = vpop.f32.mrb[0].mxu0
  %771 = vmatprep.mubr.f32.mxu0 0.0
  %772 = vmatmul.mubr.f32.gmra.mrb[0].mxu0 %v258
  %v773 = vpop.f32.mrb[0].mxu0
  %v774 = vadd.f32 %v156, %v773
  %v775 = vpop.f32.mrb[0].mxu0
  %776 = vmatprep.mubr.f32.mxu0 0.0
  %777 = vmatmul.mubr.f32.gmra.mrb[0].mxu0 %v261
  %v778 = vpop.f32.mrb[0].mxu0
  %v779 = vadd.f32 %v156, %v778
  %v780 = vpop.f32.mrb[0].mxu0
  %781 = vmatprep.mubr.f32.mxu0 0.0
  %782 = vmatmul.mubr.f32.gmra.mrb[0].mxu0 %v264
  %v783 = vpop.f32.mrb[0].mxu0
  %v784 = vadd.f32 %v156, %v783
  %v785 = vpop.f32.mrb[0].mxu0
  %786 = vmatprep.mubr.f32.mxu0 0.0
  %787 = vmatmul.mubr.f32.gmra.mrb[0].mxu0 %v267
  %v788 = vpop.f32.mrb[0].mxu0
  %v789 = vadd.f32 %v156, %v788
  %v790 = vpop.f32.mrb[0].mxu0
  %791 = vmatprep.mubr.f32.mxu0 0.0
  %792 = vmatmul.mubr.f32.gmra.mrb[0].mxu0 %v270
  %v793 = vpop.f32.mrb[0].mxu0
  %v794 = vadd.f32 %v156, %v793
  %v795 = vpop.f32.mrb[0].mxu0
  %796 = vmatprep.mubr.f32.mxu0 0.0
  %797 = vmatmul.mubr.f32.gmra.mrb[0].mxu0 %v273
  %v798 = vpop.f32.mrb[0].mxu0
  %v799 = vadd.f32 %v156, %v798
  %v800 = vpop.f32.mrb[0].mxu0
  %801 = vmatprep.mubr.f32.mxu0 0.0
  %802 = vmatmul.mubr.f32.gmra.mrb[0].mxu0 %v276
  %v803 = vpop.f32.mrb[0].mxu0
  %v804 = vadd.f32 %v156, %v803
  %v805 = vpop.f32.mrb[0].mxu0
  %806 = vmatprep.mubr.f32.mxu0 0.0
  %807 = vmatmul.mubr.f32.gmra.mrb[0].mxu0 %v279
  %v808 = vpop.f32.mrb[0].mxu0
  %v809 = vadd.f32 %v156, %v808
  %v810 = vpop.f32.mrb[0].mxu0
  %811 = vmatprep.mubr.f32.mxu0 0.0
  %812 = vmatmul.mubr.f32.gmra.mrb[0].mxu0 %v282
  %v813 = vpop.f32.mrb[0].mxu0
  %v814 = vadd.f32 %v156, %v813
  %v815 = vpop.f32.mrb[0].mxu0
  %816 = vmatprep.mubr.f32.mxu0 0.0
  %817 = vmatmul.mubr.f32.gmra.mrb[0].mxu0 %v285
  %v818 = vpop.f32.mrb[0].mxu0
  %v819 = vadd.f32 %v156, %v818
  %v820 = vpop.f32.mrb[0].mxu0
  %821 = vmatprep.mubr.f32.mxu0 0.0
  %822 = vmatmul.mubr.f32.gmra.mrb[0].mxu0 %v288
  %v823 = vpop.f32.mrb[0].mxu0
  %v824 = vadd.f32 %v156, %v823
  %v825 = vpop.f32.mrb[0].mxu0
  %826 = vmatprep.mubr.f32.mxu0 0.0
  %827 = vmatmul.mubr.f32.gmra.mrb[0].mxu0 %v291
  %v828 = vpop.f32.mrb[0].mxu0
  %v829 = vadd.f32 %v156, %v828
  %v830 = vpop.f32.mrb[0].mxu0
  %831 = vmatprep.mubr.f32.mxu0 0.0
  %832 = vmatmul.mubr.f32.gmra.mrb[0].mxu0 %v294
  %v833 = vpop.f32.mrb[0].mxu0
  %v834 = vadd.f32 %v156, %v833
  %v835 = vpop.f32.mrb[0].mxu0
  %836 = vmatprep.mubr.f32.mxu0 0.0
  %837 = vmatmul.mubr.f32.gmra.mrb[0].mxu0 %v297
  %v838 = vpop.f32.mrb[0].mxu0
  %v839 = vadd.f32 %v156, %v838
  %v840 = vpop.f32.mrb[0].mxu0
  %841 = vmatprep.mubr.f32.mxu0 0.0
  %842 = vmatmul.mubr.f32.gmra.mrb[0].mxu0 %v300
  %v843 = vpop.f32.mrb[0].mxu0
  %v844 = vadd.f32 %v156, %v843
  %v845 = vpop.f32.mrb[0].mxu0
  %846 = vmatprep.mubr.f32.mxu0 0.0
  %847 = vmatmul.mubr.f32.gmra.mrb[0].mxu0 %v303
  %v848 = vpop.f32.mrb[0].mxu0
  %v849 = vadd.f32 %v156, %v848
  %v850 = vpop.f32.mrb[0].mxu0
  %851 = vmatprep.mubr.f32.mxu0 0.0
  %852 = vmatmul.mubr.f32.gmra.mrb[0].mxu0 %v306
  %v853 = vpop.f32.mrb[0].mxu0
  %v854 = vadd.f32 %v156, %v853
  %v855 = vpop.f32.mrb[0].mxu0
  %856 = vmatprep.mubr.f32.mxu0 0.0
  %857 = vmatmul.mubr.f32.gmra.mrb[0].mxu0 %v309
  %v858 = vpop.f32.mrb[0].mxu0
  %v859 = vadd.f32 %v156, %v858
  %v860 = vpop.f32.mrb[0].mxu0
  %861 = vmatprep.mubr.f32.mxu0 0.0
  %862 = vmatmul.mubr.f32.gmra.mrb[0].mxu0 %v312
  %v863 = vpop.f32.mrb[0].mxu0
  %v864 = vadd.f32 %v156, %v863
  %v865 = vpop.f32.mrb[0].mxu0
  %866 = vmatprep.mubr.f32.mxu0 0.0
  %867 = vmatmul.mubr.f32.gmra.mrb[0].mxu0 %v315
  %v868 = vpop.f32.mrb[0].mxu0
  %v869 = vadd.f32 %v156, %v868
  %v870 = vpop.f32.mrb[0].mxu0
  %871 = vmatprep.mubr.f32.mxu0 0.0
  %872 = vmatmul.mubr.f32.gmra.mrb[0].mxu0 %v318
  %v873 = vpop.f32.mrb[0].mxu0
  %v874 = vadd.f32 %v156, %v873
  %v875 = vpop.f32.mrb[0].mxu0
  %876 = vmatprep.mubr.f32.mxu0 0.0
  %877 = vmatmul.mubr.f32.gmra.mrb[0].mxu0 %v321
  %v878 = vpop.f32.mrb[0].mxu0
  %v879 = vadd.f32 %v156, %v878
  %v880 = vpop.f32.mrb[0].mxu0
  %881 = vmatprep.mubr.f32.mxu0 0.0
  %882 = vmatmul.mubr.f32.gmra.mrb[0].mxu0 %v324
  %v883 = vpop.f32.mrb[0].mxu0
  %v884 = vadd.f32 %v156, %v883
  %v885 = vpop.f32.mrb[0].mxu0
  %886 = vmatprep.mubr.f32.mxu0 0.0
  %887 = vmatmul.mubr.f32.gmra.mrb[0].mxu0 %v327
  %v888 = vpop.f32.mrb[0].mxu0
  %v889 = vadd.f32 %v156, %v888
  %v890 = vpop.f32.mrb[0].mxu0
  %891 = vmatprep.mubr.f32.mxu0 0.0
  %892 = vmatmul.mubr.f32.gmra.mrb[0].mxu0 %v330
  %v893 = vpop.f32.mrb[0].mxu0
  %v894 = vadd.f32 %v156, %v893
  %v895 = vpop.f32.mrb[0].mxu0
  %896 = vmatprep.mubr.f32.mxu0 0.0
  %897 = vmatmul.mubr.f32.gmra.mrb[0].mxu0 %v333
  %v898 = vpop.f32.mrb[0].mxu0
  %v899 = vadd.f32 %v156, %v898
  %v900 = vpop.f32.mrb[0].mxu0
  %901 = vmatprep.mubr.f32.mxu0 0.0
  %902 = vmatmul.mubr.f32.gmra.mrb[0].mxu0 %v336
  %v903 = vpop.f32.mrb[0].mxu0
  %v904 = vadd.f32 %v156, %v903
  %v905 = vpop.f32.mrb[0].mxu0
  %906 = vmatprep.mubr.f32.mxu0 0.0
  %907 = vmatmul.mubr.f32.gmra.mrb[0].mxu0 %v339
  %v908 = vpop.f32.mrb[0].mxu0
  %v909 = vadd.f32 %v156, %v908
  %v910 = vpop.f32.mrb[0].mxu0
  %911 = vmatprep.mubr.f32.mxu0 0.0
  %912 = vmatmul.mubr.f32.gmra.mrb[0].mxu0 %v342
  %v913 = vpop.f32.mrb[0].mxu0
  %v914 = vadd.f32 %v156, %v913
  %v915 = vpop.f32.mrb[0].mxu0
  %916 = vmatprep.mubr.f32.mxu0 0.0
  %917 = vmatmul.mubr.f32.gmra.mrb[0].mxu0 %v345
  %v918 = vpop.f32.mrb[0].mxu0
  %v919 = vadd.f32 %v156, %v918
  %v920 = vpop.f32.mrb[0].mxu0
  %921 = vmatprep.mubr.f32.mxu0 0.0
  %922 = vmatmul.mubr.f32.gmra.mrb[0].mxu0 %v348
  %v923 = vpop.f32.mrb[0].mxu0
  %v924 = vadd.f32 %v156, %v923
  %v925 = vpop.f32.mrb[0].mxu0
  %926 = vmatprep.mubr.f32.mxu0 0.0
  %927 = vmatmul.mubr.f32.gmra.mrb[0].mxu0 %v351
  %v928 = vpop.f32.mrb[0].mxu0
  %v929 = vadd.f32 %v156, %v928
  %v930 = vpop.f32.mrb[0].mxu0
  %931 = vmatprep.mubr.f32.mxu0 0.0
  %932 = vmatmul.mubr.f32.gmra.mrb[0].mxu0 %v354
  %v933 = vpop.f32.mrb[0].mxu0
  %v934 = vadd.f32 %v156, %v933
  %v935 = vpop.f32.mrb[0].mxu0
  %936 = vmatprep.mubr.f32.mxu0 0.0
  %937 = vmatmul.mubr.f32.gmra.mrb[0].mxu0 %v357
  %v938 = vpop.f32.mrb[0].mxu0
  %v939 = vadd.f32 %v156, %v938
  %v940 = vpop.f32.mrb[0].mxu0
  %941 = vmatprep.mubr.f32.mxu0 0.0
  %942 = vmatmul.mubr.f32.gmra.mrb[0].mxu0 %v360
  %v943 = vpop.f32.mrb[0].mxu0
  %v944 = vadd.f32 %v156, %v943
  %v945 = vpop.f32.mrb[0].mxu0
  %946 = vmatprep.mubr.f32.mxu0 0.0
  %947 = vmatmul.mubr.f32.gmra.mrb[0].mxu0 %v363
  %v948 = vpop.f32.mrb[0].mxu0
  %v949 = vadd.f32 %v156, %v948
  %v950 = vpop.f32.mrb[0].mxu0
  %951 = vmatprep.mubr.f32.mxu0 0.0
  %952 = vmatmul.mubr.f32.gmra.mrb[0].mxu0 %v366
  %v953 = vpop.f32.mrb[0].mxu0
  %v954 = vadd.f32 %v156, %v953
  %v955 = vpop.f32.mrb[0].mxu0
  %956 = vmatprep.mubr.f32.mxu0 0.0
  %957 = vmatmul.mubr.f32.gmra.mrb[0].mxu0 %v369
  %v958 = vpop.f32.mrb[0].mxu0
  %v959 = vadd.f32 %v156, %v958
  %v960 = vpop.f32.mrb[0].mxu0
  %961 = vmatprep.mubr.f32.mxu0 0.0
  %962 = vmatmul.mubr.f32.gmra.mrb[0].mxu0 %v372
  %v963 = vpop.f32.mrb[0].mxu0
  %v964 = vadd.f32 %v156, %v963
  %v965 = vpop.f32.mrb[0].mxu0
  %966 = vmatprep.mubr.f32.mxu0 0.0
  %967 = vmatmul.mubr.f32.gmra.mrb[0].mxu0 %v375
  %v968 = vpop.f32.mrb[0].mxu0
  %v969 = vadd.f32 %v156, %v968
  %v970 = vpop.f32.mrb[0].mxu0
  %971 = vmatprep.mubr.f32.mxu0 0.0
  %972 = vmatmul.mubr.f32.gmra.mrb[0].mxu0 %v378
  %v973 = vpop.f32.mrb[0].mxu0
  %v974 = vadd.f32 %v156, %v973
  %v975 = vpop.f32.mrb[0].mxu0
  %976 = vmatprep.mubr.f32.mxu0 0.0
  %977 = vmatmul.mubr.f32.gmra.mrb[0].mxu0 %v381
  %v978 = vpop.f32.mrb[0].mxu0
  %v979 = vadd.f32 %v156, %v978
  %v980 = vpop.f32.mrb[0].mxu0
  %981 = vmatprep.mubr.f32.mxu0 0.0
  %982 = vmatmul.mubr.f32.gmra.mrb[0].mxu0 %v384
  %v983 = vpop.f32.mrb[0].mxu0
  %v984 = vadd.f32 %v156, %v983
  %v985 = vpop.f32.mrb[0].mxu0
  %986 = vmatprep.mubr.f32.mxu0 0.0
  %987 = vmatmul.mubr.f32.gmra.mrb[0].mxu0 %v387
  %v988 = vpop.f32.mrb[0].mxu0
  %v989 = vadd.f32 %v156, %v988
  %v990 = vpop.f32.mrb[0].mxu0
  %991 = vmatprep.mubr.f32.mxu0 0.0
  %992 = vmatmul.mubr.f32.gmra.mrb[0].mxu0 %v390
  %v993 = vpop.f32.mrb[0].mxu0
  %v994 = vadd.f32 %v156, %v993
  %v995 = vpop.f32.mrb[0].mxu0
  %996 = vmatprep.mubr.f32.mxu0 0.0
  %997 = vmatmul.mubr.f32.gmra.mrb[0].mxu0 %v393
  %v998 = vpop.f32.mrb[0].mxu0
  %v999 = vadd.f32 %v156, %v998
  %v1000 = vpop.f32.mrb[0].mxu0
  %1001 = vmatprep.mubr.f32.mxu0 0.0
  %1002 = vmatmul.mubr.f32.gmra.mrb[0].mxu0 %v396
  %v1003 = vpop.f32.mrb[0].mxu0
  %v1004 = vadd.f32 %v156, %v1003
  %v1005 = vpop.f32.mrb[0].mxu0
  %1006 = vmatprep.mubr.f32.mxu0 0.0
  %1007 = vmatmul.mubr.f32.gmra.mrb[0].mxu0 %v399
  %v1008 = vpop.f32.mrb[0].mxu0
  %v1009 = vadd.f32 %v156, %v1008
  %v1010 = vpop.f32.mrb[0].mxu0
  %1011 = vmatprep.mubr.f32.mxu0 0.0
  %1012 = vmatmul.mubr.f32.gmra.mrb[0].mxu0 %v402
  %v1013 = vpop.f32.mrb[0].mxu0
  %v1014 = vadd.f32 %v156, %v1013
  %v1015 = vpop.f32.mrb[0].mxu0
  %1016 = vmatprep.mubr.f32.mxu0 0.0
  %1017 = vmatmul.mubr.f32.gmra.mrb[0].mxu0 %v405
  %v1018 = vpop.f32.mrb[0].mxu0
  %v1019 = vadd.f32 %v156, %v1018
  %v1020 = vpop.f32.mrb[0].mxu0
  %1021 = vmatprep.mubr.f32.mxu0 0.0
  %1022 = vmatmul.mubr.f32.gmra.mrb[0].mxu0 %v408
  %v1023 = vpop.f32.mrb[0].mxu0
  %v1024 = vadd.f32 %v156, %v1023
  %v1025 = vpop.f32.mrb[0].mxu0
  %1026 = vmatprep.mubr.f32.mxu0 0.0
  %1027 = vmatmul.mubr.f32.gmra.mrb[0].mxu0 %v411
  %v1028 = vpop.f32.mrb[0].mxu0
  %v1029 = vadd.f32 %v156, %v1028
  %v1030 = vpop.f32.mrb[0].mxu0
  %1031 = vmatprep.mubr.f32.mxu0 0.0
  %1032 = vmatmul.mubr.f32.gmra.mrb[0].mxu0 %v414
  %v1033 = vpop.f32.mrb[0].mxu0
  %v1034 = vadd.f32 %v156, %v1033
  %v1035 = vpop.f32.mrb[0].mxu0
  %1036 = vmatprep.mubr.f32.mxu0 0.0
  %1037 = vmatmul.mubr.f32.gmra.mrb[0].mxu0 %v417
  %v1038 = vpop.f32.mrb[0].mxu0
  %v1039 = vadd.f32 %v156, %v1038
  %v1040 = vpop.f32.mrb[0].mxu0
  %1041 = vmatprep.mubr.f32.mxu0 0.0
  %1042 = vmatmul.mubr.f32.gmra.mrb[0].mxu0 %v420
  %v1043 = vpop.f32.mrb[0].mxu0
  %v1044 = vadd.f32 %v156, %v1043
  %v1045 = vpop.f32.mrb[0].mxu0
  %1046 = vmatprep.mubr.f32.mxu0 0.0
  %1047 = vmatmul.mubr.f32.gmra.mrb[0].mxu0 %v423
  %v1048 = vpop.f32.mrb[0].mxu0
  %v1049 = vadd.f32 %v156, %v1048
  %v1050 = vpop.f32.mrb[0].mxu0
  %1051 = vmatprep.mubr.f32.mxu0 0.0
  %1052 = vmatmul.mubr.f32.gmra.mrb[0].mxu0 %v426
  %v1053 = vpop.f32.mrb[0].mxu0
  %v1054 = vadd.f32 %v156, %v1053
  %v1055 = vpop.f32.mrb[0].mxu0
  %1056 = vmatprep.mubr.f32.mxu0 0.0
  %1057 = vmatmul.mubr.f32.gmra.mrb[0].mxu0 %v429
  %v1058 = vpop.f32.mrb[0].mxu0
  %v1059 = vadd.f32 %v156, %v1058
  %v1060 = vpop.f32.mrb[0].mxu0
  %1061 = vmatprep.mubr.f32.mxu0 0.0
  %1062 = vmatmul.mubr.f32.gmra.mrb[0].mxu0 %v432
  %v1063 = vpop.f32.mrb[0].mxu0
  %v1064 = vadd.f32 %v156, %v1063
  %v1065 = vpop.f32.mrb[0].mxu0
  %1066 = vmatprep.mubr.f32.mxu0 0.0
  %1067 = vmatmul.mubr.f32.gmra.mrb[0].mxu0 %v435
  %v1068 = vpop.f32.mrb[0].mxu0
  %v1069 = vadd.f32 %v156, %v1068
  %v1070 = vpop.f32.mrb[0].mxu0
  %1071 = vmatprep.mubr.f32.mxu0 0.0
  %1072 = vmatmul.mubr.f32.gmra.mrb[0].mxu0 %v438
  %v1073 = vpop.f32.mrb[0].mxu0
  %v1074 = vadd.f32 %v156, %v1073
  %v1075 = vpop.f32.mrb[0].mxu0
  %1076 = vmatprep.mubr.f32.mxu0 0.0
  %1077 = vmatmul.mubr.f32.gmra.mrb[0].mxu0 %v441
  %v1078 = vpop.f32.mrb[0].mxu0
  %v1079 = vadd.f32 %v156, %v1078
  %v1080 = vpop.f32.mrb[0].mxu0
  %1081 = vmatprep.mubr.f32.mxu0 0.0
  %1082 = vmatmul.mubr.f32.gmra.mrb[0].mxu0 %v444
  %v1083 = vpop.f32.mrb[0].mxu0
  %v1084 = vadd.f32 %v156, %v1083
  %v1085 = vpop.f32.mrb[0].mxu0
  %1086 = vmatprep.mubr.f32.mxu0 0.0
  %1087 = vmatmul.mubr.f32.gmra.mrb[0].mxu0 %v447
  %v1088 = vpop.f32.mrb[0].mxu0
  %v1089 = vadd.f32 %v156, %v1088
  %v1090 = vpop.f32.mrb[0].mxu0
  %1091 = vmatprep.mubr.f32.mxu0 0.0
  %1092 = vmatmul.mubr.f32.gmra.mrb[0].mxu0 %v450
  %v1093 = vpop.f32.mrb[0].mxu0
  %v1094 = vadd.f32 %v156, %v1093
  %v1095 = vpop.f32.mrb[0].mxu0
  %1096 = vmatprep.mubr.f32.mxu0 0.0
  %1097 = vmatmul.mubr.f32.gmra.mrb[0].mxu0 %v453
  %v1098 = vpop.f32.mrb[0].mxu0
  %v1099 = vadd.f32 %v156, %v1098
  %v1100 = vpop.f32.mrb[0].mxu0
  %1101 = vmatprep.mubr.f32.mxu0 0.0
  %1102 = vmatmul.mubr.f32.gmra.mrb[0].mxu0 %v456
  %v1103 = vpop.f32.mrb[0].mxu0
  %v1104 = vadd.f32 %v156, %v1103
  %v1105 = vpop.f32.mrb[0].mxu0
  %1106 = vmatprep.mubr.f32.mxu0 0.0
  %1107 = vmatmul.mubr.f32.gmra.mrb[0].mxu0 %v459
  %v1108 = vpop.f32.mrb[0].mxu0
  %v1109 = vadd.f32 %v156, %v1108
  %v1110 = vpop.f32.mrb[0].mxu0
  %1111 = vmatprep.mubr.f32.mxu0 0.0
  %1112 = vmatmul.mubr.f32.gmra.mrb[0].mxu0 %v462
  %v1113 = vpop.f32.mrb[0].mxu0
  %v1114 = vadd.f32 %v156, %v1113
  %v1115 = vpop.f32.mrb[0].mxu0
  %1116 = vmatprep.mubr.f32.mxu0 0.0
  %1117 = vmatmul.mubr.f32.gmra.mrb[0].mxu0 %v465
  %v1118 = vpop.f32.mrb[0].mxu0
  %v1119 = vadd.f32 %v156, %v1118
  %v1120 = vpop.f32.mrb[0].mxu0
  %1121 = vmatprep.mubr.f32.mxu0 0.0
  %1122 = vmatmul.mubr.f32.gmra.mrb[0].mxu0 %v468
  %v1123 = vpop.f32.mrb[0].mxu0
  %v1124 = vadd.f32 %v156, %v1123
  %v1125 = vpop.f32.mrb[0].mxu0
  %1126 = vmatprep.mubr.f32.mxu0 0.0
  %1127 = vmatmul.mubr.f32.gmra.mrb[0].mxu0 %v471
  %v1128 = vpop.f32.mrb[0].mxu0
  %v1129 = vadd.f32 %v156, %v1128
  %v1130 = vpop.f32.mrb[0].mxu0
  %1131 = vmatprep.mubr.f32.mxu0 0.0
  %1132 = vmatmul.mubr.f32.gmra.mrb[0].mxu0 %v474
  %v1133 = vpop.f32.mrb[0].mxu0
  %v1134 = vadd.f32 %v156, %v1133
  %v1135 = vpop.f32.mrb[0].mxu0
  %1136 = vmatprep.mubr.f32.mxu0 0.0
  %1137 = vmatmul.mubr.f32.gmra.mrb[0].mxu0 %v477
  %v1138 = vpop.f32.mrb[0].mxu0
  %v1139 = vadd.f32 %v156, %v1138
  %v1140 = vpop.f32.mrb[0].mxu0
  %1141 = vmatprep.mubr.f32.mxu0 0.0
  %1142 = vmatmul.mubr.f32.gmra.mrb[0].mxu0 %v480
  %v1143 = vpop.f32.mrb[0].mxu0
  %v1144 = vadd.f32 %v156, %v1143
  %v1145 = vpop.f32.mrb[0].mxu0
  %1146 = vmatprep.mubr.f32.mxu0 0.0
  %1147 = vmatmul.mubr.f32.gmra.mrb[0].mxu0 %v483
  %v1148 = vpop.f32.mrb[0].mxu0
  %v1149 = vadd.f32 %v156, %v1148
  %v1150 = vpop.f32.mrb[0].mxu0
  %1151 = vmatprep.mubr.f32.mxu0 0.0
  %1152 = vmatmul.mubr.f32.gmra.mrb[0].mxu0 %v486
  %v1153 = vpop.f32.mrb[0].mxu0
  %v1154 = vadd.f32 %v156, %v1153
  %v1155 = vpop.f32.mrb[0].mxu0
  %1156 = vmatprep.mubr.f32.mxu0 0.0
  %1157 = vmatmul.mubr.f32.gmra.mrb[0].mxu0 %v489
  %v1158 = vpop.f32.mrb[0].mxu0
  %v1159 = vadd.f32 %v156, %v1158
  %v1160 = vpop.f32.mrb[0].mxu0
  %1161 = vmatprep.mubr.f32.mxu0 0.0
  %1162 = vmatmul.mubr.f32.gmra.mrb[0].mxu0 %v492
  %v1163 = vpop.f32.mrb[0].mxu0
  %v1164 = vadd.f32 %v156, %v1163
  %v1165 = vpop.f32.mrb[0].mxu0
  %1166 = vmatprep.mubr.f32.mxu0 0.0
  %1167 = vmatmul.mubr.f32.gmra.mrb[0].mxu0 %v495
  %v1168 = vpop.f32.mrb[0].mxu0
  %v1169 = vadd.f32 %v156, %v1168
  %v1170 = vpop.f32.mrb[0].mxu0
  %1171 = vmatprep.mubr.f32.mxu0 0.0
  %1172 = vmatmul.mubr.f32.gmra.mrb[0].mxu0 %v498
  %v1173 = vpop.f32.mrb[0].mxu0
  %v1174 = vadd.f32 %v156, %v1173
  %v1175 = vpop.f32.mrb[0].mxu0
  %1176 = vmatprep.mubr.f32.mxu0 0.0
  %1177 = vmatmul.mubr.f32.gmra.mrb[0].mxu0 %v501
  %v1178 = vpop.f32.mrb[0].mxu0
  %v1179 = vadd.f32 %v156, %v1178
  %v1180 = vpop.f32.mrb[0].mxu0
  %1181 = vmatprep.mubr.f32.mxu0 0.0
  %1182 = vmatmul.mubr.f32.gmra.mrb[0].mxu0 %v504
  %v1183 = vpop.f32.mrb[0].mxu0
  %v1184 = vadd.f32 %v156, %v1183
  %v1185 = vpop.f32.mrb[0].mxu0
  %1186 = vmatprep.mubr.f32.mxu0 0.0
  %1187 = vmatmul.mubr.f32.gmra.mrb[0].mxu0 %v507
  %v1188 = vpop.f32.mrb[0].mxu0
  %v1189 = vadd.f32 %v156, %v1188
  %v1190 = vpop.f32.mrb[0].mxu0
  %1191 = vmatprep.mubr.f32.mxu0 0.0
  %1192 = vmatmul.mubr.f32.gmra.mrb[0].mxu0 %v510
  %v1193 = vpop.f32.mrb[0].mxu0
  %v1194 = vadd.f32 %v156, %v1193
  %v1195 = vpop.f32.mrb[0].mxu0
  %1196 = vmatprep.mubr.f32.mxu0 0.0
  %1197 = vmatmul.mubr.f32.gmra.mrb[0].mxu0 %v513
  %v1198 = vpop.f32.mrb[0].mxu0
  %v1199 = vadd.f32 %v156, %v1198
  %v1200 = vpop.f32.mrb[0].mxu0
  %1201 = vmatprep.mubr.f32.mxu0 0.0
  %1202 = vmatmul.mubr.f32.gmra.mrb[0].mxu0 %v516
  %v1203 = vpop.f32.mrb[0].mxu0
  %v1204 = vadd.f32 %v156, %v1203
  %v1205 = vpop.f32.mrb[0].mxu0
  %1206 = vmatprep.mubr.f32.mxu0 0.0
  %1207 = vmatmul.mubr.f32.gmra.mrb[0].mxu0 %v519
  %v1208 = vpop.f32.mrb[0].mxu0
  %v1209 = vadd.f32 %v156, %v1208
  %v1210 = vpop.f32.mrb[0].mxu0
  %1211 = vmatprep.mubr.f32.mxu0 0.0
  %1212 = vmatmul.mubr.f32.gmra.mrb[0].mxu0 %v522
  %v1213 = vpop.f32.mrb[0].mxu0
  %v1214 = vadd.f32 %v156, %v1213
  %v1215 = vpop.f32.mrb[0].mxu0
  %1216 = vmatprep.mubr.f32.mxu0 0.0
  %1217 = vmatmul.mubr.f32.gmra.mrb[0].mxu0 %v525
  %v1218 = vpop.f32.mrb[0].mxu0
  %v1219 = vadd.f32 %v156, %v1218
  %v1220 = vpop.f32.mrb[0].mxu0
  %1221 = vmatprep.mubr.f32.mxu0 0.0
  %1222 = vmatmul.mubr.f32.gmra.mrb[0].mxu0 %v528
  %v1223 = vpop.f32.mrb[0].mxu0
  %v1224 = vadd.f32 %v156, %v1223
  %v1225 = vpop.f32.mrb[0].mxu0
  %1226 = vmatprep.mubr.f32.mxu0 0.0
  %1227 = vmatmul.mubr.f32.gmra.mrb[0].mxu0 %v531
  %v1228 = vpop.f32.mrb[0].mxu0
  %v1229 = vadd.f32 %v156, %v1228
  %v1230 = vpop.f32.mrb[0].mxu0
  %1231 = vmatprep.mubr.f32.mxu0 0.0
  %1232 = vmatmul.mubr.f32.gmra.mrb[0].mxu0 %v534
  %v1233 = vpop.f32.mrb[0].mxu0
  %v1234 = vadd.f32 %v156, %v1233
  %v1235 = vpop.f32.mrb[0].mxu0
  %1236 = vmatprep.mubr.f32.mxu0 0.0
  %1237 = vmatmul.mubr.f32.gmra.mrb[0].mxu0 %v537
  %v1238 = vpop.f32.mrb[0].mxu0
  %v1239 = vadd.f32 %v156, %v1238
  %v1240 = vpop.f32.mrb[0].mxu0
  %1241 = vmatprep.mubr.f32.mxu0 0.0
  %1242 = vmatmul.mubr.f32.gmra.mrb[0].mxu0 %v540
  %v1243 = vpop.f32.mrb[0].mxu0
  %v1244 = vadd.f32 %v156, %v1243
  %v1245 = vpop.f32.mrb[0].mxu0
  %1246 = vdwg.mxu0
  %v1247 = vld [vmem:[%s2] sm:$0xff]
  %v1248 = vld [vmem:[%s2 + $0x8] sm:$0xff]
  %v1249 = vld [vmem:[%s2 + $0x10] sm:$0xff]
  %v1250 = vld [vmem:[%s2 + $0x18] sm:$0xff]
  %v1251 = vld [vmem:[%s2 + $0x20] sm:$0xff]
  %v1252 = vld [vmem:[%s2 + $0x28] sm:$0xff]
  %v1253 = vld [vmem:[%s2 + $0x30] sm:$0xff]
  %v1254 = vld [vmem:[%s2 + $0x38] sm:$0xff]
  %v1255 = vld [vmem:[%s4 + $0x1] sm:$0x1]
  %v1256 = vlaneseq
  %v1257 = vshrl.u32 %v1256, 7
  %v1258 = vsub.s32 0, %v1257
  %v1259 = vrot.slane %v1255, %v1258
  %vm1260 = vcmask 523264
  %v1262 = vsel %vm1260, %v609, 0
  %v1265 = vsel %vm1260, %v614, 0
  %v1268 = vsel %vm1260, %v619, 0
  %v1271 = vsel %vm1260, %v624, 0
  %v1274 = vsel %vm1260, %v629, 0
  %v1277 = vsel %vm1260, %v634, 0
  %v1280 = vsel %vm1260, %v639, 0
  %v1283 = vsel %vm1260, %v644, 0
  %v1286 = vsel %vm1260, %v649, 0
  %v1289 = vsel %vm1260, %v654, 0
  %v1292 = vsel %vm1260, %v659, 0
  %v1295 = vsel %vm1260, %v664, 0
  %v1298 = vsel %vm1260, %v669, 0
  %v1301 = vsel %vm1260, %v674, 0
  %v1304 = vsel %vm1260, %v679, 0
  %v1307 = vsel %vm1260, %v684, 0
  %v1310 = vsel %vm1260, %v689, 0
  %v1313 = vsel %vm1260, %v694, 0
  %v1316 = vsel %vm1260, %v699, 0
  %v1319 = vsel %vm1260, %v704, 0
  %v1322 = vsel %vm1260, %v709, 0
  %v1325 = vsel %vm1260, %v714, 0
  %v1328 = vsel %vm1260, %v719, 0
  %v1331 = vsel %vm1260, %v724, 0
  %v1334 = vsel %vm1260, %v729, 0
  %v1337 = vsel %vm1260, %v734, 0
  %v1340 = vsel %vm1260, %v739, 0
  %v1343 = vsel %vm1260, %v744, 0
  %v1346 = vsel %vm1260, %v749, 0
  %v1349 = vsel %vm1260, %v754, 0
  %v1352 = vsel %vm1260, %v759, 0
  %v1355 = vsel %vm1260, %v764, 0
  %v1358 = vsel %vm1260, %v769, 0
  %v1361 = vsel %vm1260, %v774, 0
  %v1364 = vsel %vm1260, %v779, 0
  %v1367 = vsel %vm1260, %v784, 0
  %v1370 = vsel %vm1260, %v789, 0
  %v1373 = vsel %vm1260, %v794, 0
  %v1376 = vsel %vm1260, %v799, 0
  %v1379 = vsel %vm1260, %v804, 0
  %v1382 = vsel %vm1260, %v809, 0
  %v1385 = vsel %vm1260, %v814, 0
  %v1388 = vsel %vm1260, %v819, 0
  %v1391 = vsel %vm1260, %v824, 0
  %v1394 = vsel %vm1260, %v829, 0
  %v1397 = vsel %vm1260, %v834, 0
  %v1400 = vsel %vm1260, %v839, 0
  %v1403 = vsel %vm1260, %v844, 0
  %v1406 = vsel %vm1260, %v849, 0
  %v1409 = vsel %vm1260, %v854, 0
  %v1412 = vsel %vm1260, %v859, 0
  %v1415 = vsel %vm1260, %v864, 0
  %v1418 = vsel %vm1260, %v869, 0
  %v1421 = vsel %vm1260, %v874, 0
  %v1424 = vsel %vm1260, %v879, 0
  %v1427 = vsel %vm1260, %v884, 0
  %v1430 = vsel %vm1260, %v889, 0
  %v1433 = vsel %vm1260, %v894, 0
  %v1436 = vsel %vm1260, %v899, 0
  %v1439 = vsel %vm1260, %v904, 0
  %v1442 = vsel %vm1260, %v909, 0
  %v1445 = vsel %vm1260, %v914, 0
  %v1448 = vsel %vm1260, %v919, 0
  %v1451 = vsel %vm1260, %v924, 0
  %v1454 = vsel %vm1260, %v929, 0
  %v1457 = vsel %vm1260, %v934, 0
  %v1460 = vsel %vm1260, %v939, 0
  %v1463 = vsel %vm1260, %v944, 0
  %v1466 = vsel %vm1260, %v949, 0
  %v1469 = vsel %vm1260, %v954, 0
  %v1472 = vsel %vm1260, %v959, 0
  %v1475 = vsel %vm1260, %v964, 0
  %v1478 = vsel %vm1260, %v969, 0
  %v1481 = vsel %vm1260, %v974, 0
  %v1484 = vsel %vm1260, %v979, 0
  %v1487 = vsel %vm1260, %v984, 0
  %v1490 = vsel %vm1260, %v989, 0
  %v1493 = vsel %vm1260, %v994, 0
  %v1496 = vsel %vm1260, %v999, 0
  %v1499 = vsel %vm1260, %v1004, 0
  %v1502 = vsel %vm1260, %v1009, 0
  %v1505 = vsel %vm1260, %v1014, 0
  %v1508 = vsel %vm1260, %v1019, 0
  %v1511 = vsel %vm1260, %v1024, 0
  %v1514 = vsel %vm1260, %v1029, 0
  %v1517 = vsel %vm1260, %v1034, 0
  %v1520 = vsel %vm1260, %v1039, 0
  %v1523 = vsel %vm1260, %v1044, 0
  %v1526 = vsel %vm1260, %v1049, 0
  %v1529 = vsel %vm1260, %v1054, 0
  %v1532 = vsel %vm1260, %v1059, 0
  %v1535 = vsel %vm1260, %v1064, 0
  %v1538 = vsel %vm1260, %v1069, 0
  %v1541 = vsel %vm1260, %v1074, 0
  %v1544 = vsel %vm1260, %v1079, 0
  %v1547 = vsel %vm1260, %v1084, 0
  %v1550 = vsel %vm1260, %v1089, 0
  %v1553 = vsel %vm1260, %v1094, 0
  %v1556 = vsel %vm1260, %v1099, 0
  %v1559 = vsel %vm1260, %v1104, 0
  %v1562 = vsel %vm1260, %v1109, 0
  %v1565 = vsel %vm1260, %v1114, 0
  %v1568 = vsel %vm1260, %v1119, 0
  %v1571 = vsel %vm1260, %v1124, 0
  %v1574 = vsel %vm1260, %v1129, 0
  %v1577 = vsel %vm1260, %v1134, 0
  %v1580 = vsel %vm1260, %v1139, 0
  %v1583 = vsel %vm1260, %v1144, 0
  %v1586 = vsel %vm1260, %v1149, 0
  %v1589 = vsel %vm1260, %v1154, 0
  %v1592 = vsel %vm1260, %v1159, 0
  %v1595 = vsel %vm1260, %v1164, 0
  %v1598 = vsel %vm1260, %v1169, 0
  %v1601 = vsel %vm1260, %v1174, 0
  %v1604 = vsel %vm1260, %v1179, 0
  %v1607 = vsel %vm1260, %v1184, 0
  %v1610 = vsel %vm1260, %v1189, 0
  %v1613 = vsel %vm1260, %v1194, 0
  %v1616 = vsel %vm1260, %v1199, 0
  %v1619 = vsel %vm1260, %v1204, 0
  %v1622 = vsel %vm1260, %v1209, 0
  %v1625 = vsel %vm1260, %v1214, 0
  %v1628 = vsel %vm1260, %v1219, 0
  %v1631 = vsel %vm1260, %v1224, 0
  %v1634 = vsel %vm1260, %v1229, 0
  %v1637 = vsel %vm1260, %v1234, 0
  %v1640 = vsel %vm1260, %v1239, 0
  %v1643 = vsel %vm1260, %v1244, 0
  %1645 = vmatprep.subr.mxu0 0.0
  %1646 = vmatpush1.msra.mxu0 %v1247
  %1647 = vmatprep.subr.mxu0 0.0
  %1648 = vmatpush1.msra.mxu0 %v1248
  %1649 = vmatprep.subr.mxu0 0.0
  %1650 = vmatpush1.msra.mxu0 %v1249
  %1651 = vmatprep.subr.mxu0 0.0
  %1652 = vmatpush1.msra.mxu0 %v1250
  %1653 = vmatprep.subr.mxu0 0.0
  %1654 = vmatpush1.msra.mxu0 %v1251
  %1655 = vmatprep.subr.mxu0 0.0
  %1656 = vmatpush1.msra.mxu0 %v1252
  %1657 = vmatprep.subr.mxu0 0.0
  %1658 = vmatpush1.msra.mxu0 %v1253
  %1659 = vmatprep.subr.mxu0 0.0
  %1660 = vmatpush1.msra.mxu0 %v1254
  %1661 = vmatprep.subr.mxu0 0.0
  %1662 = vmatpush1.msra.mxu0 0.0
  %1663 = vmatprep.subr.mxu0 0.0
  %1664 = vmatpush1.msra.mxu0 0.0
  %1665 = vmatprep.subr.mxu0 0.0
  %1666 = vmatpush1.msra.mxu0 0.0
  %1667 = vmatprep.subr.mxu0 0.0
  %1668 = vmatpush1.msra.mxu0 0.0
  %1669 = vmatprep.subr.mxu0 0.0
  %1670 = vmatpush1.msra.mxu0 0.0
  %1671 = vmatprep.subr.mxu0 0.0
  %1672 = vmatpush1.msra.mxu0 0.0
  %1673 = vmatprep.subr.mxu0 0.0
  %1674 = vmatpush1.msra.mxu0 0.0
  %1675 = vmatprep.subr.mxu0 0.0
  %1676 = vmatpush1.msra.mxu0 0.0
  %1677 = vmatprep.subr.mxu0 0.0
  %1678 = vmatpush1.msra.mxu0 0.0
  %1679 = vmatprep.subr.mxu0 0.0
  %1680 = vmatpush1.msra.mxu0 0.0
  %1681 = vmatprep.subr.mxu0 0.0
  %1682 = vmatpush1.msra.mxu0 0.0
  %1683 = vmatprep.subr.mxu0 0.0
  %1684 = vmatpush1.msra.mxu0 0.0
  %1685 = vmatprep.subr.mxu0 0.0
  %1686 = vmatpush1.msra.mxu0 0.0
  %1687 = vmatprep.subr.mxu0 0.0
  %1688 = vmatpush1.msra.mxu0 0.0
  %1689 = vmatprep.subr.mxu0 0.0
  %1690 = vmatpush1.msra.mxu0 0.0
  %1691 = vmatprep.subr.mxu0 0.0
  %1692 = vmatpush1.msra.mxu0 0.0
  %1693 = vmatprep.subr.mxu0 0.0
  %1694 = vmatpush1.msra.mxu0 0.0
  %1695 = vmatprep.subr.mxu0 0.0
  %1696 = vmatpush1.msra.mxu0 0.0
  %1697 = vmatprep.subr.mxu0 0.0
  %1698 = vmatpush1.msra.mxu0 0.0
  %1699 = vmatprep.subr.mxu0 0.0
  %1700 = vmatpush1.msra.mxu0 0.0
  %1701 = vmatprep.subr.mxu0 0.0
  %1702 = vmatpush1.msra.mxu0 0.0
  %1703 = vmatprep.subr.mxu0 0.0
  %1704 = vmatpush1.msra.mxu0 0.0
  %1705 = vmatprep.subr.mxu0 0.0
  %1706 = vmatpush1.msra.mxu0 0.0
  %1707 = vmatprep.subr.mxu0 0.0
  %1708 = vmatpush1.msra.mxu0 0.0
  %1709 = vmatprep.mubr.f32.mxu0 0.0
  %1710 = vmatmul.mubr.f32.gmra.mrb[0].mxu0 %v1262
  %v1711 = vpop.f32.mrb[0].mxu0
  %v1712 = vadd.f32 %v1259, %v1711
  %v1713 = vpop.f32.mrb[0].mxu0
  %1714 = vmatprep.mubr.f32.mxu0 0.0
  %1715 = vmatmul.mubr.f32.gmra.mrb[0].mxu0 %v1265
  %v1716 = vpop.f32.mrb[0].mxu0
  %v1717 = vadd.f32 %v1259, %v1716
  %v1718 = vpop.f32.mrb[0].mxu0
  %1719 = vmatprep.mubr.f32.mxu0 0.0
  %1720 = vmatmul.mubr.f32.gmra.mrb[0].mxu0 %v1268
  %v1721 = vpop.f32.mrb[0].mxu0
  %v1722 = vadd.f32 %v1259, %v1721
  %v1723 = vpop.f32.mrb[0].mxu0
  %1724 = vmatprep.mubr.f32.mxu0 0.0
  %1725 = vmatmul.mubr.f32.gmra.mrb[0].mxu0 %v1271
  %v1726 = vpop.f32.mrb[0].mxu0
  %v1727 = vadd.f32 %v1259, %v1726
  %v1728 = vpop.f32.mrb[0].mxu0
  %1729 = vmatprep.mubr.f32.mxu0 0.0
  %1730 = vmatmul.mubr.f32.gmra.mrb[0].mxu0 %v1274
  %v1731 = vpop.f32.mrb[0].mxu0
  %v1732 = vadd.f32 %v1259, %v1731
  %v1733 = vpop.f32.mrb[0].mxu0
  %1734 = vmatprep.mubr.f32.mxu0 0.0
  %1735 = vmatmul.mubr.f32.gmra.mrb[0].mxu0 %v1277
  %v1736 = vpop.f32.mrb[0].mxu0
  %v1737 = vadd.f32 %v1259, %v1736
  %v1738 = vpop.f32.mrb[0].mxu0
  %1739 = vmatprep.mubr.f32.mxu0 0.0
  %1740 = vmatmul.mubr.f32.gmra.mrb[0].mxu0 %v1280
  %v1741 = vpop.f32.mrb[0].mxu0
  %v1742 = vadd.f32 %v1259, %v1741
  %v1743 = vpop.f32.mrb[0].mxu0
  %1744 = vmatprep.mubr.f32.mxu0 0.0
  %1745 = vmatmul.mubr.f32.gmra.mrb[0].mxu0 %v1283
  %v1746 = vpop.f32.mrb[0].mxu0
  %v1747 = vadd.f32 %v1259, %v1746
  %v1748 = vpop.f32.mrb[0].mxu0
  %1749 = vmatprep.mubr.f32.mxu0 0.0
  %1750 = vmatmul.mubr.f32.gmra.mrb[0].mxu0 %v1286
  %v1751 = vpop.f32.mrb[0].mxu0
  %v1752 = vadd.f32 %v1259, %v1751
  %v1753 = vpop.f32.mrb[0].mxu0
  %1754 = vmatprep.mubr.f32.mxu0 0.0
  %1755 = vmatmul.mubr.f32.gmra.mrb[0].mxu0 %v1289
  %v1756 = vpop.f32.mrb[0].mxu0
  %v1757 = vadd.f32 %v1259, %v1756
  %v1758 = vpop.f32.mrb[0].mxu0
  %1759 = vmatprep.mubr.f32.mxu0 0.0
  %1760 = vmatmul.mubr.f32.gmra.mrb[0].mxu0 %v1292
  %v1761 = vpop.f32.mrb[0].mxu0
  %v1762 = vadd.f32 %v1259, %v1761
  %v1763 = vpop.f32.mrb[0].mxu0
  %1764 = vmatprep.mubr.f32.mxu0 0.0
  %1765 = vmatmul.mubr.f32.gmra.mrb[0].mxu0 %v1295
  %v1766 = vpop.f32.mrb[0].mxu0
  %v1767 = vadd.f32 %v1259, %v1766
  %v1768 = vpop.f32.mrb[0].mxu0
  %1769 = vmatprep.mubr.f32.mxu0 0.0
  %1770 = vmatmul.mubr.f32.gmra.mrb[0].mxu0 %v1298
  %v1771 = vpop.f32.mrb[0].mxu0
  %v1772 = vadd.f32 %v1259, %v1771
  %v1773 = vpop.f32.mrb[0].mxu0
  %1774 = vmatprep.mubr.f32.mxu0 0.0
  %1775 = vmatmul.mubr.f32.gmra.mrb[0].mxu0 %v1301
  %v1776 = vpop.f32.mrb[0].mxu0
  %v1777 = vadd.f32 %v1259, %v1776
  %v1778 = vpop.f32.mrb[0].mxu0
  %1779 = vmatprep.mubr.f32.mxu0 0.0
  %1780 = vmatmul.mubr.f32.gmra.mrb[0].mxu0 %v1304
  %v1781 = vpop.f32.mrb[0].mxu0
  %v1782 = vadd.f32 %v1259, %v1781
  %v1783 = vpop.f32.mrb[0].mxu0
  %1784 = vmatprep.mubr.f32.mxu0 0.0
  %1785 = vmatmul.mubr.f32.gmra.mrb[0].mxu0 %v1307
  %v1786 = vpop.f32.mrb[0].mxu0
  %v1787 = vadd.f32 %v1259, %v1786
  %v1788 = vpop.f32.mrb[0].mxu0
  %1789 = vmatprep.mubr.f32.mxu0 0.0
  %1790 = vmatmul.mubr.f32.gmra.mrb[0].mxu0 %v1310
  %v1791 = vpop.f32.mrb[0].mxu0
  %v1792 = vadd.f32 %v1259, %v1791
  %v1793 = vpop.f32.mrb[0].mxu0
  %1794 = vmatprep.mubr.f32.mxu0 0.0
  %1795 = vmatmul.mubr.f32.gmra.mrb[0].mxu0 %v1313
  %v1796 = vpop.f32.mrb[0].mxu0
  %v1797 = vadd.f32 %v1259, %v1796
  %v1798 = vpop.f32.mrb[0].mxu0
  %1799 = vmatprep.mubr.f32.mxu0 0.0
  %1800 = vmatmul.mubr.f32.gmra.mrb[0].mxu0 %v1316
  %v1801 = vpop.f32.mrb[0].mxu0
  %v1802 = vadd.f32 %v1259, %v1801
  %v1803 = vpop.f32.mrb[0].mxu0
  %1804 = vmatprep.mubr.f32.mxu0 0.0
  %1805 = vmatmul.mubr.f32.gmra.mrb[0].mxu0 %v1319
  %v1806 = vpop.f32.mrb[0].mxu0
  %v1807 = vadd.f32 %v1259, %v1806
  %v1808 = vpop.f32.mrb[0].mxu0
  %1809 = vmatprep.mubr.f32.mxu0 0.0
  %1810 = vmatmul.mubr.f32.gmra.mrb[0].mxu0 %v1322
  %v1811 = vpop.f32.mrb[0].mxu0
  %v1812 = vadd.f32 %v1259, %v1811
  %v1813 = vpop.f32.mrb[0].mxu0
  %1814 = vmatprep.mubr.f32.mxu0 0.0
  %1815 = vmatmul.mubr.f32.gmra.mrb[0].mxu0 %v1325
  %v1816 = vpop.f32.mrb[0].mxu0
  %v1817 = vadd.f32 %v1259, %v1816
  %v1818 = vpop.f32.mrb[0].mxu0
  %1819 = vmatprep.mubr.f32.mxu0 0.0
  %1820 = vmatmul.mubr.f32.gmra.mrb[0].mxu0 %v1328
  %v1821 = vpop.f32.mrb[0].mxu0
  %v1822 = vadd.f32 %v1259, %v1821
  %v1823 = vpop.f32.mrb[0].mxu0
  %1824 = vmatprep.mubr.f32.mxu0 0.0
  %1825 = vmatmul.mubr.f32.gmra.mrb[0].mxu0 %v1331
  %v1826 = vpop.f32.mrb[0].mxu0
  %v1827 = vadd.f32 %v1259, %v1826
  %v1828 = vpop.f32.mrb[0].mxu0
  %1829 = vmatprep.mubr.f32.mxu0 0.0
  %1830 = vmatmul.mubr.f32.gmra.mrb[0].mxu0 %v1334
  %v1831 = vpop.f32.mrb[0].mxu0
  %v1832 = vadd.f32 %v1259, %v1831
  %v1833 = vpop.f32.mrb[0].mxu0
  %1834 = vmatprep.mubr.f32.mxu0 0.0
  %1835 = vmatmul.mubr.f32.gmra.mrb[0].mxu0 %v1337
  %v1836 = vpop.f32.mrb[0].mxu0
  %v1837 = vadd.f32 %v1259, %v1836
  %v1838 = vpop.f32.mrb[0].mxu0
  %1839 = vmatprep.mubr.f32.mxu0 0.0
  %1840 = vmatmul.mubr.f32.gmra.mrb[0].mxu0 %v1340
  %v1841 = vpop.f32.mrb[0].mxu0
  %v1842 = vadd.f32 %v1259, %v1841
  %v1843 = vpop.f32.mrb[0].mxu0
  %1844 = vmatprep.mubr.f32.mxu0 0.0
  %1845 = vmatmul.mubr.f32.gmra.mrb[0].mxu0 %v1343
  %v1846 = vpop.f32.mrb[0].mxu0
  %v1847 = vadd.f32 %v1259, %v1846
  %v1848 = vpop.f32.mrb[0].mxu0
  %1849 = vmatprep.mubr.f32.mxu0 0.0
  %1850 = vmatmul.mubr.f32.gmra.mrb[0].mxu0 %v1346
  %v1851 = vpop.f32.mrb[0].mxu0
  %v1852 = vadd.f32 %v1259, %v1851
  %v1853 = vpop.f32.mrb[0].mxu0
  %1854 = vmatprep.mubr.f32.mxu0 0.0
  %1855 = vmatmul.mubr.f32.gmra.mrb[0].mxu0 %v1349
  %v1856 = vpop.f32.mrb[0].mxu0
  %v1857 = vadd.f32 %v1259, %v1856
  %v1858 = vpop.f32.mrb[0].mxu0
  %1859 = vmatprep.mubr.f32.mxu0 0.0
  %1860 = vmatmul.mubr.f32.gmra.mrb[0].mxu0 %v1352
  %v1861 = vpop.f32.mrb[0].mxu0
  %v1862 = vadd.f32 %v1259, %v1861
  %v1863 = vpop.f32.mrb[0].mxu0
  %1864 = vmatprep.mubr.f32.mxu0 0.0
  %1865 = vmatmul.mubr.f32.gmra.mrb[0].mxu0 %v1355
  %v1866 = vpop.f32.mrb[0].mxu0
  %v1867 = vadd.f32 %v1259, %v1866
  %v1868 = vpop.f32.mrb[0].mxu0
  %1869 = vmatprep.mubr.f32.mxu0 0.0
  %1870 = vmatmul.mubr.f32.gmra.mrb[0].mxu0 %v1358
  %v1871 = vpop.f32.mrb[0].mxu0
  %v1872 = vadd.f32 %v1259, %v1871
  %v1873 = vpop.f32.mrb[0].mxu0
  %1874 = vmatprep.mubr.f32.mxu0 0.0
  %1875 = vmatmul.mubr.f32.gmra.mrb[0].mxu0 %v1361
  %v1876 = vpop.f32.mrb[0].mxu0
  %v1877 = vadd.f32 %v1259, %v1876
  %v1878 = vpop.f32.mrb[0].mxu0
  %1879 = vmatprep.mubr.f32.mxu0 0.0
  %1880 = vmatmul.mubr.f32.gmra.mrb[0].mxu0 %v1364
  %v1881 = vpop.f32.mrb[0].mxu0
  %v1882 = vadd.f32 %v1259, %v1881
  %v1883 = vpop.f32.mrb[0].mxu0
  %1884 = vmatprep.mubr.f32.mxu0 0.0
  %1885 = vmatmul.mubr.f32.gmra.mrb[0].mxu0 %v1367
  %v1886 = vpop.f32.mrb[0].mxu0
  %v1887 = vadd.f32 %v1259, %v1886
  %v1888 = vpop.f32.mrb[0].mxu0
  %1889 = vmatprep.mubr.f32.mxu0 0.0
  %1890 = vmatmul.mubr.f32.gmra.mrb[0].mxu0 %v1370
  %v1891 = vpop.f32.mrb[0].mxu0
  %v1892 = vadd.f32 %v1259, %v1891
  %v1893 = vpop.f32.mrb[0].mxu0
  %1894 = vmatprep.mubr.f32.mxu0 0.0
  %1895 = vmatmul.mubr.f32.gmra.mrb[0].mxu0 %v1373
  %v1896 = vpop.f32.mrb[0].mxu0
  %v1897 = vadd.f32 %v1259, %v1896
  %v1898 = vpop.f32.mrb[0].mxu0
  %1899 = vmatprep.mubr.f32.mxu0 0.0
  %1900 = vmatmul.mubr.f32.gmra.mrb[0].mxu0 %v1376
  %v1901 = vpop.f32.mrb[0].mxu0
  %v1902 = vadd.f32 %v1259, %v1901
  %v1903 = vpop.f32.mrb[0].mxu0
  %1904 = vmatprep.mubr.f32.mxu0 0.0
  %1905 = vmatmul.mubr.f32.gmra.mrb[0].mxu0 %v1379
  %v1906 = vpop.f32.mrb[0].mxu0
  %v1907 = vadd.f32 %v1259, %v1906
  %v1908 = vpop.f32.mrb[0].mxu0
  %1909 = vmatprep.mubr.f32.mxu0 0.0
  %1910 = vmatmul.mubr.f32.gmra.mrb[0].mxu0 %v1382
  %v1911 = vpop.f32.mrb[0].mxu0
  %v1912 = vadd.f32 %v1259, %v1911
  %v1913 = vpop.f32.mrb[0].mxu0
  %1914 = vmatprep.mubr.f32.mxu0 0.0
  %1915 = vmatmul.mubr.f32.gmra.mrb[0].mxu0 %v1385
  %v1916 = vpop.f32.mrb[0].mxu0
  %v1917 = vadd.f32 %v1259, %v1916
  %v1918 = vpop.f32.mrb[0].mxu0
  %1919 = vmatprep.mubr.f32.mxu0 0.0
  %1920 = vmatmul.mubr.f32.gmra.mrb[0].mxu0 %v1388
  %v1921 = vpop.f32.mrb[0].mxu0
  %v1922 = vadd.f32 %v1259, %v1921
  %v1923 = vpop.f32.mrb[0].mxu0
  %1924 = vmatprep.mubr.f32.mxu0 0.0
  %1925 = vmatmul.mubr.f32.gmra.mrb[0].mxu0 %v1391
  %v1926 = vpop.f32.mrb[0].mxu0
  %v1927 = vadd.f32 %v1259, %v1926
  %v1928 = vpop.f32.mrb[0].mxu0
  %1929 = vmatprep.mubr.f32.mxu0 0.0
  %1930 = vmatmul.mubr.f32.gmra.mrb[0].mxu0 %v1394
  %v1931 = vpop.f32.mrb[0].mxu0
  %v1932 = vadd.f32 %v1259, %v1931
  %v1933 = vpop.f32.mrb[0].mxu0
  %1934 = vmatprep.mubr.f32.mxu0 0.0
  %1935 = vmatmul.mubr.f32.gmra.mrb[0].mxu0 %v1397
  %v1936 = vpop.f32.mrb[0].mxu0
  %v1937 = vadd.f32 %v1259, %v1936
  %v1938 = vpop.f32.mrb[0].mxu0
  %1939 = vmatprep.mubr.f32.mxu0 0.0
  %1940 = vmatmul.mubr.f32.gmra.mrb[0].mxu0 %v1400
  %v1941 = vpop.f32.mrb[0].mxu0
  %v1942 = vadd.f32 %v1259, %v1941
  %v1943 = vpop.f32.mrb[0].mxu0
  %1944 = vmatprep.mubr.f32.mxu0 0.0
  %1945 = vmatmul.mubr.f32.gmra.mrb[0].mxu0 %v1403
  %v1946 = vpop.f32.mrb[0].mxu0
  %v1947 = vadd.f32 %v1259, %v1946
  %v1948 = vpop.f32.mrb[0].mxu0
  %1949 = vmatprep.mubr.f32.mxu0 0.0
  %1950 = vmatmul.mubr.f32.gmra.mrb[0].mxu0 %v1406
  %v1951 = vpop.f32.mrb[0].mxu0
  %v1952 = vadd.f32 %v1259, %v1951
  %v1953 = vpop.f32.mrb[0].mxu0
  %1954 = vmatprep.mubr.f32.mxu0 0.0
  %1955 = vmatmul.mubr.f32.gmra.mrb[0].mxu0 %v1409
  %v1956 = vpop.f32.mrb[0].mxu0
  %v1957 = vadd.f32 %v1259, %v1956
  %v1958 = vpop.f32.mrb[0].mxu0
  %1959 = vmatprep.mubr.f32.mxu0 0.0
  %1960 = vmatmul.mubr.f32.gmra.mrb[0].mxu0 %v1412
  %v1961 = vpop.f32.mrb[0].mxu0
  %v1962 = vadd.f32 %v1259, %v1961
  %v1963 = vpop.f32.mrb[0].mxu0
  %1964 = vmatprep.mubr.f32.mxu0 0.0
  %1965 = vmatmul.mubr.f32.gmra.mrb[0].mxu0 %v1415
  %v1966 = vpop.f32.mrb[0].mxu0
  %v1967 = vadd.f32 %v1259, %v1966
  %v1968 = vpop.f32.mrb[0].mxu0
  %1969 = vmatprep.mubr.f32.mxu0 0.0
  %1970 = vmatmul.mubr.f32.gmra.mrb[0].mxu0 %v1418
  %v1971 = vpop.f32.mrb[0].mxu0
  %v1972 = vadd.f32 %v1259, %v1971
  %v1973 = vpop.f32.mrb[0].mxu0
  %1974 = vmatprep.mubr.f32.mxu0 0.0
  %1975 = vmatmul.mubr.f32.gmra.mrb[0].mxu0 %v1421
  %v1976 = vpop.f32.mrb[0].mxu0
  %v1977 = vadd.f32 %v1259, %v1976
  %v1978 = vpop.f32.mrb[0].mxu0
  %1979 = vmatprep.mubr.f32.mxu0 0.0
  %1980 = vmatmul.mubr.f32.gmra.mrb[0].mxu0 %v1424
  %v1981 = vpop.f32.mrb[0].mxu0
  %v1982 = vadd.f32 %v1259, %v1981
  %v1983 = vpop.f32.mrb[0].mxu0
  %1984 = vmatprep.mubr.f32.mxu0 0.0
  %1985 = vmatmul.mubr.f32.gmra.mrb[0].mxu0 %v1427
  %v1986 = vpop.f32.mrb[0].mxu0
  %v1987 = vadd.f32 %v1259, %v1986
  %v1988 = vpop.f32.mrb[0].mxu0
  %1989 = vmatprep.mubr.f32.mxu0 0.0
  %1990 = vmatmul.mubr.f32.gmra.mrb[0].mxu0 %v1430
  %v1991 = vpop.f32.mrb[0].mxu0
  %v1992 = vadd.f32 %v1259, %v1991
  %v1993 = vpop.f32.mrb[0].mxu0
  %1994 = vmatprep.mubr.f32.mxu0 0.0
  %1995 = vmatmul.mubr.f32.gmra.mrb[0].mxu0 %v1433
  %v1996 = vpop.f32.mrb[0].mxu0
  %v1997 = vadd.f32 %v1259, %v1996
  %v1998 = vpop.f32.mrb[0].mxu0
  %1999 = vmatprep.mubr.f32.mxu0 0.0
  %2000 = vmatmul.mubr.f32.gmra.mrb[0].mxu0 %v1436
  %v2001 = vpop.f32.mrb[0].mxu0
  %v2002 = vadd.f32 %v1259, %v2001
  %v2003 = vpop.f32.mrb[0].mxu0
  %2004 = vmatprep.mubr.f32.mxu0 0.0
  %2005 = vmatmul.mubr.f32.gmra.mrb[0].mxu0 %v1439
  %v2006 = vpop.f32.mrb[0].mxu0
  %v2007 = vadd.f32 %v1259, %v2006
  %v2008 = vpop.f32.mrb[0].mxu0
  %2009 = vmatprep.mubr.f32.mxu0 0.0
  %2010 = vmatmul.mubr.f32.gmra.mrb[0].mxu0 %v1442
  %v2011 = vpop.f32.mrb[0].mxu0
  %v2012 = vadd.f32 %v1259, %v2011
  %v2013 = vpop.f32.mrb[0].mxu0
  %2014 = vmatprep.mubr.f32.mxu0 0.0
  %2015 = vmatmul.mubr.f32.gmra.mrb[0].mxu0 %v1445
  %v2016 = vpop.f32.mrb[0].mxu0
  %v2017 = vadd.f32 %v1259, %v2016
  %v2018 = vpop.f32.mrb[0].mxu0
  %2019 = vmatprep.mubr.f32.mxu0 0.0
  %2020 = vmatmul.mubr.f32.gmra.mrb[0].mxu0 %v1448
  %v2021 = vpop.f32.mrb[0].mxu0
  %v2022 = vadd.f32 %v1259, %v2021
  %v2023 = vpop.f32.mrb[0].mxu0
  %2024 = vmatprep.mubr.f32.mxu0 0.0
  %2025 = vmatmul.mubr.f32.gmra.mrb[0].mxu0 %v1451
  %v2026 = vpop.f32.mrb[0].mxu0
  %v2027 = vadd.f32 %v1259, %v2026
  %v2028 = vpop.f32.mrb[0].mxu0
  %2029 = vmatprep.mubr.f32.mxu0 0.0
  %2030 = vmatmul.mubr.f32.gmra.mrb[0].mxu0 %v1454
  %v2031 = vpop.f32.mrb[0].mxu0
  %v2032 = vadd.f32 %v1259, %v2031
  %v2033 = vpop.f32.mrb[0].mxu0
  %2034 = vmatprep.mubr.f32.mxu0 0.0
  %2035 = vmatmul.mubr.f32.gmra.mrb[0].mxu0 %v1457
  %v2036 = vpop.f32.mrb[0].mxu0
  %v2037 = vadd.f32 %v1259, %v2036
  %v2038 = vpop.f32.mrb[0].mxu0
  %2039 = vmatprep.mubr.f32.mxu0 0.0
  %2040 = vmatmul.mubr.f32.gmra.mrb[0].mxu0 %v1460
  %v2041 = vpop.f32.mrb[0].mxu0
  %v2042 = vadd.f32 %v1259, %v2041
  %v2043 = vpop.f32.mrb[0].mxu0
  %2044 = vmatprep.mubr.f32.mxu0 0.0
  %2045 = vmatmul.mubr.f32.gmra.mrb[0].mxu0 %v1463
  %v2046 = vpop.f32.mrb[0].mxu0
  %v2047 = vadd.f32 %v1259, %v2046
  %v2048 = vpop.f32.mrb[0].mxu0
  %2049 = vmatprep.mubr.f32.mxu0 0.0
  %2050 = vmatmul.mubr.f32.gmra.mrb[0].mxu0 %v1466
  %v2051 = vpop.f32.mrb[0].mxu0
  %v2052 = vadd.f32 %v1259, %v2051
  %v2053 = vpop.f32.mrb[0].mxu0
  %2054 = vmatprep.mubr.f32.mxu0 0.0
  %2055 = vmatmul.mubr.f32.gmra.mrb[0].mxu0 %v1469
  %v2056 = vpop.f32.mrb[0].mxu0
  %v2057 = vadd.f32 %v1259, %v2056
  %v2058 = vpop.f32.mrb[0].mxu0
  %2059 = vmatprep.mubr.f32.mxu0 0.0
  %2060 = vmatmul.mubr.f32.gmra.mrb[0].mxu0 %v1472
  %v2061 = vpop.f32.mrb[0].mxu0
  %v2062 = vadd.f32 %v1259, %v2061
  %v2063 = vpop.f32.mrb[0].mxu0
  %2064 = vmatprep.mubr.f32.mxu0 0.0
  %2065 = vmatmul.mubr.f32.gmra.mrb[0].mxu0 %v1475
  %v2066 = vpop.f32.mrb[0].mxu0
  %v2067 = vadd.f32 %v1259, %v2066
  %v2068 = vpop.f32.mrb[0].mxu0
  %2069 = vmatprep.mubr.f32.mxu0 0.0
  %2070 = vmatmul.mubr.f32.gmra.mrb[0].mxu0 %v1478
  %v2071 = vpop.f32.mrb[0].mxu0
  %v2072 = vadd.f32 %v1259, %v2071
  %v2073 = vpop.f32.mrb[0].mxu0
  %2074 = vmatprep.mubr.f32.mxu0 0.0
  %2075 = vmatmul.mubr.f32.gmra.mrb[0].mxu0 %v1481
  %v2076 = vpop.f32.mrb[0].mxu0
  %v2077 = vadd.f32 %v1259, %v2076
  %v2078 = vpop.f32.mrb[0].mxu0
  %2079 = vmatprep.mubr.f32.mxu0 0.0
  %2080 = vmatmul.mubr.f32.gmra.mrb[0].mxu0 %v1484
  %v2081 = vpop.f32.mrb[0].mxu0
  %v2082 = vadd.f32 %v1259, %v2081
  %v2083 = vpop.f32.mrb[0].mxu0
  %2084 = vmatprep.mubr.f32.mxu0 0.0
  %2085 = vmatmul.mubr.f32.gmra.mrb[0].mxu0 %v1487
  %v2086 = vpop.f32.mrb[0].mxu0
  %v2087 = vadd.f32 %v1259, %v2086
  %v2088 = vpop.f32.mrb[0].mxu0
  %2089 = vmatprep.mubr.f32.mxu0 0.0
  %2090 = vmatmul.mubr.f32.gmra.mrb[0].mxu0 %v1490
  %v2091 = vpop.f32.mrb[0].mxu0
  %v2092 = vadd.f32 %v1259, %v2091
  %v2093 = vpop.f32.mrb[0].mxu0
  %2094 = vmatprep.mubr.f32.mxu0 0.0
  %2095 = vmatmul.mubr.f32.gmra.mrb[0].mxu0 %v1493
  %v2096 = vpop.f32.mrb[0].mxu0
  %v2097 = vadd.f32 %v1259, %v2096
  %v2098 = vpop.f32.mrb[0].mxu0
  %2099 = vmatprep.mubr.f32.mxu0 0.0
  %2100 = vmatmul.mubr.f32.gmra.mrb[0].mxu0 %v1496
  %v2101 = vpop.f32.mrb[0].mxu0
  %v2102 = vadd.f32 %v1259, %v2101
  %v2103 = vpop.f32.mrb[0].mxu0
  %2104 = vmatprep.mubr.f32.mxu0 0.0
  %2105 = vmatmul.mubr.f32.gmra.mrb[0].mxu0 %v1499
  %v2106 = vpop.f32.mrb[0].mxu0
  %v2107 = vadd.f32 %v1259, %v2106
  %v2108 = vpop.f32.mrb[0].mxu0
  %2109 = vmatprep.mubr.f32.mxu0 0.0
  %2110 = vmatmul.mubr.f32.gmra.mrb[0].mxu0 %v1502
  %v2111 = vpop.f32.mrb[0].mxu0
  %v2112 = vadd.f32 %v1259, %v2111
  %v2113 = vpop.f32.mrb[0].mxu0
  %2114 = vmatprep.mubr.f32.mxu0 0.0
  %2115 = vmatmul.mubr.f32.gmra.mrb[0].mxu0 %v1505
  %v2116 = vpop.f32.mrb[0].mxu0
  %v2117 = vadd.f32 %v1259, %v2116
  %v2118 = vpop.f32.mrb[0].mxu0
  %2119 = vmatprep.mubr.f32.mxu0 0.0
  %2120 = vmatmul.mubr.f32.gmra.mrb[0].mxu0 %v1508
  %v2121 = vpop.f32.mrb[0].mxu0
  %v2122 = vadd.f32 %v1259, %v2121
  %v2123 = vpop.f32.mrb[0].mxu0
  %2124 = vmatprep.mubr.f32.mxu0 0.0
  %2125 = vmatmul.mubr.f32.gmra.mrb[0].mxu0 %v1511
  %v2126 = vpop.f32.mrb[0].mxu0
  %v2127 = vadd.f32 %v1259, %v2126
  %v2128 = vpop.f32.mrb[0].mxu0
  %2129 = vmatprep.mubr.f32.mxu0 0.0
  %2130 = vmatmul.mubr.f32.gmra.mrb[0].mxu0 %v1514
  %v2131 = vpop.f32.mrb[0].mxu0
  %v2132 = vadd.f32 %v1259, %v2131
  %v2133 = vpop.f32.mrb[0].mxu0
  %2134 = vmatprep.mubr.f32.mxu0 0.0
  %2135 = vmatmul.mubr.f32.gmra.mrb[0].mxu0 %v1517
  %v2136 = vpop.f32.mrb[0].mxu0
  %v2137 = vadd.f32 %v1259, %v2136
  %v2138 = vpop.f32.mrb[0].mxu0
  %2139 = vmatprep.mubr.f32.mxu0 0.0
  %2140 = vmatmul.mubr.f32.gmra.mrb[0].mxu0 %v1520
  %v2141 = vpop.f32.mrb[0].mxu0
  %v2142 = vadd.f32 %v1259, %v2141
  %v2143 = vpop.f32.mrb[0].mxu0
  %2144 = vmatprep.mubr.f32.mxu0 0.0
  %2145 = vmatmul.mubr.f32.gmra.mrb[0].mxu0 %v1523
  %v2146 = vpop.f32.mrb[0].mxu0
  %v2147 = vadd.f32 %v1259, %v2146
  %v2148 = vpop.f32.mrb[0].mxu0
  %2149 = vmatprep.mubr.f32.mxu0 0.0
  %2150 = vmatmul.mubr.f32.gmra.mrb[0].mxu0 %v1526
  %v2151 = vpop.f32.mrb[0].mxu0
  %v2152 = vadd.f32 %v1259, %v2151
  %v2153 = vpop.f32.mrb[0].mxu0
  %2154 = vmatprep.mubr.f32.mxu0 0.0
  %2155 = vmatmul.mubr.f32.gmra.mrb[0].mxu0 %v1529
  %v2156 = vpop.f32.mrb[0].mxu0
  %v2157 = vadd.f32 %v1259, %v2156
  %v2158 = vpop.f32.mrb[0].mxu0
  %2159 = vmatprep.mubr.f32.mxu0 0.0
  %2160 = vmatmul.mubr.f32.gmra.mrb[0].mxu0 %v1532
  %v2161 = vpop.f32.mrb[0].mxu0
  %v2162 = vadd.f32 %v1259, %v2161
  %v2163 = vpop.f32.mrb[0].mxu0
  %2164 = vmatprep.mubr.f32.mxu0 0.0
  %2165 = vmatmul.mubr.f32.gmra.mrb[0].mxu0 %v1535
  %v2166 = vpop.f32.mrb[0].mxu0
  %v2167 = vadd.f32 %v1259, %v2166
  %v2168 = vpop.f32.mrb[0].mxu0
  %2169 = vmatprep.mubr.f32.mxu0 0.0
  %2170 = vmatmul.mubr.f32.gmra.mrb[0].mxu0 %v1538
  %v2171 = vpop.f32.mrb[0].mxu0
  %v2172 = vadd.f32 %v1259, %v2171
  %v2173 = vpop.f32.mrb[0].mxu0
  %2174 = vmatprep.mubr.f32.mxu0 0.0
  %2175 = vmatmul.mubr.f32.gmra.mrb[0].mxu0 %v1541
  %v2176 = vpop.f32.mrb[0].mxu0
  %v2177 = vadd.f32 %v1259, %v2176
  %v2178 = vpop.f32.mrb[0].mxu0
  %2179 = vmatprep.mubr.f32.mxu0 0.0
  %2180 = vmatmul.mubr.f32.gmra.mrb[0].mxu0 %v1544
  %v2181 = vpop.f32.mrb[0].mxu0
  %v2182 = vadd.f32 %v1259, %v2181
  %v2183 = vpop.f32.mrb[0].mxu0
  %2184 = vmatprep.mubr.f32.mxu0 0.0
  %2185 = vmatmul.mubr.f32.gmra.mrb[0].mxu0 %v1547
  %v2186 = vpop.f32.mrb[0].mxu0
  %v2187 = vadd.f32 %v1259, %v2186
  %v2188 = vpop.f32.mrb[0].mxu0
  %2189 = vmatprep.mubr.f32.mxu0 0.0
  %2190 = vmatmul.mubr.f32.gmra.mrb[0].mxu0 %v1550
  %v2191 = vpop.f32.mrb[0].mxu0
  %v2192 = vadd.f32 %v1259, %v2191
  %v2193 = vpop.f32.mrb[0].mxu0
  %2194 = vmatprep.mubr.f32.mxu0 0.0
  %2195 = vmatmul.mubr.f32.gmra.mrb[0].mxu0 %v1553
  %v2196 = vpop.f32.mrb[0].mxu0
  %v2197 = vadd.f32 %v1259, %v2196
  %v2198 = vpop.f32.mrb[0].mxu0
  %2199 = vmatprep.mubr.f32.mxu0 0.0
  %2200 = vmatmul.mubr.f32.gmra.mrb[0].mxu0 %v1556
  %v2201 = vpop.f32.mrb[0].mxu0
  %v2202 = vadd.f32 %v1259, %v2201
  %v2203 = vpop.f32.mrb[0].mxu0
  %2204 = vmatprep.mubr.f32.mxu0 0.0
  %2205 = vmatmul.mubr.f32.gmra.mrb[0].mxu0 %v1559
  %v2206 = vpop.f32.mrb[0].mxu0
  %v2207 = vadd.f32 %v1259, %v2206
  %v2208 = vpop.f32.mrb[0].mxu0
  %2209 = vmatprep.mubr.f32.mxu0 0.0
  %2210 = vmatmul.mubr.f32.gmra.mrb[0].mxu0 %v1562
  %v2211 = vpop.f32.mrb[0].mxu0
  %v2212 = vadd.f32 %v1259, %v2211
  %v2213 = vpop.f32.mrb[0].mxu0
  %2214 = vmatprep.mubr.f32.mxu0 0.0
  %2215 = vmatmul.mubr.f32.gmra.mrb[0].mxu0 %v1565
  %v2216 = vpop.f32.mrb[0].mxu0
  %v2217 = vadd.f32 %v1259, %v2216
  %v2218 = vpop.f32.mrb[0].mxu0
  %2219 = vmatprep.mubr.f32.mxu0 0.0
  %2220 = vmatmul.mubr.f32.gmra.mrb[0].mxu0 %v1568
  %v2221 = vpop.f32.mrb[0].mxu0
  %v2222 = vadd.f32 %v1259, %v2221
  %v2223 = vpop.f32.mrb[0].mxu0
  %2224 = vmatprep.mubr.f32.mxu0 0.0
  %2225 = vmatmul.mubr.f32.gmra.mrb[0].mxu0 %v1571
  %v2226 = vpop.f32.mrb[0].mxu0
  %v2227 = vadd.f32 %v1259, %v2226
  %v2228 = vpop.f32.mrb[0].mxu0
  %2229 = vmatprep.mubr.f32.mxu0 0.0
  %2230 = vmatmul.mubr.f32.gmra.mrb[0].mxu0 %v1574
  %v2231 = vpop.f32.mrb[0].mxu0
  %v2232 = vadd.f32 %v1259, %v2231
  %v2233 = vpop.f32.mrb[0].mxu0
  %2234 = vmatprep.mubr.f32.mxu0 0.0
  %2235 = vmatmul.mubr.f32.gmra.mrb[0].mxu0 %v1577
  %v2236 = vpop.f32.mrb[0].mxu0
  %v2237 = vadd.f32 %v1259, %v2236
  %v2238 = vpop.f32.mrb[0].mxu0
  %2239 = vmatprep.mubr.f32.mxu0 0.0
  %2240 = vmatmul.mubr.f32.gmra.mrb[0].mxu0 %v1580
  %v2241 = vpop.f32.mrb[0].mxu0
  %v2242 = vadd.f32 %v1259, %v2241
  %v2243 = vpop.f32.mrb[0].mxu0
  %2244 = vmatprep.mubr.f32.mxu0 0.0
  %2245 = vmatmul.mubr.f32.gmra.mrb[0].mxu0 %v1583
  %v2246 = vpop.f32.mrb[0].mxu0
  %v2247 = vadd.f32 %v1259, %v2246
  %v2248 = vpop.f32.mrb[0].mxu0
  %2249 = vmatprep.mubr.f32.mxu0 0.0
  %2250 = vmatmul.mubr.f32.gmra.mrb[0].mxu0 %v1586
  %v2251 = vpop.f32.mrb[0].mxu0
  %v2252 = vadd.f32 %v1259, %v2251
  %v2253 = vpop.f32.mrb[0].mxu0
  %2254 = vmatprep.mubr.f32.mxu0 0.0
  %2255 = vmatmul.mubr.f32.gmra.mrb[0].mxu0 %v1589
  %v2256 = vpop.f32.mrb[0].mxu0
  %v2257 = vadd.f32 %v1259, %v2256
  %v2258 = vpop.f32.mrb[0].mxu0
  %2259 = vmatprep.mubr.f32.mxu0 0.0
  %2260 = vmatmul.mubr.f32.gmra.mrb[0].mxu0 %v1592
  %v2261 = vpop.f32.mrb[0].mxu0
  %v2262 = vadd.f32 %v1259, %v2261
  %v2263 = vpop.f32.mrb[0].mxu0
  %2264 = vmatprep.mubr.f32.mxu0 0.0
  %2265 = vmatmul.mubr.f32.gmra.mrb[0].mxu0 %v1595
  %v2266 = vpop.f32.mrb[0].mxu0
  %v2267 = vadd.f32 %v1259, %v2266
  %v2268 = vpop.f32.mrb[0].mxu0
  %2269 = vmatprep.mubr.f32.mxu0 0.0
  %2270 = vmatmul.mubr.f32.gmra.mrb[0].mxu0 %v1598
  %v2271 = vpop.f32.mrb[0].mxu0
  %v2272 = vadd.f32 %v1259, %v2271
  %v2273 = vpop.f32.mrb[0].mxu0
  %2274 = vmatprep.mubr.f32.mxu0 0.0
  %2275 = vmatmul.mubr.f32.gmra.mrb[0].mxu0 %v1601
  %v2276 = vpop.f32.mrb[0].mxu0
  %v2277 = vadd.f32 %v1259, %v2276
  %v2278 = vpop.f32.mrb[0].mxu0
  %2279 = vmatprep.mubr.f32.mxu0 0.0
  %2280 = vmatmul.mubr.f32.gmra.mrb[0].mxu0 %v1604
  %v2281 = vpop.f32.mrb[0].mxu0
  %v2282 = vadd.f32 %v1259, %v2281
  %v2283 = vpop.f32.mrb[0].mxu0
  %2284 = vmatprep.mubr.f32.mxu0 0.0
  %2285 = vmatmul.mubr.f32.gmra.mrb[0].mxu0 %v1607
  %v2286 = vpop.f32.mrb[0].mxu0
  %v2287 = vadd.f32 %v1259, %v2286
  %v2288 = vpop.f32.mrb[0].mxu0
  %2289 = vmatprep.mubr.f32.mxu0 0.0
  %2290 = vmatmul.mubr.f32.gmra.mrb[0].mxu0 %v1610
  %v2291 = vpop.f32.mrb[0].mxu0
  %v2292 = vadd.f32 %v1259, %v2291
  %v2293 = vpop.f32.mrb[0].mxu0
  %2294 = vmatprep.mubr.f32.mxu0 0.0
  %2295 = vmatmul.mubr.f32.gmra.mrb[0].mxu0 %v1613
  %v2296 = vpop.f32.mrb[0].mxu0
  %v2297 = vadd.f32 %v1259, %v2296
  %v2298 = vpop.f32.mrb[0].mxu0
  %2299 = vmatprep.mubr.f32.mxu0 0.0
  %2300 = vmatmul.mubr.f32.gmra.mrb[0].mxu0 %v1616
  %v2301 = vpop.f32.mrb[0].mxu0
  %v2302 = vadd.f32 %v1259, %v2301
  %v2303 = vpop.f32.mrb[0].mxu0
  %2304 = vmatprep.mubr.f32.mxu0 0.0
  %2305 = vmatmul.mubr.f32.gmra.mrb[0].mxu0 %v1619
  %v2306 = vpop.f32.mrb[0].mxu0
  %v2307 = vadd.f32 %v1259, %v2306
  %v2308 = vpop.f32.mrb[0].mxu0
  %2309 = vmatprep.mubr.f32.mxu0 0.0
  %2310 = vmatmul.mubr.f32.gmra.mrb[0].mxu0 %v1622
  %v2311 = vpop.f32.mrb[0].mxu0
  %v2312 = vadd.f32 %v1259, %v2311
  %v2313 = vpop.f32.mrb[0].mxu0
  %2314 = vmatprep.mubr.f32.mxu0 0.0
  %2315 = vmatmul.mubr.f32.gmra.mrb[0].mxu0 %v1625
  %v2316 = vpop.f32.mrb[0].mxu0
  %v2317 = vadd.f32 %v1259, %v2316
  %v2318 = vpop.f32.mrb[0].mxu0
  %2319 = vmatprep.mubr.f32.mxu0 0.0
  %2320 = vmatmul.mubr.f32.gmra.mrb[0].mxu0 %v1628
  %v2321 = vpop.f32.mrb[0].mxu0
  %v2322 = vadd.f32 %v1259, %v2321
  %v2323 = vpop.f32.mrb[0].mxu0
  %2324 = vmatprep.mubr.f32.mxu0 0.0
  %2325 = vmatmul.mubr.f32.gmra.mrb[0].mxu0 %v1631
  %v2326 = vpop.f32.mrb[0].mxu0
  %v2327 = vadd.f32 %v1259, %v2326
  %v2328 = vpop.f32.mrb[0].mxu0
  %2329 = vmatprep.mubr.f32.mxu0 0.0
  %2330 = vmatmul.mubr.f32.gmra.mrb[0].mxu0 %v1634
  %v2331 = vpop.f32.mrb[0].mxu0
  %v2332 = vadd.f32 %v1259, %v2331
  %v2333 = vpop.f32.mrb[0].mxu0
  %2334 = vmatprep.mubr.f32.mxu0 0.0
  %2335 = vmatmul.mubr.f32.gmra.mrb[0].mxu0 %v1637
  %v2336 = vpop.f32.mrb[0].mxu0
  %v2337 = vadd.f32 %v1259, %v2336
  %v2338 = vpop.f32.mrb[0].mxu0
  %2339 = vmatprep.mubr.f32.mxu0 0.0
  %2340 = vmatmul.mubr.f32.gmra.mrb[0].mxu0 %v1640
  %v2341 = vpop.f32.mrb[0].mxu0
  %v2342 = vadd.f32 %v1259, %v2341
  %v2343 = vpop.f32.mrb[0].mxu0
  %2344 = vmatprep.mubr.f32.mxu0 0.0
  %2345 = vmatmul.mubr.f32.gmra.mrb[0].mxu0 %v1643
  %v2346 = vpop.f32.mrb[0].mxu0
  %v2347 = vadd.f32 %v1259, %v2346
  %v2348 = vpop.f32.mrb[0].mxu0
  %2349 = vdwg.mxu0
  %v2350 = vld [vmem:[%s3] sm:$0xff]
  %v2351 = vld [vmem:[%s3 + $0x8] sm:$0xff]
  %v2352 = vld [vmem:[%s3 + $0x10] sm:$0xff]
  %v2353 = vld [vmem:[%s3 + $0x18] sm:$0xff]
  %v2354 = vld [vmem:[%s3 + $0x20] sm:$0xff]
  %v2355 = vld [vmem:[%s3 + $0x28] sm:$0xff]
  %v2356 = vld [vmem:[%s4 + $0x2] sm:$0x1]
  %v2357 = vlaneseq
  %v2358 = vshrl.u32 %v2357, 7
  %v2359 = vsub.s32 0, %v2358
  %v2360 = vrot.slane %v2356, %v2359
  %vm2361 = vcmask 392192
  %v2363 = vsel %vm2361, %v1712, 0
  %v2366 = vsel %vm2361, %v1717, 0
  %v2369 = vsel %vm2361, %v1722, 0
  %v2372 = vsel %vm2361, %v1727, 0
  %v2375 = vsel %vm2361, %v1732, 0
  %v2378 = vsel %vm2361, %v1737, 0
  %v2381 = vsel %vm2361, %v1742, 0
  %v2384 = vsel %vm2361, %v1747, 0
  %v2387 = vsel %vm2361, %v1752, 0
  %v2390 = vsel %vm2361, %v1757, 0
  %v2393 = vsel %vm2361, %v1762, 0
  %v2396 = vsel %vm2361, %v1767, 0
  %v2399 = vsel %vm2361, %v1772, 0
  %v2402 = vsel %vm2361, %v1777, 0
  %v2405 = vsel %vm2361, %v1782, 0
  %v2408 = vsel %vm2361, %v1787, 0
  %v2411 = vsel %vm2361, %v1792, 0
  %v2414 = vsel %vm2361, %v1797, 0
  %v2417 = vsel %vm2361, %v1802, 0
  %v2420 = vsel %vm2361, %v1807, 0
  %v2423 = vsel %vm2361, %v1812, 0
  %v2426 = vsel %vm2361, %v1817, 0
  %v2429 = vsel %vm2361, %v1822, 0
  %v2432 = vsel %vm2361, %v1827, 0
  %v2435 = vsel %vm2361, %v1832, 0
  %v2438 = vsel %vm2361, %v1837, 0
  %v2441 = vsel %vm2361, %v1842, 0
  %v2444 = vsel %vm2361, %v1847, 0
  %v2447 = vsel %vm2361, %v1852, 0
  %v2450 = vsel %vm2361, %v1857, 0
  %v2453 = vsel %vm2361, %v1862, 0
  %v2456 = vsel %vm2361, %v1867, 0
  %v2459 = vsel %vm2361, %v1872, 0
  %v2462 = vsel %vm2361, %v1877, 0
  %v2465 = vsel %vm2361, %v1882, 0
  %v2468 = vsel %vm2361, %v1887, 0
  %v2471 = vsel %vm2361, %v1892, 0
  %v2474 = vsel %vm2361, %v1897, 0
  %v2477 = vsel %vm2361, %v1902, 0
  %v2480 = vsel %vm2361, %v1907, 0
  %v2483 = vsel %vm2361, %v1912, 0
  %v2486 = vsel %vm2361, %v1917, 0
  %v2489 = vsel %vm2361, %v1922, 0
  %v2492 = vsel %vm2361, %v1927, 0
  %v2495 = vsel %vm2361, %v1932, 0
  %v2498 = vsel %vm2361, %v1937, 0
  %v2501 = vsel %vm2361, %v1942, 0
  %v2504 = vsel %vm2361, %v1947, 0
  %v2507 = vsel %vm2361, %v1952, 0
  %v2510 = vsel %vm2361, %v1957, 0
  %v2513 = vsel %vm2361, %v1962, 0
  %v2516 = vsel %vm2361, %v1967, 0
  %v2519 = vsel %vm2361, %v1972, 0
  %v2522 = vsel %vm2361, %v1977, 0
  %v2525 = vsel %vm2361, %v1982, 0
  %v2528 = vsel %vm2361, %v1987, 0
  %v2531 = vsel %vm2361, %v1992, 0
  %v2534 = vsel %vm2361, %v1997, 0
  %v2537 = vsel %vm2361, %v2002, 0
  %v2540 = vsel %vm2361, %v2007, 0
  %v2543 = vsel %vm2361, %v2012, 0
  %v2546 = vsel %vm2361, %v2017, 0
  %v2549 = vsel %vm2361, %v2022, 0
  %v2552 = vsel %vm2361, %v2027, 0
  %v2555 = vsel %vm2361, %v2032, 0
  %v2558 = vsel %vm2361, %v2037, 0
  %v2561 = vsel %vm2361, %v2042, 0
  %v2564 = vsel %vm2361, %v2047, 0
  %v2567 = vsel %vm2361, %v2052, 0
  %v2570 = vsel %vm2361, %v2057, 0
  %v2573 = vsel %vm2361, %v2062, 0
  %v2576 = vsel %vm2361, %v2067, 0
  %v2579 = vsel %vm2361, %v2072, 0
  %v2582 = vsel %vm2361, %v2077, 0
  %v2585 = vsel %vm2361, %v2082, 0
  %v2588 = vsel %vm2361, %v2087, 0
  %v2591 = vsel %vm2361, %v2092, 0
  %v2594 = vsel %vm2361, %v2097, 0
  %v2597 = vsel %vm2361, %v2102, 0
  %v2600 = vsel %vm2361, %v2107, 0
  %v2603 = vsel %vm2361, %v2112, 0
  %v2606 = vsel %vm2361, %v2117, 0
  %v2609 = vsel %vm2361, %v2122, 0
  %v2612 = vsel %vm2361, %v2127, 0
  %v2615 = vsel %vm2361, %v2132, 0
  %v2618 = vsel %vm2361, %v2137, 0
  %v2621 = vsel %vm2361, %v2142, 0
  %v2624 = vsel %vm2361, %v2147, 0
  %v2627 = vsel %vm2361, %v2152, 0
  %v2630 = vsel %vm2361, %v2157, 0
  %v2633 = vsel %vm2361, %v2162, 0
  %v2636 = vsel %vm2361, %v2167, 0
  %v2639 = vsel %vm2361, %v2172, 0
  %v2642 = vsel %vm2361, %v2177, 0
  %v2645 = vsel %vm2361, %v2182, 0
  %v2648 = vsel %vm2361, %v2187, 0
  %v2651 = vsel %vm2361, %v2192, 0
  %v2654 = vsel %vm2361, %v2197, 0
  %v2657 = vsel %vm2361, %v2202, 0
  %v2660 = vsel %vm2361, %v2207, 0
  %v2663 = vsel %vm2361, %v2212, 0
  %v2666 = vsel %vm2361, %v2217, 0
  %v2669 = vsel %vm2361, %v2222, 0
  %v2672 = vsel %vm2361, %v2227, 0
  %v2675 = vsel %vm2361, %v2232, 0
  %v2678 = vsel %vm2361, %v2237, 0
  %v2681 = vsel %vm2361, %v2242, 0
  %v2684 = vsel %vm2361, %v2247, 0
  %v2687 = vsel %vm2361, %v2252, 0
  %v2690 = vsel %vm2361, %v2257, 0
  %v2693 = vsel %vm2361, %v2262, 0
  %v2696 = vsel %vm2361, %v2267, 0
  %v2699 = vsel %vm2361, %v2272, 0
  %v2702 = vsel %vm2361, %v2277, 0
  %v2705 = vsel %vm2361, %v2282, 0
  %v2708 = vsel %vm2361, %v2287, 0
  %v2711 = vsel %vm2361, %v2292, 0
  %v2714 = vsel %vm2361, %v2297, 0
  %v2717 = vsel %vm2361, %v2302, 0
  %v2720 = vsel %vm2361, %v2307, 0
  %v2723 = vsel %vm2361, %v2312, 0
  %v2726 = vsel %vm2361, %v2317, 0
  %v2729 = vsel %vm2361, %v2322, 0
  %v2732 = vsel %vm2361, %v2327, 0
  %v2735 = vsel %vm2361, %v2332, 0
  %v2738 = vsel %vm2361, %v2337, 0
  %v2741 = vsel %vm2361, %v2342, 0
  %v2744 = vsel %vm2361, %v2347, 0
  %2746 = vmatprep.subr.mxu0 0.0
  %2747 = vmatpush1.msra.mxu0 %v2350
  %2748 = vmatprep.subr.mxu0 0.0
  %2749 = vmatpush1.msra.mxu0 %v2351
  %2750 = vmatprep.subr.mxu0 0.0
  %2751 = vmatpush1.msra.mxu0 %v2352
  %2752 = vmatprep.subr.mxu0 0.0
  %2753 = vmatpush1.msra.mxu0 %v2353
  %2754 = vmatprep.subr.mxu0 0.0
  %2755 = vmatpush1.msra.mxu0 %v2354
  %2756 = vmatprep.subr.mxu0 0.0
  %2757 = vmatpush1.msra.mxu0 %v2355
  %2758 = vmatprep.subr.mxu0 0.0
  %2759 = vmatpush1.msra.mxu0 0.0
  %2760 = vmatprep.subr.mxu0 0.0
  %2761 = vmatpush1.msra.mxu0 0.0
  %2762 = vmatprep.subr.mxu0 0.0
  %2763 = vmatpush1.msra.mxu0 0.0
  %2764 = vmatprep.subr.mxu0 0.0
  %2765 = vmatpush1.msra.mxu0 0.0
  %2766 = vmatprep.subr.mxu0 0.0
  %2767 = vmatpush1.msra.mxu0 0.0
  %2768 = vmatprep.subr.mxu0 0.0
  %2769 = vmatpush1.msra.mxu0 0.0
  %2770 = vmatprep.subr.mxu0 0.0
  %2771 = vmatpush1.msra.mxu0 0.0
  %2772 = vmatprep.subr.mxu0 0.0
  %2773 = vmatpush1.msra.mxu0 0.0
  %2774 = vmatprep.subr.mxu0 0.0
  %2775 = vmatpush1.msra.mxu0 0.0
  %2776 = vmatprep.subr.mxu0 0.0
  %2777 = vmatpush1.msra.mxu0 0.0
  %2778 = vmatprep.subr.mxu0 0.0
  %2779 = vmatpush1.msra.mxu0 0.0
  %2780 = vmatprep.subr.mxu0 0.0
  %2781 = vmatpush1.msra.mxu0 0.0
  %2782 = vmatprep.subr.mxu0 0.0
  %2783 = vmatpush1.msra.mxu0 0.0
  %2784 = vmatprep.subr.mxu0 0.0
  %2785 = vmatpush1.msra.mxu0 0.0
  %2786 = vmatprep.subr.mxu0 0.0
  %2787 = vmatpush1.msra.mxu0 0.0
  %2788 = vmatprep.subr.mxu0 0.0
  %2789 = vmatpush1.msra.mxu0 0.0
  %2790 = vmatprep.subr.mxu0 0.0
  %2791 = vmatpush1.msra.mxu0 0.0
  %2792 = vmatprep.subr.mxu0 0.0
  %2793 = vmatpush1.msra.mxu0 0.0
  %2794 = vmatprep.subr.mxu0 0.0
  %2795 = vmatpush1.msra.mxu0 0.0
  %2796 = vmatprep.subr.mxu0 0.0
  %2797 = vmatpush1.msra.mxu0 0.0
  %2798 = vmatprep.subr.mxu0 0.0
  %2799 = vmatpush1.msra.mxu0 0.0
  %2800 = vmatprep.subr.mxu0 0.0
  %2801 = vmatpush1.msra.mxu0 0.0
  %2802 = vmatprep.subr.mxu0 0.0
  %2803 = vmatpush1.msra.mxu0 0.0
  %2804 = vmatprep.subr.mxu0 0.0
  %2805 = vmatpush1.msra.mxu0 0.0
  %2806 = vmatprep.subr.mxu0 0.0
  %2807 = vmatpush1.msra.mxu0 0.0
  %2808 = vmatprep.subr.mxu0 0.0
  %2809 = vmatpush1.msra.mxu0 0.0
  %2810 = vmatprep.mubr.f32.mxu0 0.0
  %2811 = vmatmul.mubr.f32.gmra.mrb[0].mxu0 %v2363
  %v2812 = vpop.f32.mrb[0].mxu0
  %v2813 = vadd.f32 %v2360, %v2812
  %v2814 = vpop.f32.mrb[0].mxu0
  %2815 = vmatprep.mubr.f32.mxu0 0.0
  %2816 = vmatmul.mubr.f32.gmra.mrb[0].mxu0 %v2366
  %v2817 = vpop.f32.mrb[0].mxu0
  %v2818 = vadd.f32 %v2360, %v2817
  %v2819 = vpop.f32.mrb[0].mxu0
  %2820 = vmatprep.mubr.f32.mxu0 0.0
  %2821 = vmatmul.mubr.f32.gmra.mrb[0].mxu0 %v2369
  %v2822 = vpop.f32.mrb[0].mxu0
  %v2823 = vadd.f32 %v2360, %v2822
  %v2824 = vpop.f32.mrb[0].mxu0
  %2825 = vmatprep.mubr.f32.mxu0 0.0
  %2826 = vmatmul.mubr.f32.gmra.mrb[0].mxu0 %v2372
  %v2827 = vpop.f32.mrb[0].mxu0
  %v2828 = vadd.f32 %v2360, %v2827
  %v2829 = vpop.f32.mrb[0].mxu0
  %2830 = vmatprep.mubr.f32.mxu0 0.0
  %2831 = vmatmul.mubr.f32.gmra.mrb[0].mxu0 %v2375
  %v2832 = vpop.f32.mrb[0].mxu0
  %v2833 = vadd.f32 %v2360, %v2832
  %v2834 = vpop.f32.mrb[0].mxu0
  %2835 = vmatprep.mubr.f32.mxu0 0.0
  %2836 = vmatmul.mubr.f32.gmra.mrb[0].mxu0 %v2378
  %v2837 = vpop.f32.mrb[0].mxu0
  %v2838 = vadd.f32 %v2360, %v2837
  %v2839 = vpop.f32.mrb[0].mxu0
  %2840 = vmatprep.mubr.f32.mxu0 0.0
  %2841 = vmatmul.mubr.f32.gmra.mrb[0].mxu0 %v2381
  %v2842 = vpop.f32.mrb[0].mxu0
  %v2843 = vadd.f32 %v2360, %v2842
  %v2844 = vpop.f32.mrb[0].mxu0
  %2845 = vmatprep.mubr.f32.mxu0 0.0
  %2846 = vmatmul.mubr.f32.gmra.mrb[0].mxu0 %v2384
  %v2847 = vpop.f32.mrb[0].mxu0
  %v2848 = vadd.f32 %v2360, %v2847
  %v2849 = vpop.f32.mrb[0].mxu0
  %2850 = vmatprep.mubr.f32.mxu0 0.0
  %2851 = vmatmul.mubr.f32.gmra.mrb[0].mxu0 %v2387
  %v2852 = vpop.f32.mrb[0].mxu0
  %v2853 = vadd.f32 %v2360, %v2852
  %v2854 = vpop.f32.mrb[0].mxu0
  %2855 = vmatprep.mubr.f32.mxu0 0.0
  %2856 = vmatmul.mubr.f32.gmra.mrb[0].mxu0 %v2390
  %v2857 = vpop.f32.mrb[0].mxu0
  %v2858 = vadd.f32 %v2360, %v2857
  %v2859 = vpop.f32.mrb[0].mxu0
  %2860 = vmatprep.mubr.f32.mxu0 0.0
  %2861 = vmatmul.mubr.f32.gmra.mrb[0].mxu0 %v2393
  %v2862 = vpop.f32.mrb[0].mxu0
  %v2863 = vadd.f32 %v2360, %v2862
  %v2864 = vpop.f32.mrb[0].mxu0
  %2865 = vmatprep.mubr.f32.mxu0 0.0
  %2866 = vmatmul.mubr.f32.gmra.mrb[0].mxu0 %v2396
  %v2867 = vpop.f32.mrb[0].mxu0
  %v2868 = vadd.f32 %v2360, %v2867
  %v2869 = vpop.f32.mrb[0].mxu0
  %2870 = vmatprep.mubr.f32.mxu0 0.0
  %2871 = vmatmul.mubr.f32.gmra.mrb[0].mxu0 %v2399
  %v2872 = vpop.f32.mrb[0].mxu0
  %v2873 = vadd.f32 %v2360, %v2872
  %v2874 = vpop.f32.mrb[0].mxu0
  %2875 = vmatprep.mubr.f32.mxu0 0.0
  %2876 = vmatmul.mubr.f32.gmra.mrb[0].mxu0 %v2402
  %v2877 = vpop.f32.mrb[0].mxu0
  %v2878 = vadd.f32 %v2360, %v2877
  %v2879 = vpop.f32.mrb[0].mxu0
  %2880 = vmatprep.mubr.f32.mxu0 0.0
  %2881 = vmatmul.mubr.f32.gmra.mrb[0].mxu0 %v2405
  %v2882 = vpop.f32.mrb[0].mxu0
  %v2883 = vadd.f32 %v2360, %v2882
  %v2884 = vpop.f32.mrb[0].mxu0
  %2885 = vmatprep.mubr.f32.mxu0 0.0
  %2886 = vmatmul.mubr.f32.gmra.mrb[0].mxu0 %v2408
  %v2887 = vpop.f32.mrb[0].mxu0
  %v2888 = vadd.f32 %v2360, %v2887
  %v2889 = vpop.f32.mrb[0].mxu0
  %2890 = vmatprep.mubr.f32.mxu0 0.0
  %2891 = vmatmul.mubr.f32.gmra.mrb[0].mxu0 %v2411
  %v2892 = vpop.f32.mrb[0].mxu0
  %v2893 = vadd.f32 %v2360, %v2892
  %v2894 = vpop.f32.mrb[0].mxu0
  %2895 = vmatprep.mubr.f32.mxu0 0.0
  %2896 = vmatmul.mubr.f32.gmra.mrb[0].mxu0 %v2414
  %v2897 = vpop.f32.mrb[0].mxu0
  %v2898 = vadd.f32 %v2360, %v2897
  %v2899 = vpop.f32.mrb[0].mxu0
  %2900 = vmatprep.mubr.f32.mxu0 0.0
  %2901 = vmatmul.mubr.f32.gmra.mrb[0].mxu0 %v2417
  %v2902 = vpop.f32.mrb[0].mxu0
  %v2903 = vadd.f32 %v2360, %v2902
  %v2904 = vpop.f32.mrb[0].mxu0
  %2905 = vmatprep.mubr.f32.mxu0 0.0
  %2906 = vmatmul.mubr.f32.gmra.mrb[0].mxu0 %v2420
  %v2907 = vpop.f32.mrb[0].mxu0
  %v2908 = vadd.f32 %v2360, %v2907
  %v2909 = vpop.f32.mrb[0].mxu0
  %2910 = vmatprep.mubr.f32.mxu0 0.0
  %2911 = vmatmul.mubr.f32.gmra.mrb[0].mxu0 %v2423
  %v2912 = vpop.f32.mrb[0].mxu0
  %v2913 = vadd.f32 %v2360, %v2912
  %v2914 = vpop.f32.mrb[0].mxu0
  %2915 = vmatprep.mubr.f32.mxu0 0.0
  %2916 = vmatmul.mubr.f32.gmra.mrb[0].mxu0 %v2426
  %v2917 = vpop.f32.mrb[0].mxu0
  %v2918 = vadd.f32 %v2360, %v2917
  %v2919 = vpop.f32.mrb[0].mxu0
  %2920 = vmatprep.mubr.f32.mxu0 0.0
  %2921 = vmatmul.mubr.f32.gmra.mrb[0].mxu0 %v2429
  %v2922 = vpop.f32.mrb[0].mxu0
  %v2923 = vadd.f32 %v2360, %v2922
  %v2924 = vpop.f32.mrb[0].mxu0
  %2925 = vmatprep.mubr.f32.mxu0 0.0
  %2926 = vmatmul.mubr.f32.gmra.mrb[0].mxu0 %v2432
  %v2927 = vpop.f32.mrb[0].mxu0
  %v2928 = vadd.f32 %v2360, %v2927
  %v2929 = vpop.f32.mrb[0].mxu0
  %2930 = vmatprep.mubr.f32.mxu0 0.0
  %2931 = vmatmul.mubr.f32.gmra.mrb[0].mxu0 %v2435
  %v2932 = vpop.f32.mrb[0].mxu0
  %v2933 = vadd.f32 %v2360, %v2932
  %v2934 = vpop.f32.mrb[0].mxu0
  %2935 = vmatprep.mubr.f32.mxu0 0.0
  %2936 = vmatmul.mubr.f32.gmra.mrb[0].mxu0 %v2438
  %v2937 = vpop.f32.mrb[0].mxu0
  %v2938 = vadd.f32 %v2360, %v2937
  %v2939 = vpop.f32.mrb[0].mxu0
  %2940 = vmatprep.mubr.f32.mxu0 0.0
  %2941 = vmatmul.mubr.f32.gmra.mrb[0].mxu0 %v2441
  %v2942 = vpop.f32.mrb[0].mxu0
  %v2943 = vadd.f32 %v2360, %v2942
  %v2944 = vpop.f32.mrb[0].mxu0
  %2945 = vmatprep.mubr.f32.mxu0 0.0
  %2946 = vmatmul.mubr.f32.gmra.mrb[0].mxu0 %v2444
  %v2947 = vpop.f32.mrb[0].mxu0
  %v2948 = vadd.f32 %v2360, %v2947
  %v2949 = vpop.f32.mrb[0].mxu0
  %2950 = vmatprep.mubr.f32.mxu0 0.0
  %2951 = vmatmul.mubr.f32.gmra.mrb[0].mxu0 %v2447
  %v2952 = vpop.f32.mrb[0].mxu0
  %v2953 = vadd.f32 %v2360, %v2952
  %v2954 = vpop.f32.mrb[0].mxu0
  %2955 = vmatprep.mubr.f32.mxu0 0.0
  %2956 = vmatmul.mubr.f32.gmra.mrb[0].mxu0 %v2450
  %v2957 = vpop.f32.mrb[0].mxu0
  %v2958 = vadd.f32 %v2360, %v2957
  %v2959 = vpop.f32.mrb[0].mxu0
  %2960 = vmatprep.mubr.f32.mxu0 0.0
  %2961 = vmatmul.mubr.f32.gmra.mrb[0].mxu0 %v2453
  %v2962 = vpop.f32.mrb[0].mxu0
  %v2963 = vadd.f32 %v2360, %v2962
  %v2964 = vpop.f32.mrb[0].mxu0
  %2965 = vmatprep.mubr.f32.mxu0 0.0
  %2966 = vmatmul.mubr.f32.gmra.mrb[0].mxu0 %v2456
  %v2967 = vpop.f32.mrb[0].mxu0
  %v2968 = vadd.f32 %v2360, %v2967
  %v2969 = vpop.f32.mrb[0].mxu0
  %2970 = vmatprep.mubr.f32.mxu0 0.0
  %2971 = vmatmul.mubr.f32.gmra.mrb[0].mxu0 %v2459
  %v2972 = vpop.f32.mrb[0].mxu0
  %v2973 = vadd.f32 %v2360, %v2972
  %v2974 = vpop.f32.mrb[0].mxu0
  %2975 = vmatprep.mubr.f32.mxu0 0.0
  %2976 = vmatmul.mubr.f32.gmra.mrb[0].mxu0 %v2462
  %v2977 = vpop.f32.mrb[0].mxu0
  %v2978 = vadd.f32 %v2360, %v2977
  %v2979 = vpop.f32.mrb[0].mxu0
  %2980 = vmatprep.mubr.f32.mxu0 0.0
  %2981 = vmatmul.mubr.f32.gmra.mrb[0].mxu0 %v2465
  %v2982 = vpop.f32.mrb[0].mxu0
  %v2983 = vadd.f32 %v2360, %v2982
  %v2984 = vpop.f32.mrb[0].mxu0
  %2985 = vmatprep.mubr.f32.mxu0 0.0
  %2986 = vmatmul.mubr.f32.gmra.mrb[0].mxu0 %v2468
  %v2987 = vpop.f32.mrb[0].mxu0
  %v2988 = vadd.f32 %v2360, %v2987
  %v2989 = vpop.f32.mrb[0].mxu0
  %2990 = vmatprep.mubr.f32.mxu0 0.0
  %2991 = vmatmul.mubr.f32.gmra.mrb[0].mxu0 %v2471
  %v2992 = vpop.f32.mrb[0].mxu0
  %v2993 = vadd.f32 %v2360, %v2992
  %v2994 = vpop.f32.mrb[0].mxu0
  %2995 = vmatprep.mubr.f32.mxu0 0.0
  %2996 = vmatmul.mubr.f32.gmra.mrb[0].mxu0 %v2474
  %v2997 = vpop.f32.mrb[0].mxu0
  %v2998 = vadd.f32 %v2360, %v2997
  %v2999 = vpop.f32.mrb[0].mxu0
  %3000 = vmatprep.mubr.f32.mxu0 0.0
  %3001 = vmatmul.mubr.f32.gmra.mrb[0].mxu0 %v2477
  %v3002 = vpop.f32.mrb[0].mxu0
  %v3003 = vadd.f32 %v2360, %v3002
  %v3004 = vpop.f32.mrb[0].mxu0
  %3005 = vmatprep.mubr.f32.mxu0 0.0
  %3006 = vmatmul.mubr.f32.gmra.mrb[0].mxu0 %v2480
  %v3007 = vpop.f32.mrb[0].mxu0
  %v3008 = vadd.f32 %v2360, %v3007
  %v3009 = vpop.f32.mrb[0].mxu0
  %3010 = vmatprep.mubr.f32.mxu0 0.0
  %3011 = vmatmul.mubr.f32.gmra.mrb[0].mxu0 %v2483
  %v3012 = vpop.f32.mrb[0].mxu0
  %v3013 = vadd.f32 %v2360, %v3012
  %v3014 = vpop.f32.mrb[0].mxu0
  %3015 = vmatprep.mubr.f32.mxu0 0.0
  %3016 = vmatmul.mubr.f32.gmra.mrb[0].mxu0 %v2486
  %v3017 = vpop.f32.mrb[0].mxu0
  %v3018 = vadd.f32 %v2360, %v3017
  %v3019 = vpop.f32.mrb[0].mxu0
  %3020 = vmatprep.mubr.f32.mxu0 0.0
  %3021 = vmatmul.mubr.f32.gmra.mrb[0].mxu0 %v2489
  %v3022 = vpop.f32.mrb[0].mxu0
  %v3023 = vadd.f32 %v2360, %v3022
  %v3024 = vpop.f32.mrb[0].mxu0
  %3025 = vmatprep.mubr.f32.mxu0 0.0
  %3026 = vmatmul.mubr.f32.gmra.mrb[0].mxu0 %v2492
  %v3027 = vpop.f32.mrb[0].mxu0
  %v3028 = vadd.f32 %v2360, %v3027
  %v3029 = vpop.f32.mrb[0].mxu0
  %3030 = vmatprep.mubr.f32.mxu0 0.0
  %3031 = vmatmul.mubr.f32.gmra.mrb[0].mxu0 %v2495
  %v3032 = vpop.f32.mrb[0].mxu0
  %v3033 = vadd.f32 %v2360, %v3032
  %v3034 = vpop.f32.mrb[0].mxu0
  %3035 = vmatprep.mubr.f32.mxu0 0.0
  %3036 = vmatmul.mubr.f32.gmra.mrb[0].mxu0 %v2498
  %v3037 = vpop.f32.mrb[0].mxu0
  %v3038 = vadd.f32 %v2360, %v3037
  %v3039 = vpop.f32.mrb[0].mxu0
  %3040 = vmatprep.mubr.f32.mxu0 0.0
  %3041 = vmatmul.mubr.f32.gmra.mrb[0].mxu0 %v2501
  %v3042 = vpop.f32.mrb[0].mxu0
  %v3043 = vadd.f32 %v2360, %v3042
  %v3044 = vpop.f32.mrb[0].mxu0
  %3045 = vmatprep.mubr.f32.mxu0 0.0
  %3046 = vmatmul.mubr.f32.gmra.mrb[0].mxu0 %v2504
  %v3047 = vpop.f32.mrb[0].mxu0
  %v3048 = vadd.f32 %v2360, %v3047
  %v3049 = vpop.f32.mrb[0].mxu0
  %3050 = vmatprep.mubr.f32.mxu0 0.0
  %3051 = vmatmul.mubr.f32.gmra.mrb[0].mxu0 %v2507
  %v3052 = vpop.f32.mrb[0].mxu0
  %v3053 = vadd.f32 %v2360, %v3052
  %v3054 = vpop.f32.mrb[0].mxu0
  %3055 = vmatprep.mubr.f32.mxu0 0.0
  %3056 = vmatmul.mubr.f32.gmra.mrb[0].mxu0 %v2510
  %v3057 = vpop.f32.mrb[0].mxu0
  %v3058 = vadd.f32 %v2360, %v3057
  %v3059 = vpop.f32.mrb[0].mxu0
  %3060 = vmatprep.mubr.f32.mxu0 0.0
  %3061 = vmatmul.mubr.f32.gmra.mrb[0].mxu0 %v2513
  %v3062 = vpop.f32.mrb[0].mxu0
  %v3063 = vadd.f32 %v2360, %v3062
  %v3064 = vpop.f32.mrb[0].mxu0
  %3065 = vmatprep.mubr.f32.mxu0 0.0
  %3066 = vmatmul.mubr.f32.gmra.mrb[0].mxu0 %v2516
  %v3067 = vpop.f32.mrb[0].mxu0
  %v3068 = vadd.f32 %v2360, %v3067
  %v3069 = vpop.f32.mrb[0].mxu0
  %3070 = vmatprep.mubr.f32.mxu0 0.0
  %3071 = vmatmul.mubr.f32.gmra.mrb[0].mxu0 %v2519
  %v3072 = vpop.f32.mrb[0].mxu0
  %v3073 = vadd.f32 %v2360, %v3072
  %v3074 = vpop.f32.mrb[0].mxu0
  %3075 = vmatprep.mubr.f32.mxu0 0.0
  %3076 = vmatmul.mubr.f32.gmra.mrb[0].mxu0 %v2522
  %v3077 = vpop.f32.mrb[0].mxu0
  %v3078 = vadd.f32 %v2360, %v3077
  %v3079 = vpop.f32.mrb[0].mxu0
  %3080 = vmatprep.mubr.f32.mxu0 0.0
  %3081 = vmatmul.mubr.f32.gmra.mrb[0].mxu0 %v2525
  %v3082 = vpop.f32.mrb[0].mxu0
  %v3083 = vadd.f32 %v2360, %v3082
  %v3084 = vpop.f32.mrb[0].mxu0
  %3085 = vmatprep.mubr.f32.mxu0 0.0
  %3086 = vmatmul.mubr.f32.gmra.mrb[0].mxu0 %v2528
  %v3087 = vpop.f32.mrb[0].mxu0
  %v3088 = vadd.f32 %v2360, %v3087
  %v3089 = vpop.f32.mrb[0].mxu0
  %3090 = vmatprep.mubr.f32.mxu0 0.0
  %3091 = vmatmul.mubr.f32.gmra.mrb[0].mxu0 %v2531
  %v3092 = vpop.f32.mrb[0].mxu0
  %v3093 = vadd.f32 %v2360, %v3092
  %v3094 = vpop.f32.mrb[0].mxu0
  %3095 = vmatprep.mubr.f32.mxu0 0.0
  %3096 = vmatmul.mubr.f32.gmra.mrb[0].mxu0 %v2534
  %v3097 = vpop.f32.mrb[0].mxu0
  %v3098 = vadd.f32 %v2360, %v3097
  %v3099 = vpop.f32.mrb[0].mxu0
  %3100 = vmatprep.mubr.f32.mxu0 0.0
  %3101 = vmatmul.mubr.f32.gmra.mrb[0].mxu0 %v2537
  %v3102 = vpop.f32.mrb[0].mxu0
  %v3103 = vadd.f32 %v2360, %v3102
  %v3104 = vpop.f32.mrb[0].mxu0
  %3105 = vmatprep.mubr.f32.mxu0 0.0
  %3106 = vmatmul.mubr.f32.gmra.mrb[0].mxu0 %v2540
  %v3107 = vpop.f32.mrb[0].mxu0
  %v3108 = vadd.f32 %v2360, %v3107
  %v3109 = vpop.f32.mrb[0].mxu0
  %3110 = vmatprep.mubr.f32.mxu0 0.0
  %3111 = vmatmul.mubr.f32.gmra.mrb[0].mxu0 %v2543
  %v3112 = vpop.f32.mrb[0].mxu0
  %v3113 = vadd.f32 %v2360, %v3112
  %v3114 = vpop.f32.mrb[0].mxu0
  %3115 = vmatprep.mubr.f32.mxu0 0.0
  %3116 = vmatmul.mubr.f32.gmra.mrb[0].mxu0 %v2546
  %v3117 = vpop.f32.mrb[0].mxu0
  %v3118 = vadd.f32 %v2360, %v3117
  %v3119 = vpop.f32.mrb[0].mxu0
  %3120 = vmatprep.mubr.f32.mxu0 0.0
  %3121 = vmatmul.mubr.f32.gmra.mrb[0].mxu0 %v2549
  %v3122 = vpop.f32.mrb[0].mxu0
  %v3123 = vadd.f32 %v2360, %v3122
  %v3124 = vpop.f32.mrb[0].mxu0
  %3125 = vmatprep.mubr.f32.mxu0 0.0
  %3126 = vmatmul.mubr.f32.gmra.mrb[0].mxu0 %v2552
  %v3127 = vpop.f32.mrb[0].mxu0
  %v3128 = vadd.f32 %v2360, %v3127
  %v3129 = vpop.f32.mrb[0].mxu0
  %3130 = vmatprep.mubr.f32.mxu0 0.0
  %3131 = vmatmul.mubr.f32.gmra.mrb[0].mxu0 %v2555
  %v3132 = vpop.f32.mrb[0].mxu0
  %v3133 = vadd.f32 %v2360, %v3132
  %v3134 = vpop.f32.mrb[0].mxu0
  %3135 = vmatprep.mubr.f32.mxu0 0.0
  %3136 = vmatmul.mubr.f32.gmra.mrb[0].mxu0 %v2558
  %v3137 = vpop.f32.mrb[0].mxu0
  %v3138 = vadd.f32 %v2360, %v3137
  %v3139 = vpop.f32.mrb[0].mxu0
  %3140 = vmatprep.mubr.f32.mxu0 0.0
  %3141 = vmatmul.mubr.f32.gmra.mrb[0].mxu0 %v2561
  %v3142 = vpop.f32.mrb[0].mxu0
  %v3143 = vadd.f32 %v2360, %v3142
  %v3144 = vpop.f32.mrb[0].mxu0
  %3145 = vmatprep.mubr.f32.mxu0 0.0
  %3146 = vmatmul.mubr.f32.gmra.mrb[0].mxu0 %v2564
  %v3147 = vpop.f32.mrb[0].mxu0
  %v3148 = vadd.f32 %v2360, %v3147
  %v3149 = vpop.f32.mrb[0].mxu0
  %3150 = vmatprep.mubr.f32.mxu0 0.0
  %3151 = vmatmul.mubr.f32.gmra.mrb[0].mxu0 %v2567
  %v3152 = vpop.f32.mrb[0].mxu0
  %v3153 = vadd.f32 %v2360, %v3152
  %v3154 = vpop.f32.mrb[0].mxu0
  %3155 = vmatprep.mubr.f32.mxu0 0.0
  %3156 = vmatmul.mubr.f32.gmra.mrb[0].mxu0 %v2570
  %v3157 = vpop.f32.mrb[0].mxu0
  %v3158 = vadd.f32 %v2360, %v3157
  %v3159 = vpop.f32.mrb[0].mxu0
  %3160 = vmatprep.mubr.f32.mxu0 0.0
  %3161 = vmatmul.mubr.f32.gmra.mrb[0].mxu0 %v2573
  %v3162 = vpop.f32.mrb[0].mxu0
  %v3163 = vadd.f32 %v2360, %v3162
  %v3164 = vpop.f32.mrb[0].mxu0
  %3165 = vmatprep.mubr.f32.mxu0 0.0
  %3166 = vmatmul.mubr.f32.gmra.mrb[0].mxu0 %v2576
  %v3167 = vpop.f32.mrb[0].mxu0
  %v3168 = vadd.f32 %v2360, %v3167
  %v3169 = vpop.f32.mrb[0].mxu0
  %3170 = vmatprep.mubr.f32.mxu0 0.0
  %3171 = vmatmul.mubr.f32.gmra.mrb[0].mxu0 %v2579
  %v3172 = vpop.f32.mrb[0].mxu0
  %v3173 = vadd.f32 %v2360, %v3172
  %v3174 = vpop.f32.mrb[0].mxu0
  %3175 = vmatprep.mubr.f32.mxu0 0.0
  %3176 = vmatmul.mubr.f32.gmra.mrb[0].mxu0 %v2582
  %v3177 = vpop.f32.mrb[0].mxu0
  %v3178 = vadd.f32 %v2360, %v3177
  %v3179 = vpop.f32.mrb[0].mxu0
  %3180 = vmatprep.mubr.f32.mxu0 0.0
  %3181 = vmatmul.mubr.f32.gmra.mrb[0].mxu0 %v2585
  %v3182 = vpop.f32.mrb[0].mxu0
  %v3183 = vadd.f32 %v2360, %v3182
  %v3184 = vpop.f32.mrb[0].mxu0
  %3185 = vmatprep.mubr.f32.mxu0 0.0
  %3186 = vmatmul.mubr.f32.gmra.mrb[0].mxu0 %v2588
  %v3187 = vpop.f32.mrb[0].mxu0
  %v3188 = vadd.f32 %v2360, %v3187
  %v3189 = vpop.f32.mrb[0].mxu0
  %3190 = vmatprep.mubr.f32.mxu0 0.0
  %3191 = vmatmul.mubr.f32.gmra.mrb[0].mxu0 %v2591
  %v3192 = vpop.f32.mrb[0].mxu0
  %v3193 = vadd.f32 %v2360, %v3192
  %v3194 = vpop.f32.mrb[0].mxu0
  %3195 = vmatprep.mubr.f32.mxu0 0.0
  %3196 = vmatmul.mubr.f32.gmra.mrb[0].mxu0 %v2594
  %v3197 = vpop.f32.mrb[0].mxu0
  %v3198 = vadd.f32 %v2360, %v3197
  %v3199 = vpop.f32.mrb[0].mxu0
  %3200 = vmatprep.mubr.f32.mxu0 0.0
  %3201 = vmatmul.mubr.f32.gmra.mrb[0].mxu0 %v2597
  %v3202 = vpop.f32.mrb[0].mxu0
  %v3203 = vadd.f32 %v2360, %v3202
  %v3204 = vpop.f32.mrb[0].mxu0
  %3205 = vmatprep.mubr.f32.mxu0 0.0
  %3206 = vmatmul.mubr.f32.gmra.mrb[0].mxu0 %v2600
  %v3207 = vpop.f32.mrb[0].mxu0
  %v3208 = vadd.f32 %v2360, %v3207
  %v3209 = vpop.f32.mrb[0].mxu0
  %3210 = vmatprep.mubr.f32.mxu0 0.0
  %3211 = vmatmul.mubr.f32.gmra.mrb[0].mxu0 %v2603
  %v3212 = vpop.f32.mrb[0].mxu0
  %v3213 = vadd.f32 %v2360, %v3212
  %v3214 = vpop.f32.mrb[0].mxu0
  %3215 = vmatprep.mubr.f32.mxu0 0.0
  %3216 = vmatmul.mubr.f32.gmra.mrb[0].mxu0 %v2606
  %v3217 = vpop.f32.mrb[0].mxu0
  %v3218 = vadd.f32 %v2360, %v3217
  %v3219 = vpop.f32.mrb[0].mxu0
  %3220 = vmatprep.mubr.f32.mxu0 0.0
  %3221 = vmatmul.mubr.f32.gmra.mrb[0].mxu0 %v2609
  %v3222 = vpop.f32.mrb[0].mxu0
  %v3223 = vadd.f32 %v2360, %v3222
  %v3224 = vpop.f32.mrb[0].mxu0
  %3225 = vmatprep.mubr.f32.mxu0 0.0
  %3226 = vmatmul.mubr.f32.gmra.mrb[0].mxu0 %v2612
  %v3227 = vpop.f32.mrb[0].mxu0
  %v3228 = vadd.f32 %v2360, %v3227
  %v3229 = vpop.f32.mrb[0].mxu0
  %3230 = vmatprep.mubr.f32.mxu0 0.0
  %3231 = vmatmul.mubr.f32.gmra.mrb[0].mxu0 %v2615
  %v3232 = vpop.f32.mrb[0].mxu0
  %v3233 = vadd.f32 %v2360, %v3232
  %v3234 = vpop.f32.mrb[0].mxu0
  %3235 = vmatprep.mubr.f32.mxu0 0.0
  %3236 = vmatmul.mubr.f32.gmra.mrb[0].mxu0 %v2618
  %v3237 = vpop.f32.mrb[0].mxu0
  %v3238 = vadd.f32 %v2360, %v3237
  %v3239 = vpop.f32.mrb[0].mxu0
  %3240 = vmatprep.mubr.f32.mxu0 0.0
  %3241 = vmatmul.mubr.f32.gmra.mrb[0].mxu0 %v2621
  %v3242 = vpop.f32.mrb[0].mxu0
  %v3243 = vadd.f32 %v2360, %v3242
  %v3244 = vpop.f32.mrb[0].mxu0
  %3245 = vmatprep.mubr.f32.mxu0 0.0
  %3246 = vmatmul.mubr.f32.gmra.mrb[0].mxu0 %v2624
  %v3247 = vpop.f32.mrb[0].mxu0
  %v3248 = vadd.f32 %v2360, %v3247
  %v3249 = vpop.f32.mrb[0].mxu0
  %3250 = vmatprep.mubr.f32.mxu0 0.0
  %3251 = vmatmul.mubr.f32.gmra.mrb[0].mxu0 %v2627
  %v3252 = vpop.f32.mrb[0].mxu0
  %v3253 = vadd.f32 %v2360, %v3252
  %v3254 = vpop.f32.mrb[0].mxu0
  %3255 = vmatprep.mubr.f32.mxu0 0.0
  %3256 = vmatmul.mubr.f32.gmra.mrb[0].mxu0 %v2630
  %v3257 = vpop.f32.mrb[0].mxu0
  %v3258 = vadd.f32 %v2360, %v3257
  %v3259 = vpop.f32.mrb[0].mxu0
  %3260 = vmatprep.mubr.f32.mxu0 0.0
  %3261 = vmatmul.mubr.f32.gmra.mrb[0].mxu0 %v2633
  %v3262 = vpop.f32.mrb[0].mxu0
  %v3263 = vadd.f32 %v2360, %v3262
  %v3264 = vpop.f32.mrb[0].mxu0
  %3265 = vmatprep.mubr.f32.mxu0 0.0
  %3266 = vmatmul.mubr.f32.gmra.mrb[0].mxu0 %v2636
  %v3267 = vpop.f32.mrb[0].mxu0
  %v3268 = vadd.f32 %v2360, %v3267
  %v3269 = vpop.f32.mrb[0].mxu0
  %3270 = vmatprep.mubr.f32.mxu0 0.0
  %3271 = vmatmul.mubr.f32.gmra.mrb[0].mxu0 %v2639
  %v3272 = vpop.f32.mrb[0].mxu0
  %v3273 = vadd.f32 %v2360, %v3272
  %v3274 = vpop.f32.mrb[0].mxu0
  %3275 = vmatprep.mubr.f32.mxu0 0.0
  %3276 = vmatmul.mubr.f32.gmra.mrb[0].mxu0 %v2642
  %v3277 = vpop.f32.mrb[0].mxu0
  %v3278 = vadd.f32 %v2360, %v3277
  %v3279 = vpop.f32.mrb[0].mxu0
  %3280 = vmatprep.mubr.f32.mxu0 0.0
  %3281 = vmatmul.mubr.f32.gmra.mrb[0].mxu0 %v2645
  %v3282 = vpop.f32.mrb[0].mxu0
  %v3283 = vadd.f32 %v2360, %v3282
  %v3284 = vpop.f32.mrb[0].mxu0
  %3285 = vmatprep.mubr.f32.mxu0 0.0
  %3286 = vmatmul.mubr.f32.gmra.mrb[0].mxu0 %v2648
  %v3287 = vpop.f32.mrb[0].mxu0
  %v3288 = vadd.f32 %v2360, %v3287
  %v3289 = vpop.f32.mrb[0].mxu0
  %3290 = vmatprep.mubr.f32.mxu0 0.0
  %3291 = vmatmul.mubr.f32.gmra.mrb[0].mxu0 %v2651
  %v3292 = vpop.f32.mrb[0].mxu0
  %v3293 = vadd.f32 %v2360, %v3292
  %v3294 = vpop.f32.mrb[0].mxu0
  %3295 = vmatprep.mubr.f32.mxu0 0.0
  %3296 = vmatmul.mubr.f32.gmra.mrb[0].mxu0 %v2654
  %v3297 = vpop.f32.mrb[0].mxu0
  %v3298 = vadd.f32 %v2360, %v3297
  %v3299 = vpop.f32.mrb[0].mxu0
  %3300 = vmatprep.mubr.f32.mxu0 0.0
  %3301 = vmatmul.mubr.f32.gmra.mrb[0].mxu0 %v2657
  %v3302 = vpop.f32.mrb[0].mxu0
  %v3303 = vadd.f32 %v2360, %v3302
  %v3304 = vpop.f32.mrb[0].mxu0
  %3305 = vmatprep.mubr.f32.mxu0 0.0
  %3306 = vmatmul.mubr.f32.gmra.mrb[0].mxu0 %v2660
  %v3307 = vpop.f32.mrb[0].mxu0
  %v3308 = vadd.f32 %v2360, %v3307
  %v3309 = vpop.f32.mrb[0].mxu0
  %3310 = vmatprep.mubr.f32.mxu0 0.0
  %3311 = vmatmul.mubr.f32.gmra.mrb[0].mxu0 %v2663
  %v3312 = vpop.f32.mrb[0].mxu0
  %v3313 = vadd.f32 %v2360, %v3312
  %v3314 = vpop.f32.mrb[0].mxu0
  %3315 = vmatprep.mubr.f32.mxu0 0.0
  %3316 = vmatmul.mubr.f32.gmra.mrb[0].mxu0 %v2666
  %v3317 = vpop.f32.mrb[0].mxu0
  %v3318 = vadd.f32 %v2360, %v3317
  %v3319 = vpop.f32.mrb[0].mxu0
  %3320 = vmatprep.mubr.f32.mxu0 0.0
  %3321 = vmatmul.mubr.f32.gmra.mrb[0].mxu0 %v2669
  %v3322 = vpop.f32.mrb[0].mxu0
  %v3323 = vadd.f32 %v2360, %v3322
  %v3324 = vpop.f32.mrb[0].mxu0
  %3325 = vmatprep.mubr.f32.mxu0 0.0
  %3326 = vmatmul.mubr.f32.gmra.mrb[0].mxu0 %v2672
  %v3327 = vpop.f32.mrb[0].mxu0
  %v3328 = vadd.f32 %v2360, %v3327
  %v3329 = vpop.f32.mrb[0].mxu0
  %3330 = vmatprep.mubr.f32.mxu0 0.0
  %3331 = vmatmul.mubr.f32.gmra.mrb[0].mxu0 %v2675
  %v3332 = vpop.f32.mrb[0].mxu0
  %v3333 = vadd.f32 %v2360, %v3332
  %v3334 = vpop.f32.mrb[0].mxu0
  %3335 = vmatprep.mubr.f32.mxu0 0.0
  %3336 = vmatmul.mubr.f32.gmra.mrb[0].mxu0 %v2678
  %v3337 = vpop.f32.mrb[0].mxu0
  %v3338 = vadd.f32 %v2360, %v3337
  %v3339 = vpop.f32.mrb[0].mxu0
  %3340 = vmatprep.mubr.f32.mxu0 0.0
  %3341 = vmatmul.mubr.f32.gmra.mrb[0].mxu0 %v2681
  %v3342 = vpop.f32.mrb[0].mxu0
  %v3343 = vadd.f32 %v2360, %v3342
  %v3344 = vpop.f32.mrb[0].mxu0
  %3345 = vmatprep.mubr.f32.mxu0 0.0
  %3346 = vmatmul.mubr.f32.gmra.mrb[0].mxu0 %v2684
  %v3347 = vpop.f32.mrb[0].mxu0
  %v3348 = vadd.f32 %v2360, %v3347
  %v3349 = vpop.f32.mrb[0].mxu0
  %3350 = vmatprep.mubr.f32.mxu0 0.0
  %3351 = vmatmul.mubr.f32.gmra.mrb[0].mxu0 %v2687
  %v3352 = vpop.f32.mrb[0].mxu0
  %v3353 = vadd.f32 %v2360, %v3352
  %v3354 = vpop.f32.mrb[0].mxu0
  %3355 = vmatprep.mubr.f32.mxu0 0.0
  %3356 = vmatmul.mubr.f32.gmra.mrb[0].mxu0 %v2690
  %v3357 = vpop.f32.mrb[0].mxu0
  %v3358 = vadd.f32 %v2360, %v3357
  %v3359 = vpop.f32.mrb[0].mxu0
  %3360 = vmatprep.mubr.f32.mxu0 0.0
  %3361 = vmatmul.mubr.f32.gmra.mrb[0].mxu0 %v2693
  %v3362 = vpop.f32.mrb[0].mxu0
  %v3363 = vadd.f32 %v2360, %v3362
  %v3364 = vpop.f32.mrb[0].mxu0
  %3365 = vmatprep.mubr.f32.mxu0 0.0
  %3366 = vmatmul.mubr.f32.gmra.mrb[0].mxu0 %v2696
  %v3367 = vpop.f32.mrb[0].mxu0
  %v3368 = vadd.f32 %v2360, %v3367
  %v3369 = vpop.f32.mrb[0].mxu0
  %3370 = vmatprep.mubr.f32.mxu0 0.0
  %3371 = vmatmul.mubr.f32.gmra.mrb[0].mxu0 %v2699
  %v3372 = vpop.f32.mrb[0].mxu0
  %v3373 = vadd.f32 %v2360, %v3372
  %v3374 = vpop.f32.mrb[0].mxu0
  %3375 = vmatprep.mubr.f32.mxu0 0.0
  %3376 = vmatmul.mubr.f32.gmra.mrb[0].mxu0 %v2702
  %v3377 = vpop.f32.mrb[0].mxu0
  %v3378 = vadd.f32 %v2360, %v3377
  %v3379 = vpop.f32.mrb[0].mxu0
  %3380 = vmatprep.mubr.f32.mxu0 0.0
  %3381 = vmatmul.mubr.f32.gmra.mrb[0].mxu0 %v2705
  %v3382 = vpop.f32.mrb[0].mxu0
  %v3383 = vadd.f32 %v2360, %v3382
  %v3384 = vpop.f32.mrb[0].mxu0
  %3385 = vmatprep.mubr.f32.mxu0 0.0
  %3386 = vmatmul.mubr.f32.gmra.mrb[0].mxu0 %v2708
  %v3387 = vpop.f32.mrb[0].mxu0
  %v3388 = vadd.f32 %v2360, %v3387
  %v3389 = vpop.f32.mrb[0].mxu0
  %3390 = vmatprep.mubr.f32.mxu0 0.0
  %3391 = vmatmul.mubr.f32.gmra.mrb[0].mxu0 %v2711
  %v3392 = vpop.f32.mrb[0].mxu0
  %v3393 = vadd.f32 %v2360, %v3392
  %v3394 = vpop.f32.mrb[0].mxu0
  %3395 = vmatprep.mubr.f32.mxu0 0.0
  %3396 = vmatmul.mubr.f32.gmra.mrb[0].mxu0 %v2714
  %v3397 = vpop.f32.mrb[0].mxu0
  %v3398 = vadd.f32 %v2360, %v3397
  %v3399 = vpop.f32.mrb[0].mxu0
  %3400 = vmatprep.mubr.f32.mxu0 0.0
  %3401 = vmatmul.mubr.f32.gmra.mrb[0].mxu0 %v2717
  %v3402 = vpop.f32.mrb[0].mxu0
  %v3403 = vadd.f32 %v2360, %v3402
  %v3404 = vpop.f32.mrb[0].mxu0
  %3405 = vmatprep.mubr.f32.mxu0 0.0
  %3406 = vmatmul.mubr.f32.gmra.mrb[0].mxu0 %v2720
  %v3407 = vpop.f32.mrb[0].mxu0
  %v3408 = vadd.f32 %v2360, %v3407
  %v3409 = vpop.f32.mrb[0].mxu0
  %3410 = vmatprep.mubr.f32.mxu0 0.0
  %3411 = vmatmul.mubr.f32.gmra.mrb[0].mxu0 %v2723
  %v3412 = vpop.f32.mrb[0].mxu0
  %v3413 = vadd.f32 %v2360, %v3412
  %v3414 = vpop.f32.mrb[0].mxu0
  %3415 = vmatprep.mubr.f32.mxu0 0.0
  %3416 = vmatmul.mubr.f32.gmra.mrb[0].mxu0 %v2726
  %v3417 = vpop.f32.mrb[0].mxu0
  %v3418 = vadd.f32 %v2360, %v3417
  %v3419 = vpop.f32.mrb[0].mxu0
  %3420 = vmatprep.mubr.f32.mxu0 0.0
  %3421 = vmatmul.mubr.f32.gmra.mrb[0].mxu0 %v2729
  %v3422 = vpop.f32.mrb[0].mxu0
  %v3423 = vadd.f32 %v2360, %v3422
  %v3424 = vpop.f32.mrb[0].mxu0
  %3425 = vmatprep.mubr.f32.mxu0 0.0
  %3426 = vmatmul.mubr.f32.gmra.mrb[0].mxu0 %v2732
  %v3427 = vpop.f32.mrb[0].mxu0
  %v3428 = vadd.f32 %v2360, %v3427
  %v3429 = vpop.f32.mrb[0].mxu0
  %3430 = vmatprep.mubr.f32.mxu0 0.0
  %3431 = vmatmul.mubr.f32.gmra.mrb[0].mxu0 %v2735
  %v3432 = vpop.f32.mrb[0].mxu0
  %v3433 = vadd.f32 %v2360, %v3432
  %v3434 = vpop.f32.mrb[0].mxu0
  %3435 = vmatprep.mubr.f32.mxu0 0.0
  %3436 = vmatmul.mubr.f32.gmra.mrb[0].mxu0 %v2738
  %v3437 = vpop.f32.mrb[0].mxu0
  %v3438 = vadd.f32 %v2360, %v3437
  %v3439 = vpop.f32.mrb[0].mxu0
  %3440 = vmatprep.mubr.f32.mxu0 0.0
  %3441 = vmatmul.mubr.f32.gmra.mrb[0].mxu0 %v2741
  %v3442 = vpop.f32.mrb[0].mxu0
  %v3443 = vadd.f32 %v2360, %v3442
  %v3444 = vpop.f32.mrb[0].mxu0
  %3445 = vmatprep.mubr.f32.mxu0 0.0
  %3446 = vmatmul.mubr.f32.gmra.mrb[0].mxu0 %v2744
  %v3447 = vpop.f32.mrb[0].mxu0
  %v3448 = vadd.f32 %v2360, %v3447
  %v3449 = vpop.f32.mrb[0].mxu0
  %3450 = vdwg.mxu0
  %3451 = vst.msk [vmem:[%s5] sm:$0xff] %vm157, %v2813
  %3452 = vst.msk [vmem:[%s5 + $0x8] sm:$0xff] %vm157, %v2818
  %3453 = vst.msk [vmem:[%s5 + $0x10] sm:$0xff] %vm157, %v2823
  %3454 = vst.msk [vmem:[%s5 + $0x18] sm:$0xff] %vm157, %v2828
  %3455 = vst.msk [vmem:[%s5 + $0x20] sm:$0xff] %vm157, %v2833
  %3456 = vst.msk [vmem:[%s5 + $0x28] sm:$0xff] %vm157, %v2838
  %3457 = vst.msk [vmem:[%s5 + $0x30] sm:$0xff] %vm157, %v2843
  %3458 = vst.msk [vmem:[%s5 + $0x38] sm:$0xff] %vm157, %v2848
  %3459 = vst.msk [vmem:[%s5 + $0x40] sm:$0xff] %vm157, %v2853
  %3460 = vst.msk [vmem:[%s5 + $0x48] sm:$0xff] %vm157, %v2858
  %3461 = vst.msk [vmem:[%s5 + $0x50] sm:$0xff] %vm157, %v2863
  %3462 = vst.msk [vmem:[%s5 + $0x58] sm:$0xff] %vm157, %v2868
  %3463 = vst.msk [vmem:[%s5 + $0x60] sm:$0xff] %vm157, %v2873
  %3464 = vst.msk [vmem:[%s5 + $0x68] sm:$0xff] %vm157, %v2878
  %3465 = vst.msk [vmem:[%s5 + $0x70] sm:$0xff] %vm157, %v2883
  %3466 = vst.msk [vmem:[%s5 + $0x78] sm:$0xff] %vm157, %v2888
  %3467 = vst.msk [vmem:[%s5 + $0x80] sm:$0xff] %vm157, %v2893
  %3468 = vst.msk [vmem:[%s5 + $0x88] sm:$0xff] %vm157, %v2898
  %3469 = vst.msk [vmem:[%s5 + $0x90] sm:$0xff] %vm157, %v2903
  %3470 = vst.msk [vmem:[%s5 + $0x98] sm:$0xff] %vm157, %v2908
  %3471 = vst.msk [vmem:[%s5 + $0xa0] sm:$0xff] %vm157, %v2913
  %3472 = vst.msk [vmem:[%s5 + $0xa8] sm:$0xff] %vm157, %v2918
  %3473 = vst.msk [vmem:[%s5 + $0xb0] sm:$0xff] %vm157, %v2923
  %3474 = vst.msk [vmem:[%s5 + $0xb8] sm:$0xff] %vm157, %v2928
  %3475 = vst.msk [vmem:[%s5 + $0xc0] sm:$0xff] %vm157, %v2933
  %3476 = vst.msk [vmem:[%s5 + $0xc8] sm:$0xff] %vm157, %v2938
  %3477 = vst.msk [vmem:[%s5 + $0xd0] sm:$0xff] %vm157, %v2943
  %3478 = vst.msk [vmem:[%s5 + $0xd8] sm:$0xff] %vm157, %v2948
  %3479 = vst.msk [vmem:[%s5 + $0xe0] sm:$0xff] %vm157, %v2953
  %3480 = vst.msk [vmem:[%s5 + $0xe8] sm:$0xff] %vm157, %v2958
  %3481 = vst.msk [vmem:[%s5 + $0xf0] sm:$0xff] %vm157, %v2963
  %3482 = vst.msk [vmem:[%s5 + $0xf8] sm:$0xff] %vm157, %v2968
  %3483 = vst.msk [vmem:[%s5 + $0x100] sm:$0xff] %vm157, %v2973
  %3484 = vst.msk [vmem:[%s5 + $0x108] sm:$0xff] %vm157, %v2978
  %3485 = vst.msk [vmem:[%s5 + $0x110] sm:$0xff] %vm157, %v2983
  %3486 = vst.msk [vmem:[%s5 + $0x118] sm:$0xff] %vm157, %v2988
  %3487 = vst.msk [vmem:[%s5 + $0x120] sm:$0xff] %vm157, %v2993
  %3488 = vst.msk [vmem:[%s5 + $0x128] sm:$0xff] %vm157, %v2998
  %3489 = vst.msk [vmem:[%s5 + $0x130] sm:$0xff] %vm157, %v3003
  %3490 = vst.msk [vmem:[%s5 + $0x138] sm:$0xff] %vm157, %v3008
  %3491 = vst.msk [vmem:[%s5 + $0x140] sm:$0xff] %vm157, %v3013
  %3492 = vst.msk [vmem:[%s5 + $0x148] sm:$0xff] %vm157, %v3018
  %3493 = vst.msk [vmem:[%s5 + $0x150] sm:$0xff] %vm157, %v3023
  %3494 = vst.msk [vmem:[%s5 + $0x158] sm:$0xff] %vm157, %v3028
  %3495 = vst.msk [vmem:[%s5 + $0x160] sm:$0xff] %vm157, %v3033
  %3496 = vst.msk [vmem:[%s5 + $0x168] sm:$0xff] %vm157, %v3038
  %3497 = vst.msk [vmem:[%s5 + $0x170] sm:$0xff] %vm157, %v3043
  %3498 = vst.msk [vmem:[%s5 + $0x178] sm:$0xff] %vm157, %v3048
  %3499 = vst.msk [vmem:[%s5 + $0x180] sm:$0xff] %vm157, %v3053
  %3500 = vst.msk [vmem:[%s5 + $0x188] sm:$0xff] %vm157, %v3058
  %3501 = vst.msk [vmem:[%s5 + $0x190] sm:$0xff] %vm157, %v3063
  %3502 = vst.msk [vmem:[%s5 + $0x198] sm:$0xff] %vm157, %v3068
  %3503 = vst.msk [vmem:[%s5 + $0x1a0] sm:$0xff] %vm157, %v3073
  %3504 = vst.msk [vmem:[%s5 + $0x1a8] sm:$0xff] %vm157, %v3078
  %3505 = vst.msk [vmem:[%s5 + $0x1b0] sm:$0xff] %vm157, %v3083
  %3506 = vst.msk [vmem:[%s5 + $0x1b8] sm:$0xff] %vm157, %v3088
  %3507 = vst.msk [vmem:[%s5 + $0x1c0] sm:$0xff] %vm157, %v3093
  %3508 = vst.msk [vmem:[%s5 + $0x1c8] sm:$0xff] %vm157, %v3098
  %3509 = vst.msk [vmem:[%s5 + $0x1d0] sm:$0xff] %vm157, %v3103
  %3510 = vst.msk [vmem:[%s5 + $0x1d8] sm:$0xff] %vm157, %v3108
  %3511 = vst.msk [vmem:[%s5 + $0x1e0] sm:$0xff] %vm157, %v3113
  %3512 = vst.msk [vmem:[%s5 + $0x1e8] sm:$0xff] %vm157, %v3118
  %3513 = vst.msk [vmem:[%s5 + $0x1f0] sm:$0xff] %vm157, %v3123
  %3514 = vst.msk [vmem:[%s5 + $0x1f8] sm:$0xff] %vm157, %v3128
  %3515 = vst.msk [vmem:[%s5 + $0x200] sm:$0xff] %vm157, %v3133
  %3516 = vst.msk [vmem:[%s5 + $0x208] sm:$0xff] %vm157, %v3138
  %3517 = vst.msk [vmem:[%s5 + $0x210] sm:$0xff] %vm157, %v3143
  %3518 = vst.msk [vmem:[%s5 + $0x218] sm:$0xff] %vm157, %v3148
  %3519 = vst.msk [vmem:[%s5 + $0x220] sm:$0xff] %vm157, %v3153
  %3520 = vst.msk [vmem:[%s5 + $0x228] sm:$0xff] %vm157, %v3158
  %3521 = vst.msk [vmem:[%s5 + $0x230] sm:$0xff] %vm157, %v3163
  %3522 = vst.msk [vmem:[%s5 + $0x238] sm:$0xff] %vm157, %v3168
  %3523 = vst.msk [vmem:[%s5 + $0x240] sm:$0xff] %vm157, %v3173
  %3524 = vst.msk [vmem:[%s5 + $0x248] sm:$0xff] %vm157, %v3178
  %3525 = vst.msk [vmem:[%s5 + $0x250] sm:$0xff] %vm157, %v3183
  %3526 = vst.msk [vmem:[%s5 + $0x258] sm:$0xff] %vm157, %v3188
  %3527 = vst.msk [vmem:[%s5 + $0x260] sm:$0xff] %vm157, %v3193
  %3528 = vst.msk [vmem:[%s5 + $0x268] sm:$0xff] %vm157, %v3198
  %3529 = vst.msk [vmem:[%s5 + $0x270] sm:$0xff] %vm157, %v3203
  %3530 = vst.msk [vmem:[%s5 + $0x278] sm:$0xff] %vm157, %v3208
  %3531 = vst.msk [vmem:[%s5 + $0x280] sm:$0xff] %vm157, %v3213
  %3532 = vst.msk [vmem:[%s5 + $0x288] sm:$0xff] %vm157, %v3218
  %3533 = vst.msk [vmem:[%s5 + $0x290] sm:$0xff] %vm157, %v3223
  %3534 = vst.msk [vmem:[%s5 + $0x298] sm:$0xff] %vm157, %v3228
  %3535 = vst.msk [vmem:[%s5 + $0x2a0] sm:$0xff] %vm157, %v3233
  %3536 = vst.msk [vmem:[%s5 + $0x2a8] sm:$0xff] %vm157, %v3238
  %3537 = vst.msk [vmem:[%s5 + $0x2b0] sm:$0xff] %vm157, %v3243
  %3538 = vst.msk [vmem:[%s5 + $0x2b8] sm:$0xff] %vm157, %v3248
  %3539 = vst.msk [vmem:[%s5 + $0x2c0] sm:$0xff] %vm157, %v3253
  %3540 = vst.msk [vmem:[%s5 + $0x2c8] sm:$0xff] %vm157, %v3258
  %3541 = vst.msk [vmem:[%s5 + $0x2d0] sm:$0xff] %vm157, %v3263
  %3542 = vst.msk [vmem:[%s5 + $0x2d8] sm:$0xff] %vm157, %v3268
  %3543 = vst.msk [vmem:[%s5 + $0x2e0] sm:$0xff] %vm157, %v3273
  %3544 = vst.msk [vmem:[%s5 + $0x2e8] sm:$0xff] %vm157, %v3278
  %3545 = vst.msk [vmem:[%s5 + $0x2f0] sm:$0xff] %vm157, %v3283
  %3546 = vst.msk [vmem:[%s5 + $0x2f8] sm:$0xff] %vm157, %v3288
  %3547 = vst.msk [vmem:[%s5 + $0x300] sm:$0xff] %vm157, %v3293
  %3548 = vst.msk [vmem:[%s5 + $0x308] sm:$0xff] %vm157, %v3298
  %3549 = vst.msk [vmem:[%s5 + $0x310] sm:$0xff] %vm157, %v3303
  %3550 = vst.msk [vmem:[%s5 + $0x318] sm:$0xff] %vm157, %v3308
  %3551 = vst.msk [vmem:[%s5 + $0x320] sm:$0xff] %vm157, %v3313
  %3552 = vst.msk [vmem:[%s5 + $0x328] sm:$0xff] %vm157, %v3318
  %3553 = vst.msk [vmem:[%s5 + $0x330] sm:$0xff] %vm157, %v3323
  %3554 = vst.msk [vmem:[%s5 + $0x338] sm:$0xff] %vm157, %v3328
  %3555 = vst.msk [vmem:[%s5 + $0x340] sm:$0xff] %vm157, %v3333
  %3556 = vst.msk [vmem:[%s5 + $0x348] sm:$0xff] %vm157, %v3338
  %3557 = vst.msk [vmem:[%s5 + $0x350] sm:$0xff] %vm157, %v3343
  %3558 = vst.msk [vmem:[%s5 + $0x358] sm:$0xff] %vm157, %v3348
  %3559 = vst.msk [vmem:[%s5 + $0x360] sm:$0xff] %vm157, %v3353
  %3560 = vst.msk [vmem:[%s5 + $0x368] sm:$0xff] %vm157, %v3358
  %3561 = vst.msk [vmem:[%s5 + $0x370] sm:$0xff] %vm157, %v3363
  %3562 = vst.msk [vmem:[%s5 + $0x378] sm:$0xff] %vm157, %v3368
  %3563 = vst.msk [vmem:[%s5 + $0x380] sm:$0xff] %vm157, %v3373
  %3564 = vst.msk [vmem:[%s5 + $0x388] sm:$0xff] %vm157, %v3378
  %3565 = vst.msk [vmem:[%s5 + $0x390] sm:$0xff] %vm157, %v3383
  %3566 = vst.msk [vmem:[%s5 + $0x398] sm:$0xff] %vm157, %v3388
  %3567 = vst.msk [vmem:[%s5 + $0x3a0] sm:$0xff] %vm157, %v3393
  %3568 = vst.msk [vmem:[%s5 + $0x3a8] sm:$0xff] %vm157, %v3398
  %3569 = vst.msk [vmem:[%s5 + $0x3b0] sm:$0xff] %vm157, %v3403
  %3570 = vst.msk [vmem:[%s5 + $0x3b8] sm:$0xff] %vm157, %v3408
  %3571 = vst.msk [vmem:[%s5 + $0x3c0] sm:$0xff] %vm157, %v3413
  %3572 = vst.msk [vmem:[%s5 + $0x3c8] sm:$0xff] %vm157, %v3418
  %3573 = vst.msk [vmem:[%s5 + $0x3d0] sm:$0xff] %vm157, %v3423
  %3574 = vst.msk [vmem:[%s5 + $0x3d8] sm:$0xff] %vm157, %v3428
  %3575 = vst.msk [vmem:[%s5 + $0x3e0] sm:$0xff] %vm157, %v3433
  %3576 = vst.msk [vmem:[%s5 + $0x3e8] sm:$0xff] %vm157, %v3438
  %3577 = vst.msk [vmem:[%s5 + $0x3f0] sm:$0xff] %vm157, %v3443
  %3578 = vst.msk [vmem:[%s5 + $0x3f8] sm:$0xff] %vm157, %v3448
  // Predicated region
  $region22: #{tpu_custom_call.1} parent=0 // pred_check
    _
  $region23: #{tpu_custom_call.1} parent=0 // pred_check_branch
    %3580 = sbr.rel (0) target = $region25
  $region24: #{tpu_custom_call.1} parent=0 // pred_region
    _
  $region25: #{tpu_custom_call.1} parent=0 // pred_fallthru
    _
  // Predicated region
  $region26: #{tpu_custom_call.1} parent=0 // pred_check
    _
  $region27: #{tpu_custom_call.1} parent=0 // pred_check_branch
    %3582 = sbr.rel (0) target = $region29
  $region28: #{tpu_custom_call.1} parent=0 // pred_region
    _
  $region29: #{tpu_custom_call.1} parent=0 // pred_fallthru
    _

</llo_original>
